<compile_context>
chip_gen: v7x
topology: tpu7x:2x2x1
jax: 0.10.0
libtpu: 0.0.40
codegen_flags: <defaults>
</compile_context>

<pallas_src>
import jax
import jax.numpy as jnp
from jax.experimental import pallas as pl
from jax.experimental.pallas import tpu as pltpu

LATENT_DIM = 2
H1 = 50
H2 = 400
NUM_CONTACT = 3136           # true output width per head (fc3 / fc4)
N_PAD = 3200                 # 25 * 128: lane-aligned per-head width
N_TOTAL = 2 * N_PAD          # fused fc3|fc4 padded output width
TN = 3200                    # column tile -> 2 grid steps (one per head)


def _decoder_kernel(x_ref, w1_ref, b1_ref, w2_ref, b2_ref,
                    w34_ref, b34_ref, out_ref):
    # fc1 / fc2 are tiny; recompute each grid step so the column axis has no
    # cross-step state and can be sharded across TensorCores ("parallel").
    h = jnp.dot(x_ref[...], w1_ref[...],
                preferred_element_type=jnp.float32) + b1_ref[...]
    h = jnp.maximum(h, 0.0)                                   # ReLU
    h = jnp.dot(h, w2_ref[...],
                preferred_element_type=jnp.float32) + b2_ref[...]
    h = jnp.maximum(h, 0.0)                                   # ReLU

    # Fused fc3|fc4 column tile: bf16 operands, f32 accumulation on the MXU.
    out_ref[...] = (jnp.dot(h.astype(jnp.bfloat16), w34_ref[...],
                            preferred_element_type=jnp.float32)
                    + b34_ref[...]).astype(out_ref.dtype)


def prepare_params(params):
    """One-time parameter prep (call OUTSIDE the jitted forward):
    pad fc3/fc4 to a lane-aligned width, fuse them along the output axis,
    cast the big fused weight to bf16.  Weights are stored (in, out), i.e.
    PyTorch nn.Linear weight transposed, so the kernel computes x @ W + b."""
    w1, b1, w2, b2, w3, b3, w4, b4 = params

    w34 = jnp.zeros((H2, N_TOTAL), jnp.float32)
    w34 = w34.at[:, :NUM_CONTACT].set(w3)
    w34 = w34.at[:, N_PAD:N_PAD + NUM_CONTACT].set(w4)
    b34 = jnp.zeros((1, N_TOTAL), jnp.float32)
    b34 = b34.at[:, :NUM_CONTACT].set(b3[None, :])
    b34 = b34.at[:, N_PAD:N_PAD + NUM_CONTACT].set(b4[None, :])

    return (w1, b1[None, :], w2, b2[None, :],
            w34.astype(jnp.bfloat16), b34)


@jax.jit
def decoder_forward(x, prepped):
    """x: (B, 2) float32 -> (out3, out4), each (B, 3136) float32."""
    w1, b1, w2, b2, w34, b34 = prepped
    B = x.shape[0]

    full = lambda shape: pl.BlockSpec(shape, lambda j: tuple(0 for _ in shape))
    col = lambda rows: pl.BlockSpec((rows, TN), lambda j: (0, j))

    out = pl.pallas_call(
        _decoder_kernel,
        out_shape=jax.ShapeDtypeStruct((B, N_TOTAL), jnp.float32),
        grid_spec=pltpu.PrefetchScalarGridSpec(
            num_scalar_prefetch=0,
            grid=(N_TOTAL // TN,),
            in_specs=[
                full((B, LATENT_DIM)),      # x
                full((LATENT_DIM, H1)),     # w1
                full((1, H1)),              # b1
                full((H1, H2)),             # w2
                full((1, H2)),              # b2
                col(H2),                    # fused w3|w4 column tile (bf16)
                col(1),                     # fused b3|b4 column tile (f32)
            ],
            out_specs=col(B),
        ),
        compiler_params=pltpu.CompilerParams(
            dimension_semantics=("parallel",)),   # shards across v7x's 2 TCs
    )(x, w1, b1, w2, b2, w34, b34)

    out3 = out[:, :NUM_CONTACT]
    out4 = out[:, N_PAD:N_PAD + NUM_CONTACT]
    return out3, out4


def init_params(key):
    """Deterministic init mirroring nn.Linear's U(-1/sqrt(fan_in), ...).
    Weights stored as (in, out) == PyTorch weight.T."""
    def linear(k, fan_in, fan_out):
        kw, kb = jax.random.split(k)
        bound = 1.0 / jnp.sqrt(fan_in)
        w = jax.random.uniform(kw, (fan_in, fan_out), jnp.float32, -bound, bound)
        b = jax.random.uniform(kb, (fan_out,), jnp.float32, -bound, bound)
        return w, b

    k1, k2, k3, k4 = jax.random.split(key, 4)
    w1, b1 = linear(k1, LATENT_DIM, H1)
    w2, b2 = linear(k2, H1, H2)
    w3, b3 = linear(k3, H2, NUM_CONTACT)
    w4, b4 = linear(k4, H2, NUM_CONTACT)
    return (w1, b1, w2, b2, w3, b3, w4, b4)


def decoder_reference(x, params):
    """Pure-JAX f32 reference for the PyTorch forward."""
    w1, b1, w2, b2, w3, b3, w4, b4 = params
    h = jnp.maximum(x @ w1 + b1, 0.0)
    h = jnp.maximum(h @ w2 + b2, 0.0)
    return h @ w3 + b3, h @ w4 + b4


if __name__ == "__main__":
    key = jax.random.PRNGKey(0)
    kp, kx = jax.random.split(key)
    params = init_params(kp)
    prepped = prepare_params(params)   # one-time prep, outside the jitted path

    B = 8
    x = jax.random.normal(kx, (B, LATENT_DIM), jnp.float32)

    out3, out4 = decoder_forward(x, prepped)
    jax.block_until_ready((out3, out4))

    ref3, ref4 = decoder_reference(x, params)
    assert out3.shape == (B, NUM_CONTACT) and out4.shape == (B, NUM_CONTACT)
    # Tolerance accounts for bf16 weight/activation streaming with f32
    # accumulation (K = 400); errors are O(1e-3) vs outputs of O(1e-1).
    assert jnp.allclose(out3, ref3, atol=2e-2, rtol=2e-2)
    assert jnp.allclose(out4, ref4, atol=2e-2, rtol=2e-2)

    print("KERNEL_OK")
</pallas_src>

<mosaic_0001>
module attributes {stable_mosaic.version = 11 : i64} {
  func.func @_decoder_kernel(%arg0: i32, %arg1: memref<8x2xf32, #tpu.memory_space<vmem>>, %arg2: memref<2x50xf32, #tpu.memory_space<vmem>>, %arg3: memref<1x50xf32, #tpu.memory_space<vmem>>, %arg4: memref<50x400xf32, #tpu.memory_space<vmem>>, %arg5: memref<1x400xf32, #tpu.memory_space<vmem>>, %arg6: memref<400x3200xbf16, #tpu.memory_space<vmem>>, %arg7: memref<1x3200xf32, #tpu.memory_space<vmem>>, %arg8: memref<8x3200xf32, #tpu.memory_space<vmem>>) attributes {dimension_semantics = [#tpu.dimension_semantics<parallel>], iteration_bounds = array<i64: 2>, scalar_prefetch = 0 : i64, scratch_operands = 0 : i64, tpu.core_type = #tpu.core_type<tc>, window_params = [{pipeline_mode = #tpu.pipeline_mode<synchronous>, transform_indices = @transform_0, window_bounds = array<i64: 8, 2>}, {pipeline_mode = #tpu.pipeline_mode<synchronous>, transform_indices = @transform_1, window_bounds = array<i64: 2, 50>}, {pipeline_mode = #tpu.pipeline_mode<synchronous>, transform_indices = @transform_2, window_bounds = array<i64: 1, 50>}, {pipeline_mode = #tpu.pipeline_mode<synchronous>, transform_indices = @transform_3, window_bounds = array<i64: 50, 400>}, {pipeline_mode = #tpu.pipeline_mode<synchronous>, transform_indices = @transform_4, window_bounds = array<i64: 1, 400>}, {transform_indices = @transform_5, window_bounds = array<i64: 400, 3200>}, {transform_indices = @transform_6, window_bounds = array<i64: 1, 3200>}, {transform_indices = @transform_7, window_bounds = array<i64: 8, 3200>}]} {
    %c0 = arith.constant 0 : index
    %c0_0 = arith.constant 0 : index
    %0 = vector.load %arg1[%c0, %c0_0] : memref<8x2xf32, #tpu.memory_space<vmem>>, vector<8x2xf32>
    %c0_1 = arith.constant 0 : index
    %c0_2 = arith.constant 0 : index
    %1 = vector.load %arg2[%c0_1, %c0_2] : memref<2x50xf32, #tpu.memory_space<vmem>>, vector<2x50xf32>
    %cst = arith.constant dense<0.000000e+00> : vector<8x50xf32>
    %2 = tpu.matmul %0, %1, %cst {dimension_numbers = #tpu.dot_dimension_numbers<[1], [0], [0], [1], [0, 0, 1, 1], [], []>} : vector<8x2xf32>, vector<2x50xf32>, vector<8x50xf32> -> vector<8x50xf32>
    %c0_3 = arith.constant 0 : index
    %c0_4 = arith.constant 0 : index
    %3 = vector.load %arg3[%c0_3, %c0_4] : memref<1x50xf32, #tpu.memory_space<vmem>>, vector<1x50xf32>
    %4 = vector.broadcast %3 : vector<1x50xf32> to vector<8x50xf32>
    %5 = arith.addf %2, %4 : vector<8x50xf32>
    %cst_5 = arith.constant 0.000000e+00 : f32
    %6 = vector.broadcast %cst_5 : f32 to vector<8x50xf32>
    %7 = arith.maximumf %5, %6 : vector<8x50xf32>
    %c0_6 = arith.constant 0 : index
    %c0_7 = arith.constant 0 : index
    %8 = vector.load %arg4[%c0_6, %c0_7] : memref<50x400xf32, #tpu.memory_space<vmem>>, vector<50x400xf32>
    %cst_8 = arith.constant dense<0.000000e+00> : vector<8x400xf32>
    %9 = tpu.matmul %7, %8, %cst_8 {dimension_numbers = #tpu.dot_dimension_numbers<[1], [0], [0], [1], [0, 0, 1, 1], [], []>} : vector<8x50xf32>, vector<50x400xf32>, vector<8x400xf32> -> vector<8x400xf32>
    %c0_9 = arith.constant 0 : index
    %c0_10 = arith.constant 0 : index
    %10 = vector.load %arg5[%c0_9, %c0_10] : memref<1x400xf32, #tpu.memory_space<vmem>>, vector<1x400xf32>
    %11 = vector.broadcast %10 : vector<1x400xf32> to vector<8x400xf32>
    %12 = arith.addf %9, %11 : vector<8x400xf32>
    %cst_11 = arith.constant 0.000000e+00 : f32
    %13 = vector.broadcast %cst_11 : f32 to vector<8x400xf32>
    %14 = arith.maximumf %12, %13 : vector<8x400xf32>
    %15 = arith.truncf %14 : vector<8x400xf32> to vector<8x400xbf16>
    %c0_12 = arith.constant 0 : index
    %c0_13 = arith.constant 0 : index
    %16 = vector.load %arg6[%c0_12, %c0_13] : memref<400x3200xbf16, #tpu.memory_space<vmem>>, vector<400x3200xbf16>
    %cst_14 = arith.constant dense<0.000000e+00> : vector<8x3200xf32>
    %17 = tpu.matmul %15, %16, %cst_14 {dimension_numbers = #tpu.dot_dimension_numbers<[1], [0], [0], [1], [0, 0, 1, 1], [], []>} : vector<8x400xbf16>, vector<400x3200xbf16>, vector<8x3200xf32> -> vector<8x3200xf32>
    %c0_15 = arith.constant 0 : index
    %c0_16 = arith.constant 0 : index
    %18 = vector.load %arg7[%c0_15, %c0_16] : memref<1x3200xf32, #tpu.memory_space<vmem>>, vector<1x3200xf32>
    %19 = vector.broadcast %18 : vector<1x3200xf32> to vector<8x3200xf32>
    %20 = arith.addf %17, %19 : vector<8x3200xf32>
    %c0_17 = arith.constant 0 : index
    %c0_18 = arith.constant 0 : index
    %21 = vector.load %arg8[%c0_17, %c0_18] : memref<8x3200xf32, #tpu.memory_space<vmem>>, vector<8x3200xf32>
    tpu.vector_store %arg8[%c0_17, %c0_18], %20 {strides = array<i32>} : memref<8x3200xf32, #tpu.memory_space<vmem>>, vector<8x3200xf32>,
    return
  }
  func.func @transform_0(%arg0: i32) -> (i32, i32) {
    %c0_i32 = arith.constant 0 : i32
    %c0_i32_0 = arith.constant 0 : i32
    %c0_i32_1 = arith.constant 0 : i32
    return %c0_i32, %c0_i32_0 : i32, i32
  }
  func.func @transform_1(%arg0: i32) -> (i32, i32) {
    %c0_i32 = arith.constant 0 : i32
    %c0_i32_0 = arith.constant 0 : i32
    %c0_i32_1 = arith.constant 0 : i32
    return %c0_i32, %c0_i32_0 : i32, i32
  }
  func.func @transform_2(%arg0: i32) -> (i32, i32) {
    %c0_i32 = arith.constant 0 : i32
    %c0_i32_0 = arith.constant 0 : i32
    %c0_i32_1 = arith.constant 0 : i32
    return %c0_i32, %c0_i32_0 : i32, i32
  }
  func.func @transform_3(%arg0: i32) -> (i32, i32) {
    %c0_i32 = arith.constant 0 : i32
    %c0_i32_0 = arith.constant 0 : i32
    %c0_i32_1 = arith.constant 0 : i32
    return %c0_i32, %c0_i32_0 : i32, i32
  }
  func.func @transform_4(%arg0: i32) -> (i32, i32) {
    %c0_i32 = arith.constant 0 : i32
    %c0_i32_0 = arith.constant 0 : i32
    %c0_i32_1 = arith.constant 0 : i32
    return %c0_i32, %c0_i32_0 : i32, i32
  }
  func.func @transform_5(%arg0: i32) -> (i32, i32) {
    %c0_i32 = arith.constant 0 : i32
    %c0_i32_0 = arith.constant 0 : i32
    return %c0_i32, %arg0 : i32, i32
  }
  func.func @transform_6(%arg0: i32) -> (i32, i32) {
    %c0_i32 = arith.constant 0 : i32
    %c0_i32_0 = arith.constant 0 : i32
    return %c0_i32, %arg0 : i32, i32
  }
  func.func @transform_7(%arg0: i32) -> (i32, i32) {
    %c0_i32 = arith.constant 0 : i32
    %c0_i32_0 = arith.constant 0 : i32
    return %c0_i32, %arg0 : i32, i32
  }
}

</mosaic_0001>

<llo_original>
// kernel: decoder_forward.1
$region0: #{decoder_forward.1}
  #allocation0 [shape = 'u32[]', space=smem, size = 0x4, offset = 0x4, fixed_abs, tag = 'smem constant byte address 0x4 - core index']
  #allocation1 [shape = 'u32[144,128]{1,0:T(1,128)}', space=vmem, size = 0x12000, scoped, tag = 'internal scratch']
  %s0 = inlined_call_operand.vmem [shape: f32[8,2], index: 0, kind: input, shape index: {}]
  %s1 = inlined_call_operand.hbm [shape: f32[2,50], index: 1, kind: input, shape index: {}]
  %s2 = inlined_call_operand.hbm [shape: f32[1,50], index: 2, kind: input, shape index: {}]
  %s3 = inlined_call_operand.hbm [shape: f32[50,400], index: 3, kind: input, shape index: {}]
  %s4 = inlined_call_operand.hbm [shape: f32[1,400], index: 4, kind: input, shape index: {}]
  %s5 = inlined_call_operand.hbm [shape: bf16[400,6400], index: 5, kind: input, shape index: {}]
  %s6 = inlined_call_operand.hbm [shape: f32[1,6400], index: 6, kind: input, shape index: {}]
  %s7 = inlined_call_operand.vmem [shape: f32[8,6400], index: 7, kind: output, shape index: {}]
  %s8 = sld [smem:[#allocation0]]
  $region85: #{decoder_forward.1} parent=0
    _
  %s10 = ssub.s32 1, %s8
  %s11 = scalar_select 0, %s10, %s8
  $region1: #{decoder_forward.1} parent=0
    #allocation2 [shape = 'u8[1024]{0}', space=vmem, size = 0x400, scoped, tag = 'input window, operand 1, single buffered']
    #allocation3 [shape = 's32[2]{0}', space=sflag, size = 0x8, scoped, tag = 'scoped memory for decoder_forward.1']
    #allocation4 [shape = 'u8[512]{0}', space=vmem, size = 0x400, scoped, tag = 'input window, operand 2, single buffered']
    #allocation5 [shape = 's32[1]{0}', space=sflag, size = 0x4, scoped, tag = 'scoped memory for decoder_forward.1']
    #allocation6 [shape = 'u8[114688]{0}', space=vmem, size = 0x1c000, scoped, tag = 'input window, operand 3, single buffered']
    #allocation7 [shape = 'u8[2048]{0}', space=vmem, size = 0x800, scoped, tag = 'input window, operand 4, single buffered']
    #allocation8 [shape = 's32[1]{0}', space=sflag, size = 0x4, scoped, tag = 'scoped memory for decoder_forward.1']
    #allocation9 [shape = 'u8[5120000]{0}', space=vmem, size = 0x4e2000, scoped, tag = 'input window, operand 5']
    #allocation10 [shape = 'u8[25600]{0}', space=vmem, size = 0x6400, scoped, tag = 'input window, operand 6']
    %12 = vsyncpa [#allocation3], 0
    %13 = vsyncpa [#allocation5], 0
    %14 = vsyncpa [#allocation8], 0
    loop: start=0, step=1, limit=4
    $region2: #{decoder_forward.1} parent=1 // loop_pre_header
      _
    $region3: #{decoder_forward.1} parent=1 // loop_header
      %s16 = sphi 0, %s20
      %p17 = scmp.ge.s32.totalorder %s16, 4
      %s24 = sphi 0, %s24
      %s26 = sphi 0, %s24
      %s27 = sphi 0, %s26
      %s41 = sphi 0, %s27
      %s45 = sphi 0, %s45
      %s47 = sphi 0, %s45
      %s48 = sphi 0, %s47
      %s62 = sphi 0, %s48
      %s66 = sphi 0, %s66
      %s68 = sphi 0, %s66
      %s69 = sphi 0, %s68
      %s83 = sphi 0, %s69
      %s87 = sphi 0, %s87
      %s89 = sphi 0, %s87
      %s90 = sphi 0, %s89
      %s104 = sphi 0, %s90
      %s108 = sphi 0, %s108
      %s110 = sphi 0, %s108
      %s111 = sphi 0, %s110
      %s125 = sphi 0, %s111
      %s131 = sphi 0, %s133
      %s134 = sphi 0, %s131
      %s135 = sphi 0, %s134
      %s151 = sphi 0, %s135
      %s157 = sphi 0, %s159
      %s160 = sphi 0, %s157
      %s161 = sphi 0, %s160
      %s177 = sphi 0, %s161
      %s183 = sphi 0, %s185
      %s186 = sphi 0, %s183
      %s187 = sphi 0, %s186
      %s203 = sphi 0, %s187
    $region4: #{decoder_forward.1} parent=1 // loop_header_branch
      %19 = sbr.rel (%p17) target = $region8
    $region5: #{decoder_forward.1} parent=1 // loop_body
      %s21 = ssub.s32 %s16, 1
      %s22 = ssub.s32 %s16, 2
      %s23 = sadd.s32 %s16, 1
      %s25 = sadd.s32 %s24, 1
      %p28 = scmp.eq.s32.totalorder %s16, 1
      %p29 = scmp.ne.s32.totalorder %s24, %s26
      %p30 = scmp.eq.s32.totalorder %s16, 0
      %p31 = por %p29, %p30
      %p32 = scmp.ne.s32.totalorder %s24, %s26
      %p33 = scmp.eq.s32.totalorder %s21, 1
      %p34 = por %p32, %p33
      %p35 = scmp.ne.s32.totalorder %s26, %s27
      %p36 = scmp.eq.s32.totalorder %s21, 0
      %p37 = por %p35, %p36
      %p38 = scmp.ne.s32.totalorder %s26, %s27
      %p39 = scmp.eq.s32.totalorder %s22, 1
      %p40 = por %p38, %p39
      %p42 = scmp.ne.s32.totalorder %s27, %s41
      %p43 = scmp.eq.s32.totalorder %s22, 0
      %p44 = por %p42, %p43
      %s46 = sadd.s32 %s45, 1
      %p49 = scmp.eq.s32.totalorder %s16, 1
      %p50 = scmp.ne.s32.totalorder %s45, %s47
      %p51 = scmp.eq.s32.totalorder %s16, 0
      %p52 = por %p50, %p51
      %p53 = scmp.ne.s32.totalorder %s45, %s47
      %p54 = scmp.eq.s32.totalorder %s21, 1
      %p55 = por %p53, %p54
      %p56 = scmp.ne.s32.totalorder %s47, %s48
      %p57 = scmp.eq.s32.totalorder %s21, 0
      %p58 = por %p56, %p57
      %p59 = scmp.ne.s32.totalorder %s47, %s48
      %p60 = scmp.eq.s32.totalorder %s22, 1
      %p61 = por %p59, %p60
      %p63 = scmp.ne.s32.totalorder %s48, %s62
      %p64 = scmp.eq.s32.totalorder %s22, 0
      %p65 = por %p63, %p64
      %s67 = sadd.s32 %s66, 1
      %p70 = scmp.eq.s32.totalorder %s16, 1
      %p71 = scmp.ne.s32.totalorder %s66, %s68
      %p72 = scmp.eq.s32.totalorder %s16, 0
      %p73 = por %p71, %p72
      %p74 = scmp.ne.s32.totalorder %s66, %s68
      %p75 = scmp.eq.s32.totalorder %s21, 1
      %p76 = por %p74, %p75
      %p77 = scmp.ne.s32.totalorder %s68, %s69
      %p78 = scmp.eq.s32.totalorder %s21, 0
      %p79 = por %p77, %p78
      %p80 = scmp.ne.s32.totalorder %s68, %s69
      %p81 = scmp.eq.s32.totalorder %s22, 1
      %p82 = por %p80, %p81
      %p84 = scmp.ne.s32.totalorder %s69, %s83
      %p85 = scmp.eq.s32.totalorder %s22, 0
      %p86 = por %p84, %p85
      %s88 = sadd.s32 %s87, 1
      %p91 = scmp.eq.s32.totalorder %s16, 1
      %p92 = scmp.ne.s32.totalorder %s87, %s89
      %p93 = scmp.eq.s32.totalorder %s16, 0
      %p94 = por %p92, %p93
      %p95 = scmp.ne.s32.totalorder %s87, %s89
      %p96 = scmp.eq.s32.totalorder %s21, 1
      %p97 = por %p95, %p96
      %p98 = scmp.ne.s32.totalorder %s89, %s90
      %p99 = scmp.eq.s32.totalorder %s21, 0
      %p100 = por %p98, %p99
      %p101 = scmp.ne.s32.totalorder %s89, %s90
      %p102 = scmp.eq.s32.totalorder %s22, 1
      %p103 = por %p101, %p102
      %p105 = scmp.ne.s32.totalorder %s90, %s104
      %p106 = scmp.eq.s32.totalorder %s22, 0
      %p107 = por %p105, %p106
      %s109 = sadd.s32 %s108, 1
      %p112 = scmp.eq.s32.totalorder %s16, 1
      %p113 = scmp.ne.s32.totalorder %s108, %s110
      %p114 = scmp.eq.s32.totalorder %s16, 0
      %p115 = por %p113, %p114
      %p116 = scmp.ne.s32.totalorder %s108, %s110
      %p117 = scmp.eq.s32.totalorder %s21, 1
      %p118 = por %p116, %p117
      %p119 = scmp.ne.s32.totalorder %s110, %s111
      %p120 = scmp.eq.s32.totalorder %s21, 0
      %p121 = por %p119, %p120
      %p122 = scmp.ne.s32.totalorder %s110, %s111
      %p123 = scmp.eq.s32.totalorder %s22, 1
      %p124 = por %p122, %p123
      %p126 = scmp.ne.s32.totalorder %s111, %s125
      %p127 = scmp.eq.s32.totalorder %s22, 0
      %p128 = por %p126, %p127
      %s129 = ssub.s32 %s16, %s23
      %p130 = scmp.eq.s32.totalorder %s129, 0
      %s132 = sadd.s32 %s131, 1
      %s133 = scalar_select %p130, %s131, %s132
      %p136 = pneg %p130
      %p137 = scmp.eq.s32.totalorder %s16, 1
      %p138 = por %p136, %p137
      %p139 = scmp.ne.s32.totalorder %s131, %s134
      %p140 = scmp.eq.s32.totalorder %s16, 0
      %p141 = por %p139, %p140
      %p142 = scmp.ne.s32.totalorder %s131, %s134
      %p143 = scmp.eq.s32.totalorder %s21, 1
      %p144 = por %p142, %p143
      %p145 = scmp.ne.s32.totalorder %s134, %s135
      %p146 = scmp.eq.s32.totalorder %s21, 0
      %p147 = por %p145, %p146
      %p148 = scmp.ne.s32.totalorder %s134, %s135
      %p149 = scmp.eq.s32.totalorder %s22, 1
      %p150 = por %p148, %p149
      %p152 = scmp.ne.s32.totalorder %s135, %s151
      %p153 = scmp.eq.s32.totalorder %s22, 0
      %p154 = por %p152, %p153
      %s155 = ssub.s32 %s16, %s23
      %p156 = scmp.eq.s32.totalorder %s155, 0
      %s158 = sadd.s32 %s157, 1
      %s159 = scalar_select %p156, %s157, %s158
      %p162 = pneg %p156
      %p163 = scmp.eq.s32.totalorder %s16, 1
      %p164 = por %p162, %p163
      %p165 = scmp.ne.s32.totalorder %s157, %s160
      %p166 = scmp.eq.s32.totalorder %s16, 0
      %p167 = por %p165, %p166
      %p168 = scmp.ne.s32.totalorder %s157, %s160
      %p169 = scmp.eq.s32.totalorder %s21, 1
      %p170 = por %p168, %p169
      %p171 = scmp.ne.s32.totalorder %s160, %s161
      %p172 = scmp.eq.s32.totalorder %s21, 0
      %p173 = por %p171, %p172
      %p174 = scmp.ne.s32.totalorder %s160, %s161
      %p175 = scmp.eq.s32.totalorder %s22, 1
      %p176 = por %p174, %p175
      %p178 = scmp.ne.s32.totalorder %s161, %s177
      %p179 = scmp.eq.s32.totalorder %s22, 0
      %p180 = por %p178, %p179
      %s181 = ssub.s32 %s16, %s23
      %p182 = scmp.eq.s32.totalorder %s181, 0
      %s184 = sadd.s32 %s183, 1
      %s185 = scalar_select %p182, %s183, %s184
      %p188 = pneg %p182
      %p189 = scmp.eq.s32.totalorder %s16, 1
      %p190 = por %p188, %p189
      %p191 = scmp.ne.s32.totalorder %s183, %s186
      %p192 = scmp.eq.s32.totalorder %s16, 0
      %p193 = por %p191, %p192
      %p194 = scmp.ne.s32.totalorder %s183, %s186
      %p195 = scmp.eq.s32.totalorder %s21, 1
      %p196 = por %p194, %p195
      %p197 = scmp.ne.s32.totalorder %s186, %s187
      %p198 = scmp.eq.s32.totalorder %s21, 0
      %p199 = por %p197, %p198
      %p200 = scmp.ne.s32.totalorder %s186, %s187
      %p201 = scmp.eq.s32.totalorder %s22, 1
      %p202 = por %p200, %p201
      %p204 = scmp.ne.s32.totalorder %s187, %s203
      %p205 = scmp.eq.s32.totalorder %s22, 0
      %p206 = por %p204, %p205
      %p207 = scmp.le.s32.totalorder 1, %s16
      %p208 = scmp.lt.s32.totalorder %s16, 3
      %p209 = pnand %p207, %p208
      %p210 = pneg %p209
      // Predicated region
      $region9: #{decoder_forward.1} parent=5 // pred_check
        _
      $region10: #{decoder_forward.1} parent=5 // pred_check_branch
        %212 = sbr.rel (%p209) target = $region12
      $region11: #{decoder_forward.1} parent=5 // pred_region
        %s213 = ssub.s32 %s16, 1
        // Predicated region
        $region13: #{decoder_forward.1} parent=11 // pred_check
          %p214 = pneg %p37
        $region14: #{decoder_forward.1} parent=11 // pred_check_branch
          %216 = sbr.rel (%p214) target = $region16
        $region15: #{decoder_forward.1} parent=11 // pred_region
          _
        $region16: #{decoder_forward.1} parent=11 // pred_fallthru
          _
        // Predicated region
        $region17: #{decoder_forward.1} parent=11 // pred_check
          %p217 = pneg %p58
        $region18: #{decoder_forward.1} parent=11 // pred_check_branch
          %219 = sbr.rel (%p217) target = $region20
        $region19: #{decoder_forward.1} parent=11 // pred_region
          %s221 = ssub.s32 32, 32
          %222 = vsyncadd [#allocation3], %s221
          %s224 = sshll.u32 [#allocation2], 4
          %s225 = int_to_ptr.vmem [resolvable:$true] %s224
          %227 = dma.hbm_to_vmem [thread:$0]  %s1, 32, %s225, [#allocation3]
        $region20: #{decoder_forward.1} parent=11 // pred_fallthru
          _
        // Predicated region
        $region21: #{decoder_forward.1} parent=11 // pred_check
          %p228 = pneg %p79
        $region22: #{decoder_forward.1} parent=11 // pred_check_branch
          %230 = sbr.rel (%p228) target = $region24
        $region23: #{decoder_forward.1} parent=11 // pred_region
          %s232 = ssub.s32 16, 16
          %233 = vsyncadd [#allocation5], %s232
          %s235 = sshll.u32 [#allocation4], 4
          %s236 = int_to_ptr.vmem [resolvable:$true] %s235
          %238 = dma.hbm_to_vmem [thread:$0]  %s2, 16, %s236, [#allocation5]
        $region24: #{decoder_forward.1} parent=11 // pred_fallthru
          _
        // Predicated region
        $region25: #{decoder_forward.1} parent=11 // pred_check
          %p239 = pneg %p100
        $region26: #{decoder_forward.1} parent=11 // pred_check_branch
          %241 = sbr.rel (%p239) target = $region28
        $region27: #{decoder_forward.1} parent=11 // pred_region
          %s243 = ssub.s32 3584, 3584
          %244 = vsyncadd [#allocation5], %s243
          %s245 = sshll.u32 [#allocation6], 4
          %s246 = int_to_ptr.vmem [resolvable:$true] %s245
          %251 = dma.hbm_to_vmem [thread:$0]  %s3, 3584, %s246, [#allocation5], 512, 512, 32
        $region28: #{decoder_forward.1} parent=11 // pred_fallthru
          _
        // Predicated region
        $region29: #{decoder_forward.1} parent=11 // pred_check
          %p252 = pneg %p121
        $region30: #{decoder_forward.1} parent=11 // pred_check_branch
          %254 = sbr.rel (%p252) target = $region32
        $region31: #{decoder_forward.1} parent=11 // pred_region
          %s256 = ssub.s32 64, 64
          %257 = vsyncadd [#allocation8], %s256
          %s259 = sshll.u32 [#allocation7], 4
          %s260 = int_to_ptr.vmem [resolvable:$true] %s259
          %262 = dma.hbm_to_vmem [thread:$0]  %s4, 64, %s260, [#allocation8]
        $region32: #{decoder_forward.1} parent=11 // pred_fallthru
          _
      $region12: #{decoder_forward.1} parent=5 // pred_fallthru
        _
      %p263 = scmp.lt.s32.totalorder %s16, 2
      // Predicated region
      $region33: #{decoder_forward.1} parent=5 // pred_check
        %p264 = pneg %p263
      $region34: #{decoder_forward.1} parent=5 // pred_check_branch
        %266 = sbr.rel (%p264) target = $region36
      $region35: #{decoder_forward.1} parent=5 // pred_region
        // Predicated region
        $region37: #{decoder_forward.1} parent=35 // pred_check
          %p267 = pneg %p141
        $region38: #{decoder_forward.1} parent=35 // pred_check_branch
          %269 = sbr.rel (%p267) target = $region40
        $region39: #{decoder_forward.1} parent=35 // pred_region
          %s270 = sand.u32 %s16, 1
          %s271 = scalar_lea.sflag [#allocation3], %s270
          %s272 = sand.u32 %s131, 1
          %s273 = smul.addr %s272, 5000
          %s274 = scalar_lea.vmem [#allocation9], %s273
          %s275 = smul.u32 25, %s16
          %s277 = ssub.s32 80000, 80000
          %278 = vsyncadd %s271, %s277
          %s279 = smul.addr %s275, 64
          %s280 = scalar_lea.hbm %s5, %s279
          %s281 = sshll.u32 %s274, 4
          %s282 = int_to_ptr.vmem [resolvable:$true] %s281
          %287 = dma.hbm_to_vmem [thread:$0]  %s280, 80000, %s282, %s271, 3200, 1600, 100
        $region40: #{decoder_forward.1} parent=35 // pred_fallthru
          _
        // Predicated region
        $region41: #{decoder_forward.1} parent=35 // pred_check
          %p288 = pneg %p167
        $region42: #{decoder_forward.1} parent=35 // pred_check_branch
          %290 = sbr.rel (%p288) target = $region44
        $region43: #{decoder_forward.1} parent=35 // pred_region
          %s291 = sand.u32 %s16, 1
          %s292 = scalar_lea.sflag [#allocation3], %s291
          %s293 = sand.u32 %s157, 1
          %s294 = smul.addr %s293, 25
          %s295 = scalar_lea.vmem [#allocation10], %s294
          %s296 = smul.u32 25, %s16
          %s298 = ssub.s32 400, 400
          %299 = vsyncadd %s292, %s298
          %s300 = smul.addr %s296, 16
          %s301 = scalar_lea.hbm %s6, %s300
          %s303 = sshll.u32 %s295, 4
          %s304 = int_to_ptr.vmem [resolvable:$true] %s303
          %306 = dma.hbm_to_vmem [thread:$0]  %s301, 400, %s304, %s292
        $region44: #{decoder_forward.1} parent=35 // pred_fallthru
          _
      $region36: #{decoder_forward.1} parent=5 // pred_fallthru
        _
      %p307 = scmp.le.s32.totalorder 1, %s16
      %p308 = scmp.lt.s32.totalorder %s16, 3
      %p309 = pnand %p307, %p308
      %p310 = pneg %p309
      // Predicated region
      $region45: #{decoder_forward.1} parent=5 // pred_check
        _
      $region46: #{decoder_forward.1} parent=5 // pred_check_branch
        %312 = sbr.rel (%p309) target = $region48
      $region47: #{decoder_forward.1} parent=5 // pred_region
        %s313 = ssub.s32 %s16, 1
        // Predicated region
        $region49: #{decoder_forward.1} parent=47 // pred_check
          %p314 = pneg %p58
        $region50: #{decoder_forward.1} parent=47 // pred_check_branch
          %316 = sbr.rel (%p314) target = $region52
        $region51: #{decoder_forward.1} parent=47 // pred_region
          %317 = dma.done [#allocation3], 32
        $region52: #{decoder_forward.1} parent=47 // pred_fallthru
          _
        // Predicated region
        $region53: #{decoder_forward.1} parent=47 // pred_check
          %p318 = pneg %p79
        $region54: #{decoder_forward.1} parent=47 // pred_check_branch
          %320 = sbr.rel (%p318) target = $region56
        $region55: #{decoder_forward.1} parent=47 // pred_region
          %321 = dma.done [#allocation5], 16
        $region56: #{decoder_forward.1} parent=47 // pred_fallthru
          _
        // Predicated region
        $region57: #{decoder_forward.1} parent=47 // pred_check
          %p322 = pneg %p100
        $region58: #{decoder_forward.1} parent=47 // pred_check_branch
          %324 = sbr.rel (%p322) target = $region60
        $region59: #{decoder_forward.1} parent=47 // pred_region
          %325 = dma.done [#allocation5], 3584
        $region60: #{decoder_forward.1} parent=47 // pred_fallthru
          _
        // Predicated region
        $region61: #{decoder_forward.1} parent=47 // pred_check
          %p326 = pneg %p121
        $region62: #{decoder_forward.1} parent=47 // pred_check_branch
          %328 = sbr.rel (%p326) target = $region64
        $region63: #{decoder_forward.1} parent=47 // pred_region
          %329 = dma.done [#allocation8], 64
        $region64: #{decoder_forward.1} parent=47 // pred_fallthru
          _
        %s330 = sand.u32 %s21, 1
        %s331 = scalar_lea.sflag [#allocation3], %s330
        %s332 = sand.u32 %s134, 1
        %s333 = smul.addr %s332, 5000
        %s334 = scalar_lea.vmem [#allocation9], %s333
        // Predicated region
        $region65: #{decoder_forward.1} parent=47 // pred_check
          %p335 = pneg %p147
        $region66: #{decoder_forward.1} parent=47 // pred_check_branch
          %337 = sbr.rel (%p335) target = $region68
        $region67: #{decoder_forward.1} parent=47 // pred_region
          %338 = dma.done %s331, 80000
        $region68: #{decoder_forward.1} parent=47 // pred_fallthru
          _
        %s339 = sand.u32 %s21, 1
        %s340 = scalar_lea.sflag [#allocation3], %s339
        %s341 = sand.u32 %s160, 1
        %s342 = smul.addr %s341, 25
        %s343 = scalar_lea.vmem [#allocation10], %s342
        // Predicated region
        $region69: #{decoder_forward.1} parent=47 // pred_check
          %p344 = pneg %p173
        $region70: #{decoder_forward.1} parent=47 // pred_check_branch
          %346 = sbr.rel (%p344) target = $region72
        $region71: #{decoder_forward.1} parent=47 // pred_region
          %347 = dma.done %s340, 400
        $region72: #{decoder_forward.1} parent=47 // pred_fallthru
          _
        %p348 = pneg %p37
        %p349 = pneg %p34
        %p350 = pneg %p58
        %p351 = pneg %p55
        %p352 = pneg %p79
        %p353 = pneg %p76
        %p354 = pneg %p100
        %p355 = pneg %p97
        %p356 = pneg %p121
        %p357 = pneg %p118
        %s358 = sand.u32 %s21, 1
        %s359 = scalar_lea.sflag [#allocation3], %s358
        %s360 = sand.u32 %s134, 1
        %s361 = smul.addr %s360, 5000
        %s362 = scalar_lea.vmem [#allocation9], %s361
        %p363 = pneg %p147
        %p364 = pneg %p144
        %s365 = sand.u32 %s21, 1
        %s366 = scalar_lea.sflag [#allocation3], %s365
        %s367 = sand.u32 %s160, 1
        %s368 = smul.addr %s367, 25
        %s369 = scalar_lea.vmem [#allocation10], %s368
        %p370 = pneg %p173
        %p371 = pneg %p170
        %p372 = pneg %p199
        %p373 = pneg %p196
        %s374 = smul.u32 25, %s21
        %p375 = scmp.lt.s32.totalorder %s374, 49
        %s376 = scalar_select %p375, %s374, 49
        %s377 = smul.addr %s376, 8
        %s378 = scalar_lea.vmem %s7, %s377
        %s379 = smul.u32 25, %s21
        %s380 = smul.u32 25, %s21
        %s381 = smul.u32 25, %s21
        %p382 = scmp.lt.s32.totalorder %s381, 49
        %s383 = scalar_select %p382, %s381, 49
        %s384 = smul.addr %s383, 8
        %s385 = scalar_lea.vmem %s7, %s384
        %s386 = smul.u32 25, %s21
        %v388 = vld [vmem:[%s0] sm:$0xff]
        %v389 = vld [vmem:[#allocation2] sm:$0x3]
        %v390 = vld [vmem:[#allocation4] sm:$0x1]
        %v392 = vlaneseq
        %v393 = vshrl.u32 %v392, 7
        %v394 = vsub.s32 0, %v393
        %v395 = vrot.slane %v390, %v394
        %vm397 = vcmask 15360
        %v399 = vsel %vm397, %v388, 0
        %vm401 = vcmask 1041408
        %v403 = vsel %vm401, %v389, 0
        %405 = vmatprep.subr.mxu0 0.0
        %406 = vmatpush1.msra.mxu0 %v403
        %407 = vmatprep.subr.mxu0 0.0
        %408 = vmatpush1.msra.mxu0 0.0
        %409 = vmatprep.subr.mxu0 0.0
        %410 = vmatpush1.msra.mxu0 0.0
        %411 = vmatprep.subr.mxu0 0.0
        %412 = vmatpush1.msra.mxu0 0.0
        %413 = vmatprep.subr.mxu0 0.0
        %414 = vmatpush1.msra.mxu0 0.0
        %415 = vmatprep.subr.mxu0 0.0
        %416 = vmatpush1.msra.mxu0 0.0
        %417 = vmatprep.subr.mxu0 0.0
        %418 = vmatpush1.msra.mxu0 0.0
        %419 = vmatprep.subr.mxu0 0.0
        %420 = vmatpush1.msra.mxu0 0.0
        %421 = vmatprep.subr.mxu0 0.0
        %422 = vmatpush1.msra.mxu0 0.0
        %423 = vmatprep.subr.mxu0 0.0
        %424 = vmatpush1.msra.mxu0 0.0
        %425 = vmatprep.subr.mxu0 0.0
        %426 = vmatpush1.msra.mxu0 0.0
        %427 = vmatprep.subr.mxu0 0.0
        %428 = vmatpush1.msra.mxu0 0.0
        %429 = vmatprep.subr.mxu0 0.0
        %430 = vmatpush1.msra.mxu0 0.0
        %431 = vmatprep.subr.mxu0 0.0
        %432 = vmatpush1.msra.mxu0 0.0
        %433 = vmatprep.subr.mxu0 0.0
        %434 = vmatpush1.msra.mxu0 0.0
        %435 = vmatprep.subr.mxu0 0.0
        %436 = vmatpush1.msra.mxu0 0.0
        %437 = vmatprep.subr.mxu0 0.0
        %438 = vmatpush1.msra.mxu0 0.0
        %439 = vmatprep.subr.mxu0 0.0
        %440 = vmatpush1.msra.mxu0 0.0
        %441 = vmatprep.subr.mxu0 0.0
        %442 = vmatpush1.msra.mxu0 0.0
        %443 = vmatprep.subr.mxu0 0.0
        %444 = vmatpush1.msra.mxu0 0.0
        %445 = vmatprep.subr.mxu0 0.0
        %446 = vmatpush1.msra.mxu0 0.0
        %447 = vmatprep.subr.mxu0 0.0
        %448 = vmatpush1.msra.mxu0 0.0
        %449 = vmatprep.subr.mxu0 0.0
        %450 = vmatpush1.msra.mxu0 0.0
        %451 = vmatprep.subr.mxu0 0.0
        %452 = vmatpush1.msra.mxu0 0.0
        %453 = vmatprep.subr.mxu0 0.0
        %454 = vmatpush1.msra.mxu0 0.0
        %455 = vmatprep.subr.mxu0 0.0
        %456 = vmatpush1.msra.mxu0 0.0
        %457 = vmatprep.subr.mxu0 0.0
        %458 = vmatpush1.msra.mxu0 0.0
        %459 = vmatprep.subr.mxu0 0.0
        %460 = vmatpush1.msra.mxu0 0.0
        %461 = vmatprep.subr.mxu0 0.0
        %462 = vmatpush1.msra.mxu0 0.0
        %463 = vmatprep.subr.mxu0 0.0
        %464 = vmatpush1.msra.mxu0 0.0
        %465 = vmatprep.subr.mxu0 0.0
        %466 = vmatpush1.msra.mxu0 0.0
        %467 = vmatprep.subr.mxu0 0.0
        %468 = vmatpush1.msra.mxu0 0.0
        %469 = vmatprep.mubr.f32.mxu0 0.0
        %470 = vmatmul.mubr.f32.gmra.mrb[0].mxu0 %v399
        %v471 = vpop.f32.mrb[0].mxu0
        %v472 = vadd.f32 %v395, %v471
        %v473 = vpop.f32.mrb[0].mxu0
        %474 = vdwg.mxu0
        %v475 = vmax.f32 %v472, 0.0
        %v476 = vld [vmem:[#allocation6] sm:$0xff]
        %v477 = vld [vmem:[#allocation6 + $0x8] sm:$0xff]
        %v478 = vld [vmem:[#allocation6 + $0x10] sm:$0xff]
        %v479 = vld [vmem:[#allocation6 + $0x18] sm:$0xff]
        %v480 = vld [vmem:[#allocation6 + $0x20] sm:$0xff]
        %v481 = vld [vmem:[#allocation6 + $0x28] sm:$0xff]
        %v482 = vld [vmem:[#allocation6 + $0x30] sm:$0xff]
        %v483 = vld [vmem:[#allocation6 + $0x38] sm:$0xff]
        %v484 = vld [vmem:[#allocation6 + $0x40] sm:$0xff]
        %v485 = vld [vmem:[#allocation6 + $0x48] sm:$0xff]
        %v486 = vld [vmem:[#allocation6 + $0x50] sm:$0xff]
        %v487 = vld [vmem:[#allocation6 + $0x58] sm:$0xff]
        %v488 = vld [vmem:[#allocation6 + $0x60] sm:$0xff]
        %v489 = vld [vmem:[#allocation6 + $0x68] sm:$0xff]
        %v490 = vld [vmem:[#allocation6 + $0x70] sm:$0xff]
        %v491 = vld [vmem:[#allocation6 + $0x78] sm:$0xff]
        %v492 = vld [vmem:[#allocation6 + $0x80] sm:$0xff]
        %v493 = vld [vmem:[#allocation6 + $0x88] sm:$0xff]
        %v494 = vld [vmem:[#allocation6 + $0x90] sm:$0xff]
        %v495 = vld [vmem:[#allocation6 + $0x98] sm:$0xff]
        %v496 = vld [vmem:[#allocation6 + $0xa0] sm:$0xff]
        %v497 = vld [vmem:[#allocation6 + $0xa8] sm:$0xff]
        %v498 = vld [vmem:[#allocation6 + $0xb0] sm:$0xff]
        %v499 = vld [vmem:[#allocation6 + $0xb8] sm:$0xff]
        %v500 = vld [vmem:[#allocation6 + $0xc0] sm:$0x3]
        %v501 = vld [vmem:[#allocation6 + $0xc8] sm:$0x3]
        %v502 = vld [vmem:[#allocation6 + $0xd0] sm:$0x3]
        %v503 = vld [vmem:[#allocation6 + $0xd8] sm:$0x3]
        %v504 = vld [vmem:[#allocation7] sm:$0xf]
        %v506 = vlaneseq
        %v507 = vshrl.u32 %v506, 7
        %v508 = vsub.s32 0, %v507
        %v509 = vrot.slane %v504, %v508
        %v510 = vlaneseq
        %v511 = vshrl.u32 %v510, 7
        %v512 = vsub.s32 1, %v511
        %v513 = vrot.slane %v504, %v512
        %v514 = vlaneseq
        %v515 = vshrl.u32 %v514, 7
        %v516 = vsub.s32 2, %v515
        %v517 = vrot.slane %v504, %v516
        %v518 = vlaneseq
        %v519 = vshrl.u32 %v518, 7
        %v520 = vsub.s32 3, %v519
        %v521 = vrot.slane %v504, %v520
        %vm526 = vcmask 408576
        %v528 = vsel %vm526, %v475, 0
        %v531 = vsel %vm401, %v500, 0
        %v534 = vsel %vm401, %v501, 0
        %v537 = vsel %vm401, %v502, 0
        %v540 = vsel %vm401, %v503, 0
        %542 = vmatprep.subr.mxu0 %v477
        %543 = vmatpush1.msra.mxu0 %v476
        %544 = vmatprep.subr.mxu0 %v481
        %545 = vmatpush1.msra.mxu0 %v480
        %546 = vmatprep.subr.mxu0 %v485
        %547 = vmatpush1.msra.mxu0 %v484
        %548 = vmatprep.subr.mxu0 %v489
        %549 = vmatpush1.msra.mxu0 %v488
        %550 = vmatprep.subr.mxu0 %v493
        %551 = vmatpush1.msra.mxu0 %v492
        %552 = vmatprep.subr.mxu0 %v497
        %553 = vmatpush1.msra.mxu0 %v496
        %554 = vmatprep.subr.mxu0 %v534
        %555 = vmatpush1.msra.mxu0 %v531
        %556 = vmatprep.subr.mxu0 0.0
        %557 = vmatpush1.msra.mxu0 0.0
        %558 = vmatprep.subr.mxu0 0.0
        %559 = vmatpush1.msra.mxu0 0.0
        %560 = vmatprep.subr.mxu0 0.0
        %561 = vmatpush1.msra.mxu0 0.0
        %562 = vmatprep.subr.mxu0 0.0
        %563 = vmatpush1.msra.mxu0 0.0
        %564 = vmatprep.subr.mxu0 0.0
        %565 = vmatpush1.msra.mxu0 0.0
        %566 = vmatprep.subr.mxu0 0.0
        %567 = vmatpush1.msra.mxu0 0.0
        %568 = vmatprep.subr.mxu0 0.0
        %569 = vmatpush1.msra.mxu0 0.0
        %570 = vmatprep.subr.mxu0 0.0
        %571 = vmatpush1.msra.mxu0 0.0
        %572 = vmatprep.subr.mxu0 0.0
        %573 = vmatpush1.msra.mxu0 0.0
        %574 = vmatprep.subr.mxu0 0.0
        %575 = vmatpush1.msra.mxu0 0.0
        %576 = vmatprep.subr.mxu0 0.0
        %577 = vmatpush1.msra.mxu0 0.0
        %578 = vmatprep.subr.mxu0 0.0
        %579 = vmatpush1.msra.mxu0 0.0
        %580 = vmatprep.subr.mxu0 0.0
        %581 = vmatpush1.msra.mxu0 0.0
        %582 = vmatprep.subr.mxu0 0.0
        %583 = vmatpush1.msra.mxu0 0.0
        %584 = vmatprep.subr.mxu0 0.0
        %585 = vmatpush1.msra.mxu0 0.0
        %586 = vmatprep.subr.mxu0 0.0
        %587 = vmatpush1.msra.mxu0 0.0
        %588 = vmatprep.subr.mxu0 0.0
        %589 = vmatpush1.msra.mxu0 0.0
        %590 = vmatprep.subr.mxu0 0.0
        %591 = vmatpush1.msra.mxu0 0.0
        %592 = vmatprep.subr.mxu0 0.0
        %593 = vmatpush1.msra.mxu0 0.0
        %594 = vmatprep.subr.mxu0 0.0
        %595 = vmatpush1.msra.mxu0 0.0
        %596 = vmatprep.subr.mxu0 0.0
        %597 = vmatpush1.msra.mxu0 0.0
        %598 = vmatprep.subr.mxu0 0.0
        %599 = vmatpush1.msra.mxu0 0.0
        %600 = vmatprep.subr.mxu0 0.0
        %601 = vmatpush1.msra.mxu0 0.0
        %602 = vmatprep.subr.mxu0 0.0
        %603 = vmatpush1.msra.mxu0 0.0
        %604 = vmatprep.subr.mxu0 0.0
        %605 = vmatpush1.msra.mxu0 0.0
        %606 = vmatprep.mubr.f32.mxu0 0.0
        %607 = vmatmul.mubr.f32.gmra.mrb[0].mxu0 %v528
        %v608 = vpop.f32.mrb[0].mxu0
        %v609 = vadd.f32 %v509, %v608
        %v610 = vpop.f32.mrb[0].mxu0
        %v611 = vadd.f32 %v513, %v610
        %612 = vdwg.mxu0
        %613 = vmatprep.subr.mxu0 %v479
        %614 = vmatpush1.msra.mxu0 %v478
        %615 = vmatprep.subr.mxu0 %v483
        %616 = vmatpush1.msra.mxu0 %v482
        %617 = vmatprep.subr.mxu0 %v487
        %618 = vmatpush1.msra.mxu0 %v486
        %619 = vmatprep.subr.mxu0 %v491
        %620 = vmatpush1.msra.mxu0 %v490
        %621 = vmatprep.subr.mxu0 %v495
        %622 = vmatpush1.msra.mxu0 %v494
        %623 = vmatprep.subr.mxu0 %v499
        %624 = vmatpush1.msra.mxu0 %v498
        %625 = vmatprep.subr.mxu0 %v540
        %626 = vmatpush1.msra.mxu0 %v537
        %627 = vmatprep.subr.mxu0 0.0
        %628 = vmatpush1.msra.mxu0 0.0
        %629 = vmatprep.subr.mxu0 0.0
        %630 = vmatpush1.msra.mxu0 0.0
        %631 = vmatprep.subr.mxu0 0.0
        %632 = vmatpush1.msra.mxu0 0.0
        %633 = vmatprep.subr.mxu0 0.0
        %634 = vmatpush1.msra.mxu0 0.0
        %635 = vmatprep.subr.mxu0 0.0
        %636 = vmatpush1.msra.mxu0 0.0
        %637 = vmatprep.subr.mxu0 0.0
        %638 = vmatpush1.msra.mxu0 0.0
        %639 = vmatprep.subr.mxu0 0.0
        %640 = vmatpush1.msra.mxu0 0.0
        %641 = vmatprep.subr.mxu0 0.0
        %642 = vmatpush1.msra.mxu0 0.0
        %643 = vmatprep.subr.mxu0 0.0
        %644 = vmatpush1.msra.mxu0 0.0
        %645 = vmatprep.subr.mxu0 0.0
        %646 = vmatpush1.msra.mxu0 0.0
        %647 = vmatprep.subr.mxu0 0.0
        %648 = vmatpush1.msra.mxu0 0.0
        %649 = vmatprep.subr.mxu0 0.0
        %650 = vmatpush1.msra.mxu0 0.0
        %651 = vmatprep.subr.mxu0 0.0
        %652 = vmatpush1.msra.mxu0 0.0
        %653 = vmatprep.subr.mxu0 0.0
        %654 = vmatpush1.msra.mxu0 0.0
        %655 = vmatprep.subr.mxu0 0.0
        %656 = vmatpush1.msra.mxu0 0.0
        %657 = vmatprep.subr.mxu0 0.0
        %658 = vmatpush1.msra.mxu0 0.0
        %659 = vmatprep.subr.mxu0 0.0
        %660 = vmatpush1.msra.mxu0 0.0
        %661 = vmatprep.subr.mxu0 0.0
        %662 = vmatpush1.msra.mxu0 0.0
        %663 = vmatprep.subr.mxu0 0.0
        %664 = vmatpush1.msra.mxu0 0.0
        %665 = vmatprep.subr.mxu0 0.0
        %666 = vmatpush1.msra.mxu0 0.0
        %667 = vmatprep.subr.mxu0 0.0
        %668 = vmatpush1.msra.mxu0 0.0
        %669 = vmatprep.subr.mxu0 0.0
        %670 = vmatpush1.msra.mxu0 0.0
        %671 = vmatprep.subr.mxu0 0.0
        %672 = vmatpush1.msra.mxu0 0.0
        %673 = vmatprep.subr.mxu0 0.0
        %674 = vmatpush1.msra.mxu0 0.0
        %675 = vmatprep.subr.mxu0 0.0
        %676 = vmatpush1.msra.mxu0 0.0
        %677 = vmatprep.mubr.f32.mxu0 0.0
        %678 = vmatmul.mubr.f32.gmra.mrb[0].mxu0 %v528
        %v679 = vpop.f32.mrb[0].mxu0
        %v680 = vadd.f32 %v517, %v679
        %v681 = vpop.f32.mrb[0].mxu0
        %v682 = vadd.f32 %v521, %v681
        %683 = vdwg.mxu0
        %v684 = vmax.f32 %v609, 0.0
        %v685 = vmax.f32 %v611, 0.0
        %v686 = vmax.f32 %v680, 0.0
        %v687 = vmax.f32 %v682, 0.0
        %v688 = vpack.c.bf16 %v684, %v684
        %v689 = vpack.c.bf16 %v685, %v685
        %v690 = vpack.c.bf16 %v686, %v686
        %v691 = vpack.c.bf16 %v687, %v687
        %v692 = vld [vmem:[%s334] sm:$0xff]
        %v693 = vld [vmem:[%s334 + $0x8] sm:$0xff]
        %v694 = vld [vmem:[%s334 + $0x10] sm:$0xff]
        %v695 = vld [vmem:[%s334 + $0x18] sm:$0xff]
        %v696 = vld [vmem:[%s334 + $0x20] sm:$0xff]
        %v697 = vld [vmem:[%s334 + $0x28] sm:$0xff]
        %v698 = vld [vmem:[%s334 + $0x30] sm:$0xff]
        %v699 = vld [vmem:[%s334 + $0x38] sm:$0xff]
        %v700 = vld [vmem:[%s334 + $0x40] sm:$0xff]
        %v701 = vld [vmem:[%s334 + $0x48] sm:$0xff]
        %v702 = vld [vmem:[%s334 + $0x50] sm:$0xff]
        %v703 = vld [vmem:[%s334 + $0x58] sm:$0xff]
        %v704 = vld [vmem:[%s334 + $0x60] sm:$0xf]
        %v705 = vld [vmem:[%s334 + $0x64] sm:$0xff]
        %v706 = vld [vmem:[%s334 + $0x6c] sm:$0xff]
        %v707 = vld [vmem:[%s334 + $0x74] sm:$0xff]
        %v708 = vld [vmem:[%s334 + $0x7c] sm:$0xff]
        %v709 = vld [vmem:[%s334 + $0x84] sm:$0xff]
        %v710 = vld [vmem:[%s334 + $0x8c] sm:$0xff]
        %v711 = vld [vmem:[%s334 + $0x94] sm:$0xff]
        %v712 = vld [vmem:[%s334 + $0x9c] sm:$0xff]
        %v713 = vld [vmem:[%s334 + $0xa4] sm:$0xff]
        %v714 = vld [vmem:[%s334 + $0xac] sm:$0xff]
        %v715 = vld [vmem:[%s334 + $0xb4] sm:$0xff]
        %v716 = vld [vmem:[%s334 + $0xbc] sm:$0xff]
        %v717 = vld [vmem:[%s334 + $0xc4] sm:$0xf]
        %v718 = vld [vmem:[%s334 + $0xc8] sm:$0xff]
        %v719 = vld [vmem:[%s334 + $0xd0] sm:$0xff]
        %v720 = vld [vmem:[%s334 + $0xd8] sm:$0xff]
        %v721 = vld [vmem:[%s334 + $0xe0] sm:$0xff]
        %v722 = vld [vmem:[%s334 + $0xe8] sm:$0xff]
        %v723 = vld [vmem:[%s334 + $0xf0] sm:$0xff]
        %v724 = vld [vmem:[%s334 + $0xf8] sm:$0xff]
        %v725 = vld [vmem:[%s334 + $0x100] sm:$0xff]
        %v726 = vld [vmem:[%s334 + $0x108] sm:$0xff]
        %v727 = vld [vmem:[%s334 + $0x110] sm:$0xff]
        %v728 = vld [vmem:[%s334 + $0x118] sm:$0xff]
        %v729 = vld [vmem:[%s334 + $0x120] sm:$0xff]
        %v730 = vld [vmem:[%s334 + $0x128] sm:$0xf]
        %v731 = vld [vmem:[%s334 + $0x12c] sm:$0xff]
        %v732 = vld [vmem:[%s334 + $0x134] sm:$0xff]
        %v733 = vld [vmem:[%s334 + $0x13c] sm:$0xff]
        %v734 = vld [vmem:[%s334 + $0x144] sm:$0xff]
        %v735 = vld [vmem:[%s334 + $0x14c] sm:$0xff]
        %v736 = vld [vmem:[%s334 + $0x154] sm:$0xff]
        %v737 = vld [vmem:[%s334 + $0x15c] sm:$0xff]
        %v738 = vld [vmem:[%s334 + $0x164] sm:$0xff]
        %v739 = vld [vmem:[%s334 + $0x16c] sm:$0xff]
        %v740 = vld [vmem:[%s334 + $0x174] sm:$0xff]
        %v741 = vld [vmem:[%s334 + $0x17c] sm:$0xff]
        %v742 = vld [vmem:[%s334 + $0x184] sm:$0xff]
        %v743 = vld [vmem:[%s334 + $0x18c] sm:$0xf]
        %v744 = vld [vmem:[%s334 + $0x190] sm:$0xff]
        %v745 = vld [vmem:[%s334 + $0x198] sm:$0xff]
        %v746 = vld [vmem:[%s334 + $0x1a0] sm:$0xff]
        %v747 = vld [vmem:[%s334 + $0x1a8] sm:$0xff]
        %v748 = vld [vmem:[%s334 + $0x1b0] sm:$0xff]
        %v749 = vld [vmem:[%s334 + $0x1b8] sm:$0xff]
        %v750 = vld [vmem:[%s334 + $0x1c0] sm:$0xff]
        %v751 = vld [vmem:[%s334 + $0x1c8] sm:$0xff]
        %v752 = vld [vmem:[%s334 + $0x1d0] sm:$0xff]
        %v753 = vld [vmem:[%s334 + $0x1d8] sm:$0xff]
        %v754 = vld [vmem:[%s334 + $0x1e0] sm:$0xff]
        %v755 = vld [vmem:[%s334 + $0x1e8] sm:$0xff]
        %v756 = vld [vmem:[%s334 + $0x1f0] sm:$0xf]
        %v757 = vld [vmem:[%s334 + $0x1f4] sm:$0xff]
        %v758 = vld [vmem:[%s334 + $0x1fc] sm:$0xff]
        %v759 = vld [vmem:[%s334 + $0x204] sm:$0xff]
        %v760 = vld [vmem:[%s334 + $0x20c] sm:$0xff]
        %v761 = vld [vmem:[%s334 + $0x214] sm:$0xff]
        %v762 = vld [vmem:[%s334 + $0x21c] sm:$0xff]
        %v763 = vld [vmem:[%s334 + $0x224] sm:$0xff]
        %v764 = vld [vmem:[%s334 + $0x22c] sm:$0xff]
        %v765 = vld [vmem:[%s334 + $0x234] sm:$0xff]
        %v766 = vld [vmem:[%s334 + $0x23c] sm:$0xff]
        %v767 = vld [vmem:[%s334 + $0x244] sm:$0xff]
        %v768 = vld [vmem:[%s334 + $0x24c] sm:$0xff]
        %v769 = vld [vmem:[%s334 + $0x254] sm:$0xf]
        %v770 = vld [vmem:[%s334 + $0x258] sm:$0xff]
        %v771 = vld [vmem:[%s334 + $0x260] sm:$0xff]
        %v772 = vld [vmem:[%s334 + $0x268] sm:$0xff]
        %v773 = vld [vmem:[%s334 + $0x270] sm:$0xff]
        %v774 = vld [vmem:[%s334 + $0x278] sm:$0xff]
        %v775 = vld [vmem:[%s334 + $0x280] sm:$0xff]
        %v776 = vld [vmem:[%s334 + $0x288] sm:$0xff]
        %v777 = vld [vmem:[%s334 + $0x290] sm:$0xff]
        %v778 = vld [vmem:[%s334 + $0x298] sm:$0xff]
        %v779 = vld [vmem:[%s334 + $0x2a0] sm:$0xff]
        %v780 = vld [vmem:[%s334 + $0x2a8] sm:$0xff]
        %v781 = vld [vmem:[%s334 + $0x2b0] sm:$0xff]
        %v782 = vld [vmem:[%s334 + $0x2b8] sm:$0xf]
        %v783 = vld [vmem:[%s334 + $0x2bc] sm:$0xff]
        %v784 = vld [vmem:[%s334 + $0x2c4] sm:$0xff]
        %v785 = vld [vmem:[%s334 + $0x2cc] sm:$0xff]
        %v786 = vld [vmem:[%s334 + $0x2d4] sm:$0xff]
        %v787 = vld [vmem:[%s334 + $0x2dc] sm:$0xff]
        %v788 = vld [vmem:[%s334 + $0x2e4] sm:$0xff]
        %v789 = vld [vmem:[%s334 + $0x2ec] sm:$0xff]
        %v790 = vld [vmem:[%s334 + $0x2f4] sm:$0xff]
        %v791 = vld [vmem:[%s334 + $0x2fc] sm:$0xff]
        %v792 = vld [vmem:[%s334 + $0x304] sm:$0xff]
        %v793 = vld [vmem:[%s334 + $0x30c] sm:$0xff]
        %v794 = vld [vmem:[%s334 + $0x314] sm:$0xff]
        %v795 = vld [vmem:[%s334 + $0x31c] sm:$0xf]
        %v796 = vld [vmem:[%s334 + $0x320] sm:$0xff]
        %v797 = vld [vmem:[%s334 + $0x328] sm:$0xff]
        %v798 = vld [vmem:[%s334 + $0x330] sm:$0xff]
        %v799 = vld [vmem:[%s334 + $0x338] sm:$0xff]
        %v800 = vld [vmem:[%s334 + $0x340] sm:$0xff]
        %v801 = vld [vmem:[%s334 + $0x348] sm:$0xff]
        %v802 = vld [vmem:[%s334 + $0x350] sm:$0xff]
        %v803 = vld [vmem:[%s334 + $0x358] sm:$0xff]
        %v804 = vld [vmem:[%s334 + $0x360] sm:$0xff]
        %v805 = vld [vmem:[%s334 + $0x368] sm:$0xff]
        %v806 = vld [vmem:[%s334 + $0x370] sm:$0xff]
        %v807 = vld [vmem:[%s334 + $0x378] sm:$0xff]
        %v808 = vld [vmem:[%s334 + $0x380] sm:$0xf]
        %v809 = vld [vmem:[%s334 + $0x384] sm:$0xff]
        %v810 = vld [vmem:[%s334 + $0x38c] sm:$0xff]
        %v811 = vld [vmem:[%s334 + $0x394] sm:$0xff]
        %v812 = vld [vmem:[%s334 + $0x39c] sm:$0xff]
        %v813 = vld [vmem:[%s334 + $0x3a4] sm:$0xff]
        %v814 = vld [vmem:[%s334 + $0x3ac] sm:$0xff]
        %v815 = vld [vmem:[%s334 + $0x3b4] sm:$0xff]
        %v816 = vld [vmem:[%s334 + $0x3bc] sm:$0xff]
        %v817 = vld [vmem:[%s334 + $0x3c4] sm:$0xff]
        %v818 = vld [vmem:[%s334 + $0x3cc] sm:$0xff]
        %v819 = vld [vmem:[%s334 + $0x3d4] sm:$0xff]
        %v820 = vld [vmem:[%s334 + $0x3dc] sm:$0xff]
        %v821 = vld [vmem:[%s334 + $0x3e4] sm:$0xf]
        %v822 = vld [vmem:[%s334 + $0x3e8] sm:$0xff]
        %v823 = vld [vmem:[%s334 + $0x3f0] sm:$0xff]
        %v824 = vld [vmem:[%s334 + $0x3f8] sm:$0xff]
        %v825 = vld [vmem:[%s334 + $0x400] sm:$0xff]
        %v826 = vld [vmem:[%s334 + $0x408] sm:$0xff]
        %v827 = vld [vmem:[%s334 + $0x410] sm:$0xff]
        %v828 = vld [vmem:[%s334 + $0x418] sm:$0xff]
        %v829 = vld [vmem:[%s334 + $0x420] sm:$0xff]
        %v830 = vld [vmem:[%s334 + $0x428] sm:$0xff]
        %v831 = vld [vmem:[%s334 + $0x430] sm:$0xff]
        %v832 = vld [vmem:[%s334 + $0x438] sm:$0xff]
        %v833 = vld [vmem:[%s334 + $0x440] sm:$0xff]
        %v834 = vld [vmem:[%s334 + $0x448] sm:$0xf]
        %v835 = vld [vmem:[%s334 + $0x44c] sm:$0xff]
        %v836 = vld [vmem:[%s334 + $0x454] sm:$0xff]
        %v837 = vld [vmem:[%s334 + $0x45c] sm:$0xff]
        %v838 = vld [vmem:[%s334 + $0x464] sm:$0xff]
        %v839 = vld [vmem:[%s334 + $0x46c] sm:$0xff]
        %v840 = vld [vmem:[%s334 + $0x474] sm:$0xff]
        %v841 = vld [vmem:[%s334 + $0x47c] sm:$0xff]
        %v842 = vld [vmem:[%s334 + $0x484] sm:$0xff]
        %v843 = vld [vmem:[%s334 + $0x48c] sm:$0xff]
        %v844 = vld [vmem:[%s334 + $0x494] sm:$0xff]
        %v845 = vld [vmem:[%s334 + $0x49c] sm:$0xff]
        %v846 = vld [vmem:[%s334 + $0x4a4] sm:$0xff]
        %v847 = vld [vmem:[%s334 + $0x4ac] sm:$0xf]
        %v848 = vld [vmem:[%s334 + $0x4b0] sm:$0xff]
        %v849 = vld [vmem:[%s334 + $0x4b8] sm:$0xff]
        %v850 = vld [vmem:[%s334 + $0x4c0] sm:$0xff]
        %v851 = vld [vmem:[%s334 + $0x4c8] sm:$0xff]
        %v852 = vld [vmem:[%s334 + $0x4d0] sm:$0xff]
        %v853 = vld [vmem:[%s334 + $0x4d8] sm:$0xff]
        %v854 = vld [vmem:[%s334 + $0x4e0] sm:$0xff]
        %v855 = vld [vmem:[%s334 + $0x4e8] sm:$0xff]
        %v856 = vld [vmem:[%s334 + $0x4f0] sm:$0xff]
        %v857 = vld [vmem:[%s334 + $0x4f8] sm:$0xff]
        %v858 = vld [vmem:[%s334 + $0x500] sm:$0xff]
        %v859 = vld [vmem:[%s334 + $0x508] sm:$0xff]
        %v860 = vld [vmem:[%s334 + $0x510] sm:$0xf]
        %v861 = vld [vmem:[%s334 + $0x514] sm:$0xff]
        %v862 = vld [vmem:[%s334 + $0x51c] sm:$0xff]
        %v863 = vld [vmem:[%s334 + $0x524] sm:$0xff]
        %v864 = vld [vmem:[%s334 + $0x52c] sm:$0xff]
        %v865 = vld [vmem:[%s334 + $0x534] sm:$0xff]
        %v866 = vld [vmem:[%s334 + $0x53c] sm:$0xff]
        %v867 = vld [vmem:[%s334 + $0x544] sm:$0xff]
        %v868 = vld [vmem:[%s334 + $0x54c] sm:$0xff]
        %v869 = vld [vmem:[%s334 + $0x554] sm:$0xff]
        %v870 = vld [vmem:[%s334 + $0x55c] sm:$0xff]
        %v871 = vld [vmem:[%s334 + $0x564] sm:$0xff]
        %v872 = vld [vmem:[%s334 + $0x56c] sm:$0xff]
        %v873 = vld [vmem:[%s334 + $0x574] sm:$0xf]
        %v874 = vld [vmem:[%s334 + $0x578] sm:$0xff]
        %v875 = vld [vmem:[%s334 + $0x580] sm:$0xff]
        %v876 = vld [vmem:[%s334 + $0x588] sm:$0xff]
        %v877 = vld [vmem:[%s334 + $0x590] sm:$0xff]
        %v878 = vld [vmem:[%s334 + $0x598] sm:$0xff]
        %v879 = vld [vmem:[%s334 + $0x5a0] sm:$0xff]
        %v880 = vld [vmem:[%s334 + $0x5a8] sm:$0xff]
        %v881 = vld [vmem:[%s334 + $0x5b0] sm:$0xff]
        %v882 = vld [vmem:[%s334 + $0x5b8] sm:$0xff]
        %v883 = vld [vmem:[%s334 + $0x5c0] sm:$0xff]
        %v884 = vld [vmem:[%s334 + $0x5c8] sm:$0xff]
        %v885 = vld [vmem:[%s334 + $0x5d0] sm:$0xff]
        %v886 = vld [vmem:[%s334 + $0x5d8] sm:$0xf]
        %v887 = vld [vmem:[%s334 + $0x5dc] sm:$0xff]
        %v888 = vld [vmem:[%s334 + $0x5e4] sm:$0xff]
        %v889 = vld [vmem:[%s334 + $0x5ec] sm:$0xff]
        %v890 = vld [vmem:[%s334 + $0x5f4] sm:$0xff]
        %v891 = vld [vmem:[%s334 + $0x5fc] sm:$0xff]
        %v892 = vld [vmem:[%s334 + $0x604] sm:$0xff]
        %v893 = vld [vmem:[%s334 + $0x60c] sm:$0xff]
        %v894 = vld [vmem:[%s334 + $0x614] sm:$0xff]
        %v895 = vld [vmem:[%s334 + $0x61c] sm:$0xff]
        %v896 = vld [vmem:[%s334 + $0x624] sm:$0xff]
        %v897 = vld [vmem:[%s334 + $0x62c] sm:$0xff]
        %v898 = vld [vmem:[%s334 + $0x634] sm:$0xff]
        %v899 = vld [vmem:[%s334 + $0x63c] sm:$0xf]
        %v900 = vld [vmem:[%s334 + $0x640] sm:$0xff]
        %v901 = vld [vmem:[%s334 + $0x648] sm:$0xff]
        %v902 = vld [vmem:[%s334 + $0x650] sm:$0xff]
        %v903 = vld [vmem:[%s334 + $0x658] sm:$0xff]
        %v904 = vld [vmem:[%s334 + $0x660] sm:$0xff]
        %v905 = vld [vmem:[%s334 + $0x668] sm:$0xff]
        %v906 = vld [vmem:[%s334 + $0x670] sm:$0xff]
        %v907 = vld [vmem:[%s334 + $0x678] sm:$0xff]
        %v908 = vld [vmem:[%s334 + $0x680] sm:$0xff]
        %v909 = vld [vmem:[%s334 + $0x688] sm:$0xff]
        %v910 = vld [vmem:[%s334 + $0x690] sm:$0xff]
        %v911 = vld [vmem:[%s334 + $0x698] sm:$0xff]
        %v912 = vld [vmem:[%s334 + $0x6a0] sm:$0xf]
        %v913 = vld [vmem:[%s334 + $0x6a4] sm:$0xff]
        %v914 = vld [vmem:[%s334 + $0x6ac] sm:$0xff]
        %v915 = vld [vmem:[%s334 + $0x6b4] sm:$0xff]
        %v916 = vld [vmem:[%s334 + $0x6bc] sm:$0xff]
        %v917 = vld [vmem:[%s334 + $0x6c4] sm:$0xff]
        %v918 = vld [vmem:[%s334 + $0x6cc] sm:$0xff]
        %v919 = vld [vmem:[%s334 + $0x6d4] sm:$0xff]
        %v920 = vld [vmem:[%s334 + $0x6dc] sm:$0xff]
        %v921 = vld [vmem:[%s334 + $0x6e4] sm:$0xff]
        %v922 = vld [vmem:[%s334 + $0x6ec] sm:$0xff]
        %v923 = vld [vmem:[%s334 + $0x6f4] sm:$0xff]
        %v924 = vld [vmem:[%s334 + $0x6fc] sm:$0xff]
        %v925 = vld [vmem:[%s334 + $0x704] sm:$0xf]
        %v926 = vld [vmem:[%s334 + $0x708] sm:$0xff]
        %v927 = vld [vmem:[%s334 + $0x710] sm:$0xff]
        %v928 = vld [vmem:[%s334 + $0x718] sm:$0xff]
        %v929 = vld [vmem:[%s334 + $0x720] sm:$0xff]
        %v930 = vld [vmem:[%s334 + $0x728] sm:$0xff]
        %v931 = vld [vmem:[%s334 + $0x730] sm:$0xff]
        %v932 = vld [vmem:[%s334 + $0x738] sm:$0xff]
        %v933 = vld [vmem:[%s334 + $0x740] sm:$0xff]
        %v934 = vld [vmem:[%s334 + $0x748] sm:$0xff]
        %v935 = vld [vmem:[%s334 + $0x750] sm:$0xff]
        %v936 = vld [vmem:[%s334 + $0x758] sm:$0xff]
        %v937 = vld [vmem:[%s334 + $0x760] sm:$0xff]
        %v938 = vld [vmem:[%s334 + $0x768] sm:$0xf]
        %v939 = vld [vmem:[%s334 + $0x76c] sm:$0xff]
        %v940 = vld [vmem:[%s334 + $0x774] sm:$0xff]
        %v941 = vld [vmem:[%s334 + $0x77c] sm:$0xff]
        %v942 = vld [vmem:[%s334 + $0x784] sm:$0xff]
        %v943 = vld [vmem:[%s334 + $0x78c] sm:$0xff]
        %v944 = vld [vmem:[%s334 + $0x794] sm:$0xff]
        %v945 = vld [vmem:[%s334 + $0x79c] sm:$0xff]
        %v946 = vld [vmem:[%s334 + $0x7a4] sm:$0xff]
        %v947 = vld [vmem:[%s334 + $0x7ac] sm:$0xff]
        %v948 = vld [vmem:[%s334 + $0x7b4] sm:$0xff]
        %v949 = vld [vmem:[%s334 + $0x7bc] sm:$0xff]
        %v950 = vld [vmem:[%s334 + $0x7c4] sm:$0xff]
        %v951 = vld [vmem:[%s334 + $0x7cc] sm:$0xf]
        %v952 = vld [vmem:[%s334 + $0x7d0] sm:$0xff]
        %v953 = vld [vmem:[%s334 + $0x7d8] sm:$0xff]
        %v954 = vld [vmem:[%s334 + $0x7e0] sm:$0xff]
        %v955 = vld [vmem:[%s334 + $0x7e8] sm:$0xff]
        %v956 = vld [vmem:[%s334 + $0x7f0] sm:$0xff]
        %v957 = vld [vmem:[%s334 + $0x7f8] sm:$0xff]
        %v958 = vld [vmem:[%s334 + $0x800] sm:$0xff]
        %v959 = vld [vmem:[%s334 + $0x808] sm:$0xff]
        %v960 = vld [vmem:[%s334 + $0x810] sm:$0xff]
        %v961 = vld [vmem:[%s334 + $0x818] sm:$0xff]
        %v962 = vld [vmem:[%s334 + $0x820] sm:$0xff]
        %v963 = vld [vmem:[%s334 + $0x828] sm:$0xff]
        %v964 = vld [vmem:[%s334 + $0x830] sm:$0xf]
        %v965 = vld [vmem:[%s334 + $0x834] sm:$0xff]
        %v966 = vld [vmem:[%s334 + $0x83c] sm:$0xff]
        %v967 = vld [vmem:[%s334 + $0x844] sm:$0xff]
        %v968 = vld [vmem:[%s334 + $0x84c] sm:$0xff]
        %v969 = vld [vmem:[%s334 + $0x854] sm:$0xff]
        %v970 = vld [vmem:[%s334 + $0x85c] sm:$0xff]
        %v971 = vld [vmem:[%s334 + $0x864] sm:$0xff]
        %v972 = vld [vmem:[%s334 + $0x86c] sm:$0xff]
        %v973 = vld [vmem:[%s334 + $0x874] sm:$0xff]
        %v974 = vld [vmem:[%s334 + $0x87c] sm:$0xff]
        %v975 = vld [vmem:[%s334 + $0x884] sm:$0xff]
        %v976 = vld [vmem:[%s334 + $0x88c] sm:$0xff]
        %v977 = vld [vmem:[%s334 + $0x894] sm:$0xf]
        %v978 = vld [vmem:[%s334 + $0x898] sm:$0xff]
        %v979 = vld [vmem:[%s334 + $0x8a0] sm:$0xff]
        %v980 = vld [vmem:[%s334 + $0x8a8] sm:$0xff]
        %v981 = vld [vmem:[%s334 + $0x8b0] sm:$0xff]
        %v982 = vld [vmem:[%s334 + $0x8b8] sm:$0xff]
        %v983 = vld [vmem:[%s334 + $0x8c0] sm:$0xff]
        %v984 = vld [vmem:[%s334 + $0x8c8] sm:$0xff]
        %v985 = vld [vmem:[%s334 + $0x8d0] sm:$0xff]
        %v986 = vld [vmem:[%s334 + $0x8d8] sm:$0xff]
        %v987 = vld [vmem:[%s334 + $0x8e0] sm:$0xff]
        %v988 = vld [vmem:[%s334 + $0x8e8] sm:$0xff]
        %v989 = vld [vmem:[%s334 + $0x8f0] sm:$0xff]
        %v990 = vld [vmem:[%s334 + $0x8f8] sm:$0xf]
        %v991 = vld [vmem:[%s334 + $0x8fc] sm:$0xff]
        %v992 = vld [vmem:[%s334 + $0x904] sm:$0xff]
        %v993 = vld [vmem:[%s334 + $0x90c] sm:$0xff]
        %v994 = vld [vmem:[%s334 + $0x914] sm:$0xff]
        %v995 = vld [vmem:[%s334 + $0x91c] sm:$0xff]
        %v996 = vld [vmem:[%s334 + $0x924] sm:$0xff]
        %v997 = vld [vmem:[%s334 + $0x92c] sm:$0xff]
        %v998 = vld [vmem:[%s334 + $0x934] sm:$0xff]
        %v999 = vld [vmem:[%s334 + $0x93c] sm:$0xff]
        %v1000 = vld [vmem:[%s334 + $0x944] sm:$0xff]
        %v1001 = vld [vmem:[%s334 + $0x94c] sm:$0xff]
        %v1002 = vld [vmem:[%s334 + $0x954] sm:$0xff]
        %v1003 = vld [vmem:[%s334 + $0x95c] sm:$0xf]
        %v1004 = vld [vmem:[%s334 + $0x960] sm:$0xff]
        %v1005 = vld [vmem:[%s334 + $0x968] sm:$0xff]
        %v1006 = vld [vmem:[%s334 + $0x970] sm:$0xff]
        %v1007 = vld [vmem:[%s334 + $0x978] sm:$0xff]
        %v1008 = vld [vmem:[%s334 + $0x980] sm:$0xff]
        %v1009 = vld [vmem:[%s334 + $0x988] sm:$0xff]
        %v1010 = vld [vmem:[%s334 + $0x990] sm:$0xff]
        %v1011 = vld [vmem:[%s334 + $0x998] sm:$0xff]
        %v1012 = vld [vmem:[%s334 + $0x9a0] sm:$0xff]
        %v1013 = vld [vmem:[%s334 + $0x9a8] sm:$0xff]
        %v1014 = vld [vmem:[%s334 + $0x9b0] sm:$0xff]
        %v1015 = vld [vmem:[%s334 + $0x9b8] sm:$0xff]
        %v1016 = vld [vmem:[%s334 + $0x9c0] sm:$0xf]
        %v1017 = vld [vmem:[%s334 + $0x9c4] sm:$0xff]
        %v1018 = vld [vmem:[%s334 + $0x9cc] sm:$0xff]
        %v1019 = vld [vmem:[%s334 + $0x9d4] sm:$0xff]
        %v1020 = vld [vmem:[%s334 + $0x9dc] sm:$0xff]
        %v1021 = vld [vmem:[%s334 + $0x9e4] sm:$0xff]
        %v1022 = vld [vmem:[%s334 + $0x9ec] sm:$0xff]
        %v1023 = vld [vmem:[%s334 + $0x9f4] sm:$0xff]
        %v1024 = vld [vmem:[%s334 + $0x9fc] sm:$0xff]
        %v1025 = vld [vmem:[%s334 + $0xa04] sm:$0xff]
        %v1026 = vld [vmem:[%s334 + $0xa0c] sm:$0xff]
        %v1027 = vld [vmem:[%s334 + $0xa14] sm:$0xff]
        %v1028 = vld [vmem:[%s334 + $0xa1c] sm:$0xff]
        %v1029 = vld [vmem:[%s334 + $0xa24] sm:$0xf]
        %v1030 = vld [vmem:[%s334 + $0xa28] sm:$0xff]
        %v1031 = vld [vmem:[%s334 + $0xa30] sm:$0xff]
        %v1032 = vld [vmem:[%s334 + $0xa38] sm:$0xff]
        %v1033 = vld [vmem:[%s334 + $0xa40] sm:$0xff]
        %v1034 = vld [vmem:[%s334 + $0xa48] sm:$0xff]
        %v1035 = vld [vmem:[%s334 + $0xa50] sm:$0xff]
        %v1036 = vld [vmem:[%s334 + $0xa58] sm:$0xff]
        %v1037 = vld [vmem:[%s334 + $0xa60] sm:$0xff]
        %v1038 = vld [vmem:[%s334 + $0xa68] sm:$0xff]
        %v1039 = vld [vmem:[%s334 + $0xa70] sm:$0xff]
        %v1040 = vld [vmem:[%s334 + $0xa78] sm:$0xff]
        %v1041 = vld [vmem:[%s334 + $0xa80] sm:$0xff]
        %v1042 = vld [vmem:[%s334 + $0xa88] sm:$0xf]
        %v1043 = vld [vmem:[%s334 + $0xa8c] sm:$0xff]
        %v1044 = vld [vmem:[%s334 + $0xa94] sm:$0xff]
        %v1045 = vld [vmem:[%s334 + $0xa9c] sm:$0xff]
        %v1046 = vld [vmem:[%s334 + $0xaa4] sm:$0xff]
        %v1047 = vld [vmem:[%s334 + $0xaac] sm:$0xff]
        %v1048 = vld [vmem:[%s334 + $0xab4] sm:$0xff]
        %v1049 = vld [vmem:[%s334 + $0xabc] sm:$0xff]
        %v1050 = vld [vmem:[%s334 + $0xac4] sm:$0xff]
        %v1051 = vld [vmem:[%s334 + $0xacc] sm:$0xff]
        %v1052 = vld [vmem:[%s334 + $0xad4] sm:$0xff]
        %v1053 = vld [vmem:[%s334 + $0xadc] sm:$0xff]
        %v1054 = vld [vmem:[%s334 + $0xae4] sm:$0xff]
        %v1055 = vld [vmem:[%s334 + $0xaec] sm:$0xf]
        %v1056 = vld [vmem:[%s334 + $0xaf0] sm:$0xff]
        %v1057 = vld [vmem:[%s334 + $0xaf8] sm:$0xff]
        %v1058 = vld [vmem:[%s334 + $0xb00] sm:$0xff]
        %v1059 = vld [vmem:[%s334 + $0xb08] sm:$0xff]
        %v1060 = vld [vmem:[%s334 + $0xb10] sm:$0xff]
        %v1061 = vld [vmem:[%s334 + $0xb18] sm:$0xff]
        %v1062 = vld [vmem:[%s334 + $0xb20] sm:$0xff]
        %v1063 = vld [vmem:[%s334 + $0xb28] sm:$0xff]
        %v1064 = vld [vmem:[%s334 + $0xb30] sm:$0xff]
        %v1065 = vld [vmem:[%s334 + $0xb38] sm:$0xff]
        %v1066 = vld [vmem:[%s334 + $0xb40] sm:$0xff]
        %v1067 = vld [vmem:[%s334 + $0xb48] sm:$0xff]
        %v1068 = vld [vmem:[%s334 + $0xb50] sm:$0xf]
        %v1069 = vld [vmem:[%s334 + $0xb54] sm:$0xff]
        %v1070 = vld [vmem:[%s334 + $0xb5c] sm:$0xff]
        %v1071 = vld [vmem:[%s334 + $0xb64] sm:$0xff]
        %v1072 = vld [vmem:[%s334 + $0xb6c] sm:$0xff]
        %v1073 = vld [vmem:[%s334 + $0xb74] sm:$0xff]
        %v1074 = vld [vmem:[%s334 + $0xb7c] sm:$0xff]
        %v1075 = vld [vmem:[%s334 + $0xb84] sm:$0xff]
        %v1076 = vld [vmem:[%s334 + $0xb8c] sm:$0xff]
        %v1077 = vld [vmem:[%s334 + $0xb94] sm:$0xff]
        %v1078 = vld [vmem:[%s334 + $0xb9c] sm:$0xff]
        %v1079 = vld [vmem:[%s334 + $0xba4] sm:$0xff]
        %v1080 = vld [vmem:[%s334 + $0xbac] sm:$0xff]
        %v1081 = vld [vmem:[%s334 + $0xbb4] sm:$0xf]
        %v1082 = vld [vmem:[%s334 + $0xbb8] sm:$0xff]
        %v1083 = vld [vmem:[%s334 + $0xbc0] sm:$0xff]
        %v1084 = vld [vmem:[%s334 + $0xbc8] sm:$0xff]
        %v1085 = vld [vmem:[%s334 + $0xbd0] sm:$0xff]
        %v1086 = vld [vmem:[%s334 + $0xbd8] sm:$0xff]
        %v1087 = vld [vmem:[%s334 + $0xbe0] sm:$0xff]
        %v1088 = vld [vmem:[%s334 + $0xbe8] sm:$0xff]
        %v1089 = vld [vmem:[%s334 + $0xbf0] sm:$0xff]
        %v1090 = vld [vmem:[%s334 + $0xbf8] sm:$0xff]
        %v1091 = vld [vmem:[%s334 + $0xc00] sm:$0xff]
        %v1092 = vld [vmem:[%s334 + $0xc08] sm:$0xff]
        %v1093 = vld [vmem:[%s334 + $0xc10] sm:$0xff]
        %v1094 = vld [vmem:[%s334 + $0xc18] sm:$0xf]
        %v1095 = vld [vmem:[%s334 + $0xc1c] sm:$0xff]
        %v1096 = vld [vmem:[%s334 + $0xc24] sm:$0xff]
        %v1097 = vld [vmem:[%s334 + $0xc2c] sm:$0xff]
        %v1098 = vld [vmem:[%s334 + $0xc34] sm:$0xff]
        %v1099 = vld [vmem:[%s334 + $0xc3c] sm:$0xff]
        %v1100 = vld [vmem:[%s334 + $0xc44] sm:$0xff]
        %v1101 = vld [vmem:[%s334 + $0xc4c] sm:$0xff]
        %v1102 = vld [vmem:[%s334 + $0xc54] sm:$0xff]
        %v1103 = vld [vmem:[%s334 + $0xc5c] sm:$0xff]
        %v1104 = vld [vmem:[%s334 + $0xc64] sm:$0xff]
        %v1105 = vld [vmem:[%s334 + $0xc6c] sm:$0xff]
        %v1106 = vld [vmem:[%s334 + $0xc74] sm:$0xff]
        %v1107 = vld [vmem:[%s334 + $0xc7c] sm:$0xf]
        %v1108 = vld [vmem:[%s334 + $0xc80] sm:$0xff]
        %v1109 = vld [vmem:[%s334 + $0xc88] sm:$0xff]
        %v1110 = vld [vmem:[%s334 + $0xc90] sm:$0xff]
        %v1111 = vld [vmem:[%s334 + $0xc98] sm:$0xff]
        %v1112 = vld [vmem:[%s334 + $0xca0] sm:$0xff]
        %v1113 = vld [vmem:[%s334 + $0xca8] sm:$0xff]
        %v1114 = vld [vmem:[%s334 + $0xcb0] sm:$0xff]
        %v1115 = vld [vmem:[%s334 + $0xcb8] sm:$0xff]
        %v1116 = vld [vmem:[%s334 + $0xcc0] sm:$0xff]
        %v1117 = vld [vmem:[%s334 + $0xcc8] sm:$0xff]
        %v1118 = vld [vmem:[%s334 + $0xcd0] sm:$0xff]
        %v1119 = vld [vmem:[%s334 + $0xcd8] sm:$0xff]
        %v1120 = vld [vmem:[%s334 + $0xce0] sm:$0xf]
        %v1121 = vld [vmem:[%s334 + $0xce4] sm:$0xff]
        %v1122 = vld [vmem:[%s334 + $0xcec] sm:$0xff]
        %v1123 = vld [vmem:[%s334 + $0xcf4] sm:$0xff]
        %v1124 = vld [vmem:[%s334 + $0xcfc] sm:$0xff]
        %v1125 = vld [vmem:[%s334 + $0xd04] sm:$0xff]
        %v1126 = vld [vmem:[%s334 + $0xd0c] sm:$0xff]
        %v1127 = vld [vmem:[%s334 + $0xd14] sm:$0xff]
        %v1128 = vld [vmem:[%s334 + $0xd1c] sm:$0xff]
        %v1129 = vld [vmem:[%s334 + $0xd24] sm:$0xff]
        %v1130 = vld [vmem:[%s334 + $0xd2c] sm:$0xff]
        %v1131 = vld [vmem:[%s334 + $0xd34] sm:$0xff]
        %v1132 = vld [vmem:[%s334 + $0xd3c] sm:$0xff]
        %v1133 = vld [vmem:[%s334 + $0xd44] sm:$0xf]
        %v1134 = vld [vmem:[%s334 + $0xd48] sm:$0xff]
        %v1135 = vld [vmem:[%s334 + $0xd50] sm:$0xff]
        %v1136 = vld [vmem:[%s334 + $0xd58] sm:$0xff]
        %v1137 = vld [vmem:[%s334 + $0xd60] sm:$0xff]
        %v1138 = vld [vmem:[%s334 + $0xd68] sm:$0xff]
        %v1139 = vld [vmem:[%s334 + $0xd70] sm:$0xff]
        %v1140 = vld [vmem:[%s334 + $0xd78] sm:$0xff]
        %v1141 = vld [vmem:[%s334 + $0xd80] sm:$0xff]
        %v1142 = vld [vmem:[%s334 + $0xd88] sm:$0xff]
        %v1143 = vld [vmem:[%s334 + $0xd90] sm:$0xff]
        %v1144 = vld [vmem:[%s334 + $0xd98] sm:$0xff]
        %v1145 = vld [vmem:[%s334 + $0xda0] sm:$0xff]
        %v1146 = vld [vmem:[%s334 + $0xda8] sm:$0xf]
        %v1147 = vld [vmem:[%s334 + $0xdac] sm:$0xff]
        %v1148 = vld [vmem:[%s334 + $0xdb4] sm:$0xff]
        %v1149 = vld [vmem:[%s334 + $0xdbc] sm:$0xff]
        %v1150 = vld [vmem:[%s334 + $0xdc4] sm:$0xff]
        %v1151 = vld [vmem:[%s334 + $0xdcc] sm:$0xff]
        %v1152 = vld [vmem:[%s334 + $0xdd4] sm:$0xff]
        %v1153 = vld [vmem:[%s334 + $0xddc] sm:$0xff]
        %v1154 = vld [vmem:[%s334 + $0xde4] sm:$0xff]
        %v1155 = vld [vmem:[%s334 + $0xdec] sm:$0xff]
        %v1156 = vld [vmem:[%s334 + $0xdf4] sm:$0xff]
        %v1157 = vld [vmem:[%s334 + $0xdfc] sm:$0xff]
        %v1158 = vld [vmem:[%s334 + $0xe04] sm:$0xff]
        %v1159 = vld [vmem:[%s334 + $0xe0c] sm:$0xf]
        %v1160 = vld [vmem:[%s334 + $0xe10] sm:$0xff]
        %v1161 = vld [vmem:[%s334 + $0xe18] sm:$0xff]
        %v1162 = vld [vmem:[%s334 + $0xe20] sm:$0xff]
        %v1163 = vld [vmem:[%s334 + $0xe28] sm:$0xff]
        %v1164 = vld [vmem:[%s334 + $0xe30] sm:$0xff]
        %v1165 = vld [vmem:[%s334 + $0xe38] sm:$0xff]
        %v1166 = vld [vmem:[%s334 + $0xe40] sm:$0xff]
        %v1167 = vld [vmem:[%s334 + $0xe48] sm:$0xff]
        %v1168 = vld [vmem:[%s334 + $0xe50] sm:$0xff]
        %v1169 = vld [vmem:[%s334 + $0xe58] sm:$0xff]
        %v1170 = vld [vmem:[%s334 + $0xe60] sm:$0xff]
        %v1171 = vld [vmem:[%s334 + $0xe68] sm:$0xff]
        %v1172 = vld [vmem:[%s334 + $0xe70] sm:$0xf]
        %v1173 = vld [vmem:[%s334 + $0xe74] sm:$0xff]
        %v1174 = vld [vmem:[%s334 + $0xe7c] sm:$0xff]
        %v1175 = vld [vmem:[%s334 + $0xe84] sm:$0xff]
        %v1176 = vld [vmem:[%s334 + $0xe8c] sm:$0xff]
        %v1177 = vld [vmem:[%s334 + $0xe94] sm:$0xff]
        %v1178 = vld [vmem:[%s334 + $0xe9c] sm:$0xff]
        %v1179 = vld [vmem:[%s334 + $0xea4] sm:$0xff]
        %v1180 = vld [vmem:[%s334 + $0xeac] sm:$0xff]
        %v1181 = vld [vmem:[%s334 + $0xeb4] sm:$0xff]
        %v1182 = vld [vmem:[%s334 + $0xebc] sm:$0xff]
        %v1183 = vld [vmem:[%s334 + $0xec4] sm:$0xff]
        %v1184 = vld [vmem:[%s334 + $0xecc] sm:$0xff]
        %v1185 = vld [vmem:[%s334 + $0xed4] sm:$0xf]
        %v1186 = vld [vmem:[%s334 + $0xed8] sm:$0xff]
        %v1187 = vld [vmem:[%s334 + $0xee0] sm:$0xff]
        %v1188 = vld [vmem:[%s334 + $0xee8] sm:$0xff]
        %v1189 = vld [vmem:[%s334 + $0xef0] sm:$0xff]
        %v1190 = vld [vmem:[%s334 + $0xef8] sm:$0xff]
        %v1191 = vld [vmem:[%s334 + $0xf00] sm:$0xff]
        %v1192 = vld [vmem:[%s334 + $0xf08] sm:$0xff]
        %v1193 = vld [vmem:[%s334 + $0xf10] sm:$0xff]
        %v1194 = vld [vmem:[%s334 + $0xf18] sm:$0xff]
        %v1195 = vld [vmem:[%s334 + $0xf20] sm:$0xff]
        %v1196 = vld [vmem:[%s334 + $0xf28] sm:$0xff]
        %v1197 = vld [vmem:[%s334 + $0xf30] sm:$0xff]
        %v1198 = vld [vmem:[%s334 + $0xf38] sm:$0xf]
        %v1199 = vld [vmem:[%s334 + $0xf3c] sm:$0xff]
        %v1200 = vld [vmem:[%s334 + $0xf44] sm:$0xff]
        %v1201 = vld [vmem:[%s334 + $0xf4c] sm:$0xff]
        %v1202 = vld [vmem:[%s334 + $0xf54] sm:$0xff]
        %v1203 = vld [vmem:[%s334 + $0xf5c] sm:$0xff]
        %v1204 = vld [vmem:[%s334 + $0xf64] sm:$0xff]
        %v1205 = vld [vmem:[%s334 + $0xf6c] sm:$0xff]
        %v1206 = vld [vmem:[%s334 + $0xf74] sm:$0xff]
        %v1207 = vld [vmem:[%s334 + $0xf7c] sm:$0xff]
        %v1208 = vld [vmem:[%s334 + $0xf84] sm:$0xff]
        %v1209 = vld [vmem:[%s334 + $0xf8c] sm:$0xff]
        %v1210 = vld [vmem:[%s334 + $0xf94] sm:$0xff]
        %v1211 = vld [vmem:[%s334 + $0xf9c] sm:$0xf]
        %v1212 = vld [vmem:[%s334 + $0xfa0] sm:$0xff]
        %v1213 = vld [vmem:[%s334 + $0xfa8] sm:$0xff]
        %v1214 = vld [vmem:[%s334 + $0xfb0] sm:$0xff]
        %v1215 = vld [vmem:[%s334 + $0xfb8] sm:$0xff]
        %v1216 = vld [vmem:[%s334 + $0xfc0] sm:$0xff]
        %v1217 = vld [vmem:[%s334 + $0xfc8] sm:$0xff]
        %v1218 = vld [vmem:[%s334 + $0xfd0] sm:$0xff]
        %v1219 = vld [vmem:[%s334 + $0xfd8] sm:$0xff]
        %v1220 = vld [vmem:[%s334 + $0xfe0] sm:$0xff]
        %v1221 = vld [vmem:[%s334 + $0xfe8] sm:$0xff]
        %v1222 = vld [vmem:[%s334 + $0xff0] sm:$0xff]
        %v1223 = vld [vmem:[%s334 + $0xff8] sm:$0xff]
        %v1224 = vld [vmem:[%s334 + $0x1000] sm:$0xf]
        %v1225 = vld [vmem:[%s334 + $0x1004] sm:$0xff]
        %v1226 = vld [vmem:[%s334 + $0x100c] sm:$0xff]
        %v1227 = vld [vmem:[%s334 + $0x1014] sm:$0xff]
        %v1228 = vld [vmem:[%s334 + $0x101c] sm:$0xff]
        %v1229 = vld [vmem:[%s334 + $0x1024] sm:$0xff]
        %v1230 = vld [vmem:[%s334 + $0x102c] sm:$0xff]
        %v1231 = vld [vmem:[%s334 + $0x1034] sm:$0xff]
        %v1232 = vld [vmem:[%s334 + $0x103c] sm:$0xff]
        %v1233 = vld [vmem:[%s334 + $0x1044] sm:$0xff]
        %v1234 = vld [vmem:[%s334 + $0x104c] sm:$0xff]
        %v1235 = vld [vmem:[%s334 + $0x1054] sm:$0xff]
        %v1236 = vld [vmem:[%s334 + $0x105c] sm:$0xff]
        %v1237 = vld [vmem:[%s334 + $0x1064] sm:$0xf]
        %v1238 = vld [vmem:[%s334 + $0x1068] sm:$0xff]
        %v1239 = vld [vmem:[%s334 + $0x1070] sm:$0xff]
        %v1240 = vld [vmem:[%s334 + $0x1078] sm:$0xff]
        %v1241 = vld [vmem:[%s334 + $0x1080] sm:$0xff]
        %v1242 = vld [vmem:[%s334 + $0x1088] sm:$0xff]
        %v1243 = vld [vmem:[%s334 + $0x1090] sm:$0xff]
        %v1244 = vld [vmem:[%s334 + $0x1098] sm:$0xff]
        %v1245 = vld [vmem:[%s334 + $0x10a0] sm:$0xff]
        %v1246 = vld [vmem:[%s334 + $0x10a8] sm:$0xff]
        %v1247 = vld [vmem:[%s334 + $0x10b0] sm:$0xff]
        %v1248 = vld [vmem:[%s334 + $0x10b8] sm:$0xff]
        %v1249 = vld [vmem:[%s334 + $0x10c0] sm:$0xff]
        %v1250 = vld [vmem:[%s334 + $0x10c8] sm:$0xf]
        %v1251 = vld [vmem:[%s334 + $0x10cc] sm:$0xff]
        %v1252 = vld [vmem:[%s334 + $0x10d4] sm:$0xff]
        %v1253 = vld [vmem:[%s334 + $0x10dc] sm:$0xff]
        %v1254 = vld [vmem:[%s334 + $0x10e4] sm:$0xff]
        %v1255 = vld [vmem:[%s334 + $0x10ec] sm:$0xff]
        %v1256 = vld [vmem:[%s334 + $0x10f4] sm:$0xff]
        %v1257 = vld [vmem:[%s334 + $0x10fc] sm:$0xff]
        %v1258 = vld [vmem:[%s334 + $0x1104] sm:$0xff]
        %v1259 = vld [vmem:[%s334 + $0x110c] sm:$0xff]
        %v1260 = vld [vmem:[%s334 + $0x1114] sm:$0xff]
        %v1261 = vld [vmem:[%s334 + $0x111c] sm:$0xff]
        %v1262 = vld [vmem:[%s334 + $0x1124] sm:$0xff]
        %v1263 = vld [vmem:[%s334 + $0x112c] sm:$0xf]
        %v1264 = vld [vmem:[%s334 + $0x1130] sm:$0xff]
        %v1265 = vld [vmem:[%s334 + $0x1138] sm:$0xff]
        %v1266 = vld [vmem:[%s334 + $0x1140] sm:$0xff]
        %v1267 = vld [vmem:[%s334 + $0x1148] sm:$0xff]
        %v1268 = vld [vmem:[%s334 + $0x1150] sm:$0xff]
        %v1269 = vld [vmem:[%s334 + $0x1158] sm:$0xff]
        %v1270 = vld [vmem:[%s334 + $0x1160] sm:$0xff]
        %v1271 = vld [vmem:[%s334 + $0x1168] sm:$0xff]
        %v1272 = vld [vmem:[%s334 + $0x1170] sm:$0xff]
        %v1273 = vld [vmem:[%s334 + $0x1178] sm:$0xff]
        %v1274 = vld [vmem:[%s334 + $0x1180] sm:$0xff]
        %v1275 = vld [vmem:[%s334 + $0x1188] sm:$0xff]
        %v1276 = vld [vmem:[%s334 + $0x1190] sm:$0xf]
        %v1277 = vld [vmem:[%s334 + $0x1194] sm:$0xff]
        %v1278 = vld [vmem:[%s334 + $0x119c] sm:$0xff]
        %v1279 = vld [vmem:[%s334 + $0x11a4] sm:$0xff]
        %v1280 = vld [vmem:[%s334 + $0x11ac] sm:$0xff]
        %v1281 = vld [vmem:[%s334 + $0x11b4] sm:$0xff]
        %v1282 = vld [vmem:[%s334 + $0x11bc] sm:$0xff]
        %v1283 = vld [vmem:[%s334 + $0x11c4] sm:$0xff]
        %v1284 = vld [vmem:[%s334 + $0x11cc] sm:$0xff]
        %v1285 = vld [vmem:[%s334 + $0x11d4] sm:$0xff]
        %v1286 = vld [vmem:[%s334 + $0x11dc] sm:$0xff]
        %v1287 = vld [vmem:[%s334 + $0x11e4] sm:$0xff]
        %v1288 = vld [vmem:[%s334 + $0x11ec] sm:$0xff]
        %v1289 = vld [vmem:[%s334 + $0x11f4] sm:$0xf]
        %v1290 = vld [vmem:[%s334 + $0x11f8] sm:$0xff]
        %v1291 = vld [vmem:[%s334 + $0x1200] sm:$0xff]
        %v1292 = vld [vmem:[%s334 + $0x1208] sm:$0xff]
        %v1293 = vld [vmem:[%s334 + $0x1210] sm:$0xff]
        %v1294 = vld [vmem:[%s334 + $0x1218] sm:$0xff]
        %v1295 = vld [vmem:[%s334 + $0x1220] sm:$0xff]
        %v1296 = vld [vmem:[%s334 + $0x1228] sm:$0xff]
        %v1297 = vld [vmem:[%s334 + $0x1230] sm:$0xff]
        %v1298 = vld [vmem:[%s334 + $0x1238] sm:$0xff]
        %v1299 = vld [vmem:[%s334 + $0x1240] sm:$0xff]
        %v1300 = vld [vmem:[%s334 + $0x1248] sm:$0xff]
        %v1301 = vld [vmem:[%s334 + $0x1250] sm:$0xff]
        %v1302 = vld [vmem:[%s334 + $0x1258] sm:$0xf]
        %v1303 = vld [vmem:[%s334 + $0x125c] sm:$0xff]
        %v1304 = vld [vmem:[%s334 + $0x1264] sm:$0xff]
        %v1305 = vld [vmem:[%s334 + $0x126c] sm:$0xff]
        %v1306 = vld [vmem:[%s334 + $0x1274] sm:$0xff]
        %v1307 = vld [vmem:[%s334 + $0x127c] sm:$0xff]
        %v1308 = vld [vmem:[%s334 + $0x1284] sm:$0xff]
        %v1309 = vld [vmem:[%s334 + $0x128c] sm:$0xff]
        %v1310 = vld [vmem:[%s334 + $0x1294] sm:$0xff]
        %v1311 = vld [vmem:[%s334 + $0x129c] sm:$0xff]
        %v1312 = vld [vmem:[%s334 + $0x12a4] sm:$0xff]
        %v1313 = vld [vmem:[%s334 + $0x12ac] sm:$0xff]
        %v1314 = vld [vmem:[%s334 + $0x12b4] sm:$0xff]
        %v1315 = vld [vmem:[%s334 + $0x12bc] sm:$0xf]
        %v1316 = vld [vmem:[%s334 + $0x12c0] sm:$0xff]
        %v1317 = vld [vmem:[%s334 + $0x12c8] sm:$0xff]
        %v1318 = vld [vmem:[%s334 + $0x12d0] sm:$0xff]
        %v1319 = vld [vmem:[%s334 + $0x12d8] sm:$0xff]
        %v1320 = vld [vmem:[%s334 + $0x12e0] sm:$0xff]
        %v1321 = vld [vmem:[%s334 + $0x12e8] sm:$0xff]
        %v1322 = vld [vmem:[%s334 + $0x12f0] sm:$0xff]
        %v1323 = vld [vmem:[%s334 + $0x12f8] sm:$0xff]
        %v1324 = vld [vmem:[%s334 + $0x1300] sm:$0xff]
        %v1325 = vld [vmem:[%s334 + $0x1308] sm:$0xff]
        %v1326 = vld [vmem:[%s334 + $0x1310] sm:$0xff]
        %v1327 = vld [vmem:[%s334 + $0x1318] sm:$0xff]
        %v1328 = vld [vmem:[%s334 + $0x1320] sm:$0xf]
        %v1329 = vld [vmem:[%s334 + $0x1324] sm:$0xff]
        %v1330 = vld [vmem:[%s334 + $0x132c] sm:$0xff]
        %v1331 = vld [vmem:[%s334 + $0x1334] sm:$0xff]
        %v1332 = vld [vmem:[%s334 + $0x133c] sm:$0xff]
        %v1333 = vld [vmem:[%s334 + $0x1344] sm:$0xff]
        %v1334 = vld [vmem:[%s334 + $0x134c] sm:$0xff]
        %v1335 = vld [vmem:[%s334 + $0x1354] sm:$0xff]
        %v1336 = vld [vmem:[%s334 + $0x135c] sm:$0xff]
        %v1337 = vld [vmem:[%s334 + $0x1364] sm:$0xff]
        %v1338 = vld [vmem:[%s334 + $0x136c] sm:$0xff]
        %v1339 = vld [vmem:[%s334 + $0x1374] sm:$0xff]
        %v1340 = vld [vmem:[%s334 + $0x137c] sm:$0xff]
        %v1341 = vld [vmem:[%s334 + $0x1384] sm:$0xf]
        %v1342 = vld [vmem:[%s343] sm:$0xff]
        %v1343 = vld [vmem:[%s343 + $0x8] sm:$0xff]
        %v1344 = vld [vmem:[%s343 + $0x10] sm:$0xff]
        %v1345 = vld [vmem:[%s343 + $0x18] sm:$0x1]
        %v1350 = vlaneseq
        %v1351 = vshrl.u32 %v1350, 7
        %v1352 = vsub.s32 0, %v1351
        %v1353 = vrot.slane %v1342, %v1352
        %v1354 = vlaneseq
        %v1355 = vshrl.u32 %v1354, 7
        %v1356 = vsub.s32 1, %v1355
        %v1357 = vrot.slane %v1342, %v1356
        %v1358 = vlaneseq
        %v1359 = vshrl.u32 %v1358, 7
        %v1360 = vsub.s32 2, %v1359
        %v1361 = vrot.slane %v1342, %v1360
        %v1362 = vlaneseq
        %v1363 = vshrl.u32 %v1362, 7
        %v1364 = vsub.s32 3, %v1363
        %v1365 = vrot.slane %v1342, %v1364
        %v1366 = vlaneseq
        %v1367 = vshrl.u32 %v1366, 7
        %v1368 = vsub.s32 4, %v1367
        %v1369 = vrot.slane %v1342, %v1368
        %v1370 = vlaneseq
        %v1371 = vshrl.u32 %v1370, 7
        %v1372 = vsub.s32 5, %v1371
        %v1373 = vrot.slane %v1342, %v1372
        %v1374 = vlaneseq
        %v1375 = vshrl.u32 %v1374, 7
        %v1376 = vsub.s32 6, %v1375
        %v1377 = vrot.slane %v1342, %v1376
        %v1378 = vlaneseq
        %v1379 = vshrl.u32 %v1378, 7
        %v1380 = vsub.s32 7, %v1379
        %v1381 = vrot.slane %v1342, %v1380
        %v1382 = vlaneseq
        %v1383 = vshrl.u32 %v1382, 7
        %v1384 = vsub.s32 0, %v1383
        %v1385 = vrot.slane %v1343, %v1384
        %v1386 = vlaneseq
        %v1387 = vshrl.u32 %v1386, 7
        %v1388 = vsub.s32 1, %v1387
        %v1389 = vrot.slane %v1343, %v1388
        %v1390 = vlaneseq
        %v1391 = vshrl.u32 %v1390, 7
        %v1392 = vsub.s32 2, %v1391
        %v1393 = vrot.slane %v1343, %v1392
        %v1394 = vlaneseq
        %v1395 = vshrl.u32 %v1394, 7
        %v1396 = vsub.s32 3, %v1395
        %v1397 = vrot.slane %v1343, %v1396
        %v1398 = vlaneseq
        %v1399 = vshrl.u32 %v1398, 7
        %v1400 = vsub.s32 4, %v1399
        %v1401 = vrot.slane %v1343, %v1400
        %v1402 = vlaneseq
        %v1403 = vshrl.u32 %v1402, 7
        %v1404 = vsub.s32 5, %v1403
        %v1405 = vrot.slane %v1343, %v1404
        %v1406 = vlaneseq
        %v1407 = vshrl.u32 %v1406, 7
        %v1408 = vsub.s32 6, %v1407
        %v1409 = vrot.slane %v1343, %v1408
        %v1410 = vlaneseq
        %v1411 = vshrl.u32 %v1410, 7
        %v1412 = vsub.s32 7, %v1411
        %v1413 = vrot.slane %v1343, %v1412
        %v1414 = vlaneseq
        %v1415 = vshrl.u32 %v1414, 7
        %v1416 = vsub.s32 0, %v1415
        %v1417 = vrot.slane %v1344, %v1416
        %v1418 = vlaneseq
        %v1419 = vshrl.u32 %v1418, 7
        %v1420 = vsub.s32 1, %v1419
        %v1421 = vrot.slane %v1344, %v1420
        %v1422 = vlaneseq
        %v1423 = vshrl.u32 %v1422, 7
        %v1424 = vsub.s32 2, %v1423
        %v1425 = vrot.slane %v1344, %v1424
        %v1426 = vlaneseq
        %v1427 = vshrl.u32 %v1426, 7
        %v1428 = vsub.s32 3, %v1427
        %v1429 = vrot.slane %v1344, %v1428
        %v1430 = vlaneseq
        %v1431 = vshrl.u32 %v1430, 7
        %v1432 = vsub.s32 4, %v1431
        %v1433 = vrot.slane %v1344, %v1432
        %v1434 = vlaneseq
        %v1435 = vshrl.u32 %v1434, 7
        %v1436 = vsub.s32 5, %v1435
        %v1437 = vrot.slane %v1344, %v1436
        %v1438 = vlaneseq
        %v1439 = vshrl.u32 %v1438, 7
        %v1440 = vsub.s32 6, %v1439
        %v1441 = vrot.slane %v1344, %v1440
        %v1442 = vlaneseq
        %v1443 = vshrl.u32 %v1442, 7
        %v1444 = vsub.s32 7, %v1443
        %v1445 = vrot.slane %v1344, %v1444
        %v1446 = vlaneseq
        %v1447 = vshrl.u32 %v1446, 7
        %v1448 = vsub.s32 0, %v1447
        %v1449 = vrot.slane %v1345, %v1448
        %v2125 = vunpack.c.l.b16 %v692
        %v2126 = vunpack.c.h.b16 %v692
        %v2127 = vunpack.c.l.b16 %v693
        %v2128 = vunpack.c.h.b16 %v693
        %v2129 = vunpack.c.l.b16 %v694
        %v2130 = vunpack.c.h.b16 %v694
        %v2131 = vunpack.c.l.b16 %v695
        %v2132 = vunpack.c.h.b16 %v695
        %v2133 = vunpack.c.l.b16 %v696
        %v2134 = vunpack.c.h.b16 %v696
        %v2135 = vunpack.c.l.b16 %v697
        %v2136 = vunpack.c.h.b16 %v697
        %v2137 = vunpack.c.l.b16 %v698
        %v2138 = vunpack.c.h.b16 %v698
        %v2139 = vunpack.c.l.b16 %v699
        %v2140 = vunpack.c.h.b16 %v699
        %v2141 = vunpack.c.l.b16 %v700
        %v2142 = vunpack.c.h.b16 %v700
        %v2143 = vunpack.c.l.b16 %v701
        %v2144 = vunpack.c.h.b16 %v701
        %v2145 = vunpack.c.l.b16 %v702
        %v2146 = vunpack.c.h.b16 %v702
        %v2147 = vunpack.c.l.b16 %v703
        %v2148 = vunpack.c.h.b16 %v703
        %v2149 = vunpack.c.l.b16 %v704
        %v2150 = vunpack.c.l.b16 %v705
        %v2151 = vunpack.c.h.b16 %v705
        %v2152 = vunpack.c.l.b16 %v706
        %v2153 = vunpack.c.h.b16 %v706
        %v2154 = vunpack.c.l.b16 %v707
        %v2155 = vunpack.c.h.b16 %v707
        %v2156 = vunpack.c.l.b16 %v708
        %v2157 = vunpack.c.h.b16 %v708
        %v2158 = vunpack.c.l.b16 %v709
        %v2159 = vunpack.c.h.b16 %v709
        %v2160 = vunpack.c.l.b16 %v710
        %v2161 = vunpack.c.h.b16 %v710
        %v2162 = vunpack.c.l.b16 %v711
        %v2163 = vunpack.c.h.b16 %v711
        %v2164 = vunpack.c.l.b16 %v712
        %v2165 = vunpack.c.h.b16 %v712
        %v2166 = vunpack.c.l.b16 %v713
        %v2167 = vunpack.c.h.b16 %v713
        %v2168 = vunpack.c.l.b16 %v714
        %v2169 = vunpack.c.h.b16 %v714
        %v2170 = vunpack.c.l.b16 %v715
        %v2171 = vunpack.c.h.b16 %v715
        %v2172 = vunpack.c.l.b16 %v716
        %v2173 = vunpack.c.h.b16 %v716
        %v2174 = vunpack.c.l.b16 %v717
        %v2175 = vunpack.c.l.b16 %v718
        %v2176 = vunpack.c.h.b16 %v718
        %v2177 = vunpack.c.l.b16 %v719
        %v2178 = vunpack.c.h.b16 %v719
        %v2179 = vunpack.c.l.b16 %v720
        %v2180 = vunpack.c.h.b16 %v720
        %v2181 = vunpack.c.l.b16 %v721
        %v2182 = vunpack.c.h.b16 %v721
        %v2183 = vunpack.c.l.b16 %v722
        %v2184 = vunpack.c.h.b16 %v722
        %v2185 = vunpack.c.l.b16 %v723
        %v2186 = vunpack.c.h.b16 %v723
        %v2187 = vunpack.c.l.b16 %v724
        %v2188 = vunpack.c.h.b16 %v724
        %v2189 = vunpack.c.l.b16 %v725
        %v2190 = vunpack.c.h.b16 %v725
        %v2191 = vunpack.c.l.b16 %v726
        %v2192 = vunpack.c.h.b16 %v726
        %v2193 = vunpack.c.l.b16 %v727
        %v2194 = vunpack.c.h.b16 %v727
        %v2195 = vunpack.c.l.b16 %v728
        %v2196 = vunpack.c.h.b16 %v728
        %v2197 = vunpack.c.l.b16 %v729
        %v2198 = vunpack.c.h.b16 %v729
        %v2199 = vunpack.c.l.b16 %v730
        %v2200 = vunpack.c.l.b16 %v731
        %v2201 = vunpack.c.h.b16 %v731
        %v2202 = vunpack.c.l.b16 %v732
        %v2203 = vunpack.c.h.b16 %v732
        %v2204 = vunpack.c.l.b16 %v733
        %v2205 = vunpack.c.h.b16 %v733
        %v2206 = vunpack.c.l.b16 %v734
        %v2207 = vunpack.c.h.b16 %v734
        %v2208 = vunpack.c.l.b16 %v735
        %v2209 = vunpack.c.h.b16 %v735
        %v2210 = vunpack.c.l.b16 %v736
        %v2211 = vunpack.c.h.b16 %v736
        %v2212 = vunpack.c.l.b16 %v737
        %v2213 = vunpack.c.h.b16 %v737
        %v2214 = vunpack.c.l.b16 %v738
        %v2215 = vunpack.c.h.b16 %v738
        %v2216 = vunpack.c.l.b16 %v739
        %v2217 = vunpack.c.h.b16 %v739
        %v2218 = vunpack.c.l.b16 %v740
        %v2219 = vunpack.c.h.b16 %v740
        %v2220 = vunpack.c.l.b16 %v741
        %v2221 = vunpack.c.h.b16 %v741
        %v2222 = vunpack.c.l.b16 %v742
        %v2223 = vunpack.c.h.b16 %v742
        %v2224 = vunpack.c.l.b16 %v743
        %v2225 = vunpack.c.l.b16 %v744
        %v2226 = vunpack.c.h.b16 %v744
        %v2227 = vunpack.c.l.b16 %v745
        %v2228 = vunpack.c.h.b16 %v745
        %v2229 = vunpack.c.l.b16 %v746
        %v2230 = vunpack.c.h.b16 %v746
        %v2231 = vunpack.c.l.b16 %v747
        %v2232 = vunpack.c.h.b16 %v747
        %v2233 = vunpack.c.l.b16 %v748
        %v2234 = vunpack.c.h.b16 %v748
        %v2235 = vunpack.c.l.b16 %v749
        %v2236 = vunpack.c.h.b16 %v749
        %v2237 = vunpack.c.l.b16 %v750
        %v2238 = vunpack.c.h.b16 %v750
        %v2239 = vunpack.c.l.b16 %v751
        %v2240 = vunpack.c.h.b16 %v751
        %v2241 = vunpack.c.l.b16 %v752
        %v2242 = vunpack.c.h.b16 %v752
        %v2243 = vunpack.c.l.b16 %v753
        %v2244 = vunpack.c.h.b16 %v753
        %v2245 = vunpack.c.l.b16 %v754
        %v2246 = vunpack.c.h.b16 %v754
        %v2247 = vunpack.c.l.b16 %v755
        %v2248 = vunpack.c.h.b16 %v755
        %v2249 = vunpack.c.l.b16 %v756
        %v2250 = vunpack.c.l.b16 %v757
        %v2251 = vunpack.c.h.b16 %v757
        %v2252 = vunpack.c.l.b16 %v758
        %v2253 = vunpack.c.h.b16 %v758
        %v2254 = vunpack.c.l.b16 %v759
        %v2255 = vunpack.c.h.b16 %v759
        %v2256 = vunpack.c.l.b16 %v760
        %v2257 = vunpack.c.h.b16 %v760
        %v2258 = vunpack.c.l.b16 %v761
        %v2259 = vunpack.c.h.b16 %v761
        %v2260 = vunpack.c.l.b16 %v762
        %v2261 = vunpack.c.h.b16 %v762
        %v2262 = vunpack.c.l.b16 %v763
        %v2263 = vunpack.c.h.b16 %v763
        %v2264 = vunpack.c.l.b16 %v764
        %v2265 = vunpack.c.h.b16 %v764
        %v2266 = vunpack.c.l.b16 %v765
        %v2267 = vunpack.c.h.b16 %v765
        %v2268 = vunpack.c.l.b16 %v766
        %v2269 = vunpack.c.h.b16 %v766
        %v2270 = vunpack.c.l.b16 %v767
        %v2271 = vunpack.c.h.b16 %v767
        %v2272 = vunpack.c.l.b16 %v768
        %v2273 = vunpack.c.h.b16 %v768
        %v2274 = vunpack.c.l.b16 %v769
        %v2275 = vunpack.c.l.b16 %v770
        %v2276 = vunpack.c.h.b16 %v770
        %v2277 = vunpack.c.l.b16 %v771
        %v2278 = vunpack.c.h.b16 %v771
        %v2279 = vunpack.c.l.b16 %v772
        %v2280 = vunpack.c.h.b16 %v772
        %v2281 = vunpack.c.l.b16 %v773
        %v2282 = vunpack.c.h.b16 %v773
        %v2283 = vunpack.c.l.b16 %v774
        %v2284 = vunpack.c.h.b16 %v774
        %v2285 = vunpack.c.l.b16 %v775
        %v2286 = vunpack.c.h.b16 %v775
        %v2287 = vunpack.c.l.b16 %v776
        %v2288 = vunpack.c.h.b16 %v776
        %v2289 = vunpack.c.l.b16 %v777
        %v2290 = vunpack.c.h.b16 %v777
        %v2291 = vunpack.c.l.b16 %v778
        %v2292 = vunpack.c.h.b16 %v778
        %v2293 = vunpack.c.l.b16 %v779
        %v2294 = vunpack.c.h.b16 %v779
        %v2295 = vunpack.c.l.b16 %v780
        %v2296 = vunpack.c.h.b16 %v780
        %v2297 = vunpack.c.l.b16 %v781
        %v2298 = vunpack.c.h.b16 %v781
        %v2299 = vunpack.c.l.b16 %v782
        %v2300 = vunpack.c.l.b16 %v783
        %v2301 = vunpack.c.h.b16 %v783
        %v2302 = vunpack.c.l.b16 %v784
        %v2303 = vunpack.c.h.b16 %v784
        %v2304 = vunpack.c.l.b16 %v785
        %v2305 = vunpack.c.h.b16 %v785
        %v2306 = vunpack.c.l.b16 %v786
        %v2307 = vunpack.c.h.b16 %v786
        %v2308 = vunpack.c.l.b16 %v787
        %v2309 = vunpack.c.h.b16 %v787
        %v2310 = vunpack.c.l.b16 %v788
        %v2311 = vunpack.c.h.b16 %v788
        %v2312 = vunpack.c.l.b16 %v789
        %v2313 = vunpack.c.h.b16 %v789
        %v2314 = vunpack.c.l.b16 %v790
        %v2315 = vunpack.c.h.b16 %v790
        %v2316 = vunpack.c.l.b16 %v791
        %v2317 = vunpack.c.h.b16 %v791
        %v2318 = vunpack.c.l.b16 %v792
        %v2319 = vunpack.c.h.b16 %v792
        %v2320 = vunpack.c.l.b16 %v793
        %v2321 = vunpack.c.h.b16 %v793
        %v2322 = vunpack.c.l.b16 %v794
        %v2323 = vunpack.c.h.b16 %v794
        %v2324 = vunpack.c.l.b16 %v795
        %v2325 = vunpack.c.l.b16 %v796
        %v2326 = vunpack.c.h.b16 %v796
        %v2327 = vunpack.c.l.b16 %v797
        %v2328 = vunpack.c.h.b16 %v797
        %v2329 = vunpack.c.l.b16 %v798
        %v2330 = vunpack.c.h.b16 %v798
        %v2331 = vunpack.c.l.b16 %v799
        %v2332 = vunpack.c.h.b16 %v799
        %v2333 = vunpack.c.l.b16 %v800
        %v2334 = vunpack.c.h.b16 %v800
        %v2335 = vunpack.c.l.b16 %v801
        %v2336 = vunpack.c.h.b16 %v801
        %v2337 = vunpack.c.l.b16 %v802
        %v2338 = vunpack.c.h.b16 %v802
        %v2339 = vunpack.c.l.b16 %v803
        %v2340 = vunpack.c.h.b16 %v803
        %v2341 = vunpack.c.l.b16 %v804
        %v2342 = vunpack.c.h.b16 %v804
        %v2343 = vunpack.c.l.b16 %v805
        %v2344 = vunpack.c.h.b16 %v805
        %v2345 = vunpack.c.l.b16 %v806
        %v2346 = vunpack.c.h.b16 %v806
        %v2347 = vunpack.c.l.b16 %v807
        %v2348 = vunpack.c.h.b16 %v807
        %v2349 = vunpack.c.l.b16 %v808
        %v2350 = vunpack.c.l.b16 %v809
        %v2351 = vunpack.c.h.b16 %v809
        %v2352 = vunpack.c.l.b16 %v810
        %v2353 = vunpack.c.h.b16 %v810
        %v2354 = vunpack.c.l.b16 %v811
        %v2355 = vunpack.c.h.b16 %v811
        %v2356 = vunpack.c.l.b16 %v812
        %v2357 = vunpack.c.h.b16 %v812
        %v2358 = vunpack.c.l.b16 %v813
        %v2359 = vunpack.c.h.b16 %v813
        %v2360 = vunpack.c.l.b16 %v814
        %v2361 = vunpack.c.h.b16 %v814
        %v2362 = vunpack.c.l.b16 %v815
        %v2363 = vunpack.c.h.b16 %v815
        %v2364 = vunpack.c.l.b16 %v816
        %v2365 = vunpack.c.h.b16 %v816
        %v2366 = vunpack.c.l.b16 %v817
        %v2367 = vunpack.c.h.b16 %v817
        %v2368 = vunpack.c.l.b16 %v818
        %v2369 = vunpack.c.h.b16 %v818
        %v2370 = vunpack.c.l.b16 %v819
        %v2371 = vunpack.c.h.b16 %v819
        %v2372 = vunpack.c.l.b16 %v820
        %v2373 = vunpack.c.h.b16 %v820
        %v2374 = vunpack.c.l.b16 %v821
        %v2375 = vunpack.c.l.b16 %v822
        %v2376 = vunpack.c.h.b16 %v822
        %v2377 = vunpack.c.l.b16 %v823
        %v2378 = vunpack.c.h.b16 %v823
        %v2379 = vunpack.c.l.b16 %v824
        %v2380 = vunpack.c.h.b16 %v824
        %v2381 = vunpack.c.l.b16 %v825
        %v2382 = vunpack.c.h.b16 %v825
        %v2383 = vunpack.c.l.b16 %v826
        %v2384 = vunpack.c.h.b16 %v826
        %v2385 = vunpack.c.l.b16 %v827
        %v2386 = vunpack.c.h.b16 %v827
        %v2387 = vunpack.c.l.b16 %v828
        %v2388 = vunpack.c.h.b16 %v828
        %v2389 = vunpack.c.l.b16 %v829
        %v2390 = vunpack.c.h.b16 %v829
        %v2391 = vunpack.c.l.b16 %v830
        %v2392 = vunpack.c.h.b16 %v830
        %v2393 = vunpack.c.l.b16 %v831
        %v2394 = vunpack.c.h.b16 %v831
        %v2395 = vunpack.c.l.b16 %v832
        %v2396 = vunpack.c.h.b16 %v832
        %v2397 = vunpack.c.l.b16 %v833
        %v2398 = vunpack.c.h.b16 %v833
        %v2399 = vunpack.c.l.b16 %v834
        %v2400 = vunpack.c.l.b16 %v835
        %v2401 = vunpack.c.h.b16 %v835
        %v2402 = vunpack.c.l.b16 %v836
        %v2403 = vunpack.c.h.b16 %v836
        %v2404 = vunpack.c.l.b16 %v837
        %v2405 = vunpack.c.h.b16 %v837
        %v2406 = vunpack.c.l.b16 %v838
        %v2407 = vunpack.c.h.b16 %v838
        %v2408 = vunpack.c.l.b16 %v839
        %v2409 = vunpack.c.h.b16 %v839
        %v2410 = vunpack.c.l.b16 %v840
        %v2411 = vunpack.c.h.b16 %v840
        %v2412 = vunpack.c.l.b16 %v841
        %v2413 = vunpack.c.h.b16 %v841
        %v2414 = vunpack.c.l.b16 %v842
        %v2415 = vunpack.c.h.b16 %v842
        %v2416 = vunpack.c.l.b16 %v843
        %v2417 = vunpack.c.h.b16 %v843
        %v2418 = vunpack.c.l.b16 %v844
        %v2419 = vunpack.c.h.b16 %v844
        %v2420 = vunpack.c.l.b16 %v845
        %v2421 = vunpack.c.h.b16 %v845
        %v2422 = vunpack.c.l.b16 %v846
        %v2423 = vunpack.c.h.b16 %v846
        %v2424 = vunpack.c.l.b16 %v847
        %v2425 = vunpack.c.l.b16 %v848
        %v2426 = vunpack.c.h.b16 %v848
        %v2427 = vunpack.c.l.b16 %v849
        %v2428 = vunpack.c.h.b16 %v849
        %v2429 = vunpack.c.l.b16 %v850
        %v2430 = vunpack.c.h.b16 %v850
        %v2431 = vunpack.c.l.b16 %v851
        %v2432 = vunpack.c.h.b16 %v851
        %v2433 = vunpack.c.l.b16 %v852
        %v2434 = vunpack.c.h.b16 %v852
        %v2435 = vunpack.c.l.b16 %v853
        %v2436 = vunpack.c.h.b16 %v853
        %v2437 = vunpack.c.l.b16 %v854
        %v2438 = vunpack.c.h.b16 %v854
        %v2439 = vunpack.c.l.b16 %v855
        %v2440 = vunpack.c.h.b16 %v855
        %v2441 = vunpack.c.l.b16 %v856
        %v2442 = vunpack.c.h.b16 %v856
        %v2443 = vunpack.c.l.b16 %v857
        %v2444 = vunpack.c.h.b16 %v857
        %v2445 = vunpack.c.l.b16 %v858
        %v2446 = vunpack.c.h.b16 %v858
        %v2447 = vunpack.c.l.b16 %v859
        %v2448 = vunpack.c.h.b16 %v859
        %v2449 = vunpack.c.l.b16 %v860
        %v2450 = vunpack.c.l.b16 %v861
        %v2451 = vunpack.c.h.b16 %v861
        %v2452 = vunpack.c.l.b16 %v862
        %v2453 = vunpack.c.h.b16 %v862
        %v2454 = vunpack.c.l.b16 %v863
        %v2455 = vunpack.c.h.b16 %v863
        %v2456 = vunpack.c.l.b16 %v864
        %v2457 = vunpack.c.h.b16 %v864
        %v2458 = vunpack.c.l.b16 %v865
        %v2459 = vunpack.c.h.b16 %v865
        %v2460 = vunpack.c.l.b16 %v866
        %v2461 = vunpack.c.h.b16 %v866
        %v2462 = vunpack.c.l.b16 %v867
        %v2463 = vunpack.c.h.b16 %v867
        %v2464 = vunpack.c.l.b16 %v868
        %v2465 = vunpack.c.h.b16 %v868
        %v2466 = vunpack.c.l.b16 %v869
        %v2467 = vunpack.c.h.b16 %v869
        %v2468 = vunpack.c.l.b16 %v870
        %v2469 = vunpack.c.h.b16 %v870
        %v2470 = vunpack.c.l.b16 %v871
        %v2471 = vunpack.c.h.b16 %v871
        %v2472 = vunpack.c.l.b16 %v872
        %v2473 = vunpack.c.h.b16 %v872
        %v2474 = vunpack.c.l.b16 %v873
        %v2475 = vunpack.c.l.b16 %v874
        %v2476 = vunpack.c.h.b16 %v874
        %v2477 = vunpack.c.l.b16 %v875
        %v2478 = vunpack.c.h.b16 %v875
        %v2479 = vunpack.c.l.b16 %v876
        %v2480 = vunpack.c.h.b16 %v876
        %v2481 = vunpack.c.l.b16 %v877
        %v2482 = vunpack.c.h.b16 %v877
        %v2483 = vunpack.c.l.b16 %v878
        %v2484 = vunpack.c.h.b16 %v878
        %v2485 = vunpack.c.l.b16 %v879
        %v2486 = vunpack.c.h.b16 %v879
        %v2487 = vunpack.c.l.b16 %v880
        %v2488 = vunpack.c.h.b16 %v880
        %v2489 = vunpack.c.l.b16 %v881
        %v2490 = vunpack.c.h.b16 %v881
        %v2491 = vunpack.c.l.b16 %v882
        %v2492 = vunpack.c.h.b16 %v882
        %v2493 = vunpack.c.l.b16 %v883
        %v2494 = vunpack.c.h.b16 %v883
        %v2495 = vunpack.c.l.b16 %v884
        %v2496 = vunpack.c.h.b16 %v884
        %v2497 = vunpack.c.l.b16 %v885
        %v2498 = vunpack.c.h.b16 %v885
        %v2499 = vunpack.c.l.b16 %v886
        %v2500 = vunpack.c.l.b16 %v887
        %v2501 = vunpack.c.h.b16 %v887
        %v2502 = vunpack.c.l.b16 %v888
        %v2503 = vunpack.c.h.b16 %v888
        %v2504 = vunpack.c.l.b16 %v889
        %v2505 = vunpack.c.h.b16 %v889
        %v2506 = vunpack.c.l.b16 %v890
        %v2507 = vunpack.c.h.b16 %v890
        %v2508 = vunpack.c.l.b16 %v891
        %v2509 = vunpack.c.h.b16 %v891
        %v2510 = vunpack.c.l.b16 %v892
        %v2511 = vunpack.c.h.b16 %v892
        %v2512 = vunpack.c.l.b16 %v893
        %v2513 = vunpack.c.h.b16 %v893
        %v2514 = vunpack.c.l.b16 %v894
        %v2515 = vunpack.c.h.b16 %v894
        %v2516 = vunpack.c.l.b16 %v895
        %v2517 = vunpack.c.h.b16 %v895
        %v2518 = vunpack.c.l.b16 %v896
        %v2519 = vunpack.c.h.b16 %v896
        %v2520 = vunpack.c.l.b16 %v897
        %v2521 = vunpack.c.h.b16 %v897
        %v2522 = vunpack.c.l.b16 %v898
        %v2523 = vunpack.c.h.b16 %v898
        %v2524 = vunpack.c.l.b16 %v899
        %v2525 = vunpack.c.l.b16 %v900
        %v2526 = vunpack.c.h.b16 %v900
        %v2527 = vunpack.c.l.b16 %v901
        %v2528 = vunpack.c.h.b16 %v901
        %v2529 = vunpack.c.l.b16 %v902
        %v2530 = vunpack.c.h.b16 %v902
        %v2531 = vunpack.c.l.b16 %v903
        %v2532 = vunpack.c.h.b16 %v903
        %v2533 = vunpack.c.l.b16 %v904
        %v2534 = vunpack.c.h.b16 %v904
        %v2535 = vunpack.c.l.b16 %v905
        %v2536 = vunpack.c.h.b16 %v905
        %v2537 = vunpack.c.l.b16 %v906
        %v2538 = vunpack.c.h.b16 %v906
        %v2539 = vunpack.c.l.b16 %v907
        %v2540 = vunpack.c.h.b16 %v907
        %v2541 = vunpack.c.l.b16 %v908
        %v2542 = vunpack.c.h.b16 %v908
        %v2543 = vunpack.c.l.b16 %v909
        %v2544 = vunpack.c.h.b16 %v909
        %v2545 = vunpack.c.l.b16 %v910
        %v2546 = vunpack.c.h.b16 %v910
        %v2547 = vunpack.c.l.b16 %v911
        %v2548 = vunpack.c.h.b16 %v911
        %v2549 = vunpack.c.l.b16 %v912
        %v2550 = vunpack.c.l.b16 %v913
        %v2551 = vunpack.c.h.b16 %v913
        %v2552 = vunpack.c.l.b16 %v914
        %v2553 = vunpack.c.h.b16 %v914
        %v2554 = vunpack.c.l.b16 %v915
        %v2555 = vunpack.c.h.b16 %v915
        %v2556 = vunpack.c.l.b16 %v916
        %v2557 = vunpack.c.h.b16 %v916
        %v2558 = vunpack.c.l.b16 %v917
        %v2559 = vunpack.c.h.b16 %v917
        %v2560 = vunpack.c.l.b16 %v918
        %v2561 = vunpack.c.h.b16 %v918
        %v2562 = vunpack.c.l.b16 %v919
        %v2563 = vunpack.c.h.b16 %v919
        %v2564 = vunpack.c.l.b16 %v920
        %v2565 = vunpack.c.h.b16 %v920
        %v2566 = vunpack.c.l.b16 %v921
        %v2567 = vunpack.c.h.b16 %v921
        %v2568 = vunpack.c.l.b16 %v922
        %v2569 = vunpack.c.h.b16 %v922
        %v2570 = vunpack.c.l.b16 %v923
        %v2571 = vunpack.c.h.b16 %v923
        %v2572 = vunpack.c.l.b16 %v924
        %v2573 = vunpack.c.h.b16 %v924
        %v2574 = vunpack.c.l.b16 %v925
        %v2575 = vunpack.c.l.b16 %v926
        %v2576 = vunpack.c.h.b16 %v926
        %v2577 = vunpack.c.l.b16 %v927
        %v2578 = vunpack.c.h.b16 %v927
        %v2579 = vunpack.c.l.b16 %v928
        %v2580 = vunpack.c.h.b16 %v928
        %v2581 = vunpack.c.l.b16 %v929
        %v2582 = vunpack.c.h.b16 %v929
        %v2583 = vunpack.c.l.b16 %v930
        %v2584 = vunpack.c.h.b16 %v930
        %v2585 = vunpack.c.l.b16 %v931
        %v2586 = vunpack.c.h.b16 %v931
        %v2587 = vunpack.c.l.b16 %v932
        %v2588 = vunpack.c.h.b16 %v932
        %v2589 = vunpack.c.l.b16 %v933
        %v2590 = vunpack.c.h.b16 %v933
        %v2591 = vunpack.c.l.b16 %v934
        %v2592 = vunpack.c.h.b16 %v934
        %v2593 = vunpack.c.l.b16 %v935
        %v2594 = vunpack.c.h.b16 %v935
        %v2595 = vunpack.c.l.b16 %v936
        %v2596 = vunpack.c.h.b16 %v936
        %v2597 = vunpack.c.l.b16 %v937
        %v2598 = vunpack.c.h.b16 %v937
        %v2599 = vunpack.c.l.b16 %v938
        %v2600 = vunpack.c.l.b16 %v939
        %v2601 = vunpack.c.h.b16 %v939
        %v2602 = vunpack.c.l.b16 %v940
        %v2603 = vunpack.c.h.b16 %v940
        %v2604 = vunpack.c.l.b16 %v941
        %v2605 = vunpack.c.h.b16 %v941
        %v2606 = vunpack.c.l.b16 %v942
        %v2607 = vunpack.c.h.b16 %v942
        %v2608 = vunpack.c.l.b16 %v943
        %v2609 = vunpack.c.h.b16 %v943
        %v2610 = vunpack.c.l.b16 %v944
        %v2611 = vunpack.c.h.b16 %v944
        %v2612 = vunpack.c.l.b16 %v945
        %v2613 = vunpack.c.h.b16 %v945
        %v2614 = vunpack.c.l.b16 %v946
        %v2615 = vunpack.c.h.b16 %v946
        %v2616 = vunpack.c.l.b16 %v947
        %v2617 = vunpack.c.h.b16 %v947
        %v2618 = vunpack.c.l.b16 %v948
        %v2619 = vunpack.c.h.b16 %v948
        %v2620 = vunpack.c.l.b16 %v949
        %v2621 = vunpack.c.h.b16 %v949
        %v2622 = vunpack.c.l.b16 %v950
        %v2623 = vunpack.c.h.b16 %v950
        %v2624 = vunpack.c.l.b16 %v951
        %v2625 = vunpack.c.l.b16 %v952
        %v2626 = vunpack.c.h.b16 %v952
        %v2627 = vunpack.c.l.b16 %v953
        %v2628 = vunpack.c.h.b16 %v953
        %v2629 = vunpack.c.l.b16 %v954
        %v2630 = vunpack.c.h.b16 %v954
        %v2631 = vunpack.c.l.b16 %v955
        %v2632 = vunpack.c.h.b16 %v955
        %v2633 = vunpack.c.l.b16 %v956
        %v2634 = vunpack.c.h.b16 %v956
        %v2635 = vunpack.c.l.b16 %v957
        %v2636 = vunpack.c.h.b16 %v957
        %v2637 = vunpack.c.l.b16 %v958
        %v2638 = vunpack.c.h.b16 %v958
        %v2639 = vunpack.c.l.b16 %v959
        %v2640 = vunpack.c.h.b16 %v959
        %v2641 = vunpack.c.l.b16 %v960
        %v2642 = vunpack.c.h.b16 %v960
        %v2643 = vunpack.c.l.b16 %v961
        %v2644 = vunpack.c.h.b16 %v961
        %v2645 = vunpack.c.l.b16 %v962
        %v2646 = vunpack.c.h.b16 %v962
        %v2647 = vunpack.c.l.b16 %v963
        %v2648 = vunpack.c.h.b16 %v963
        %v2649 = vunpack.c.l.b16 %v964
        %v2650 = vunpack.c.l.b16 %v965
        %v2651 = vunpack.c.h.b16 %v965
        %v2652 = vunpack.c.l.b16 %v966
        %v2653 = vunpack.c.h.b16 %v966
        %v2654 = vunpack.c.l.b16 %v967
        %v2655 = vunpack.c.h.b16 %v967
        %v2656 = vunpack.c.l.b16 %v968
        %v2657 = vunpack.c.h.b16 %v968
        %v2658 = vunpack.c.l.b16 %v969
        %v2659 = vunpack.c.h.b16 %v969
        %v2660 = vunpack.c.l.b16 %v970
        %v2661 = vunpack.c.h.b16 %v970
        %v2662 = vunpack.c.l.b16 %v971
        %v2663 = vunpack.c.h.b16 %v971
        %v2664 = vunpack.c.l.b16 %v972
        %v2665 = vunpack.c.h.b16 %v972
        %v2666 = vunpack.c.l.b16 %v973
        %v2667 = vunpack.c.h.b16 %v973
        %v2668 = vunpack.c.l.b16 %v974
        %v2669 = vunpack.c.h.b16 %v974
        %v2670 = vunpack.c.l.b16 %v975
        %v2671 = vunpack.c.h.b16 %v975
        %v2672 = vunpack.c.l.b16 %v976
        %v2673 = vunpack.c.h.b16 %v976
        %v2674 = vunpack.c.l.b16 %v977
        %v2675 = vunpack.c.l.b16 %v978
        %v2676 = vunpack.c.h.b16 %v978
        %v2677 = vunpack.c.l.b16 %v979
        %v2678 = vunpack.c.h.b16 %v979
        %v2679 = vunpack.c.l.b16 %v980
        %v2680 = vunpack.c.h.b16 %v980
        %v2681 = vunpack.c.l.b16 %v981
        %v2682 = vunpack.c.h.b16 %v981
        %v2683 = vunpack.c.l.b16 %v982
        %v2684 = vunpack.c.h.b16 %v982
        %v2685 = vunpack.c.l.b16 %v983
        %v2686 = vunpack.c.h.b16 %v983
        %v2687 = vunpack.c.l.b16 %v984
        %v2688 = vunpack.c.h.b16 %v984
        %v2689 = vunpack.c.l.b16 %v985
        %v2690 = vunpack.c.h.b16 %v985
        %v2691 = vunpack.c.l.b16 %v986
        %v2692 = vunpack.c.h.b16 %v986
        %v2693 = vunpack.c.l.b16 %v987
        %v2694 = vunpack.c.h.b16 %v987
        %v2695 = vunpack.c.l.b16 %v988
        %v2696 = vunpack.c.h.b16 %v988
        %v2697 = vunpack.c.l.b16 %v989
        %v2698 = vunpack.c.h.b16 %v989
        %v2699 = vunpack.c.l.b16 %v990
        %v2700 = vunpack.c.l.b16 %v991
        %v2701 = vunpack.c.h.b16 %v991
        %v2702 = vunpack.c.l.b16 %v992
        %v2703 = vunpack.c.h.b16 %v992
        %v2704 = vunpack.c.l.b16 %v993
        %v2705 = vunpack.c.h.b16 %v993
        %v2706 = vunpack.c.l.b16 %v994
        %v2707 = vunpack.c.h.b16 %v994
        %v2708 = vunpack.c.l.b16 %v995
        %v2709 = vunpack.c.h.b16 %v995
        %v2710 = vunpack.c.l.b16 %v996
        %v2711 = vunpack.c.h.b16 %v996
        %v2712 = vunpack.c.l.b16 %v997
        %v2713 = vunpack.c.h.b16 %v997
        %v2714 = vunpack.c.l.b16 %v998
        %v2715 = vunpack.c.h.b16 %v998
        %v2716 = vunpack.c.l.b16 %v999
        %v2717 = vunpack.c.h.b16 %v999
        %v2718 = vunpack.c.l.b16 %v1000
        %v2719 = vunpack.c.h.b16 %v1000
        %v2720 = vunpack.c.l.b16 %v1001
        %v2721 = vunpack.c.h.b16 %v1001
        %v2722 = vunpack.c.l.b16 %v1002
        %v2723 = vunpack.c.h.b16 %v1002
        %v2724 = vunpack.c.l.b16 %v1003
        %v2725 = vunpack.c.l.b16 %v1004
        %v2726 = vunpack.c.h.b16 %v1004
        %v2727 = vunpack.c.l.b16 %v1005
        %v2728 = vunpack.c.h.b16 %v1005
        %v2729 = vunpack.c.l.b16 %v1006
        %v2730 = vunpack.c.h.b16 %v1006
        %v2731 = vunpack.c.l.b16 %v1007
        %v2732 = vunpack.c.h.b16 %v1007
        %v2733 = vunpack.c.l.b16 %v1008
        %v2734 = vunpack.c.h.b16 %v1008
        %v2735 = vunpack.c.l.b16 %v1009
        %v2736 = vunpack.c.h.b16 %v1009
        %v2737 = vunpack.c.l.b16 %v1010
        %v2738 = vunpack.c.h.b16 %v1010
        %v2739 = vunpack.c.l.b16 %v1011
        %v2740 = vunpack.c.h.b16 %v1011
        %v2741 = vunpack.c.l.b16 %v1012
        %v2742 = vunpack.c.h.b16 %v1012
        %v2743 = vunpack.c.l.b16 %v1013
        %v2744 = vunpack.c.h.b16 %v1013
        %v2745 = vunpack.c.l.b16 %v1014
        %v2746 = vunpack.c.h.b16 %v1014
        %v2747 = vunpack.c.l.b16 %v1015
        %v2748 = vunpack.c.h.b16 %v1015
        %v2749 = vunpack.c.l.b16 %v1016
        %v2750 = vunpack.c.l.b16 %v1017
        %v2751 = vunpack.c.h.b16 %v1017
        %v2752 = vunpack.c.l.b16 %v1018
        %v2753 = vunpack.c.h.b16 %v1018
        %v2754 = vunpack.c.l.b16 %v1019
        %v2755 = vunpack.c.h.b16 %v1019
        %v2756 = vunpack.c.l.b16 %v1020
        %v2757 = vunpack.c.h.b16 %v1020
        %v2758 = vunpack.c.l.b16 %v1021
        %v2759 = vunpack.c.h.b16 %v1021
        %v2760 = vunpack.c.l.b16 %v1022
        %v2761 = vunpack.c.h.b16 %v1022
        %v2762 = vunpack.c.l.b16 %v1023
        %v2763 = vunpack.c.h.b16 %v1023
        %v2764 = vunpack.c.l.b16 %v1024
        %v2765 = vunpack.c.h.b16 %v1024
        %v2766 = vunpack.c.l.b16 %v1025
        %v2767 = vunpack.c.h.b16 %v1025
        %v2768 = vunpack.c.l.b16 %v1026
        %v2769 = vunpack.c.h.b16 %v1026
        %v2770 = vunpack.c.l.b16 %v1027
        %v2771 = vunpack.c.h.b16 %v1027
        %v2772 = vunpack.c.l.b16 %v1028
        %v2773 = vunpack.c.h.b16 %v1028
        %v2774 = vunpack.c.l.b16 %v1029
        %v2775 = vunpack.c.l.b16 %v1030
        %v2776 = vunpack.c.h.b16 %v1030
        %v2777 = vunpack.c.l.b16 %v1031
        %v2778 = vunpack.c.h.b16 %v1031
        %v2779 = vunpack.c.l.b16 %v1032
        %v2780 = vunpack.c.h.b16 %v1032
        %v2781 = vunpack.c.l.b16 %v1033
        %v2782 = vunpack.c.h.b16 %v1033
        %v2783 = vunpack.c.l.b16 %v1034
        %v2784 = vunpack.c.h.b16 %v1034
        %v2785 = vunpack.c.l.b16 %v1035
        %v2786 = vunpack.c.h.b16 %v1035
        %v2787 = vunpack.c.l.b16 %v1036
        %v2788 = vunpack.c.h.b16 %v1036
        %v2789 = vunpack.c.l.b16 %v1037
        %v2790 = vunpack.c.h.b16 %v1037
        %v2791 = vunpack.c.l.b16 %v1038
        %v2792 = vunpack.c.h.b16 %v1038
        %v2793 = vunpack.c.l.b16 %v1039
        %v2794 = vunpack.c.h.b16 %v1039
        %v2795 = vunpack.c.l.b16 %v1040
        %v2796 = vunpack.c.h.b16 %v1040
        %v2797 = vunpack.c.l.b16 %v1041
        %v2798 = vunpack.c.h.b16 %v1041
        %v2799 = vunpack.c.l.b16 %v1042
        %v2800 = vunpack.c.l.b16 %v1043
        %v2801 = vunpack.c.h.b16 %v1043
        %v2802 = vunpack.c.l.b16 %v1044
        %v2803 = vunpack.c.h.b16 %v1044
        %v2804 = vunpack.c.l.b16 %v1045
        %v2805 = vunpack.c.h.b16 %v1045
        %v2806 = vunpack.c.l.b16 %v1046
        %v2807 = vunpack.c.h.b16 %v1046
        %v2808 = vunpack.c.l.b16 %v1047
        %v2809 = vunpack.c.h.b16 %v1047
        %v2810 = vunpack.c.l.b16 %v1048
        %v2811 = vunpack.c.h.b16 %v1048
        %v2812 = vunpack.c.l.b16 %v1049
        %v2813 = vunpack.c.h.b16 %v1049
        %v2814 = vunpack.c.l.b16 %v1050
        %v2815 = vunpack.c.h.b16 %v1050
        %v2816 = vunpack.c.l.b16 %v1051
        %v2817 = vunpack.c.h.b16 %v1051
        %v2818 = vunpack.c.l.b16 %v1052
        %v2819 = vunpack.c.h.b16 %v1052
        %v2820 = vunpack.c.l.b16 %v1053
        %v2821 = vunpack.c.h.b16 %v1053
        %v2822 = vunpack.c.l.b16 %v1054
        %v2823 = vunpack.c.h.b16 %v1054
        %v2824 = vunpack.c.l.b16 %v1055
        %v2825 = vunpack.c.l.b16 %v1056
        %v2826 = vunpack.c.h.b16 %v1056
        %v2827 = vunpack.c.l.b16 %v1057
        %v2828 = vunpack.c.h.b16 %v1057
        %v2829 = vunpack.c.l.b16 %v1058
        %v2830 = vunpack.c.h.b16 %v1058
        %v2831 = vunpack.c.l.b16 %v1059
        %v2832 = vunpack.c.h.b16 %v1059
        %v2833 = vunpack.c.l.b16 %v1060
        %v2834 = vunpack.c.h.b16 %v1060
        %v2835 = vunpack.c.l.b16 %v1061
        %v2836 = vunpack.c.h.b16 %v1061
        %v2837 = vunpack.c.l.b16 %v1062
        %v2838 = vunpack.c.h.b16 %v1062
        %v2839 = vunpack.c.l.b16 %v1063
        %v2840 = vunpack.c.h.b16 %v1063
        %v2841 = vunpack.c.l.b16 %v1064
        %v2842 = vunpack.c.h.b16 %v1064
        %v2843 = vunpack.c.l.b16 %v1065
        %v2844 = vunpack.c.h.b16 %v1065
        %v2845 = vunpack.c.l.b16 %v1066
        %v2846 = vunpack.c.h.b16 %v1066
        %v2847 = vunpack.c.l.b16 %v1067
        %v2848 = vunpack.c.h.b16 %v1067
        %v2849 = vunpack.c.l.b16 %v1068
        %v2850 = vunpack.c.l.b16 %v1069
        %v2851 = vunpack.c.h.b16 %v1069
        %v2852 = vunpack.c.l.b16 %v1070
        %v2853 = vunpack.c.h.b16 %v1070
        %v2854 = vunpack.c.l.b16 %v1071
        %v2855 = vunpack.c.h.b16 %v1071
        %v2856 = vunpack.c.l.b16 %v1072
        %v2857 = vunpack.c.h.b16 %v1072
        %v2858 = vunpack.c.l.b16 %v1073
        %v2859 = vunpack.c.h.b16 %v1073
        %v2860 = vunpack.c.l.b16 %v1074
        %v2861 = vunpack.c.h.b16 %v1074
        %v2862 = vunpack.c.l.b16 %v1075
        %v2863 = vunpack.c.h.b16 %v1075
        %v2864 = vunpack.c.l.b16 %v1076
        %v2865 = vunpack.c.h.b16 %v1076
        %v2866 = vunpack.c.l.b16 %v1077
        %v2867 = vunpack.c.h.b16 %v1077
        %v2868 = vunpack.c.l.b16 %v1078
        %v2869 = vunpack.c.h.b16 %v1078
        %v2870 = vunpack.c.l.b16 %v1079
        %v2871 = vunpack.c.h.b16 %v1079
        %v2872 = vunpack.c.l.b16 %v1080
        %v2873 = vunpack.c.h.b16 %v1080
        %v2874 = vunpack.c.l.b16 %v1081
        %v2875 = vunpack.c.l.b16 %v1082
        %v2876 = vunpack.c.h.b16 %v1082
        %v2877 = vunpack.c.l.b16 %v1083
        %v2878 = vunpack.c.h.b16 %v1083
        %v2879 = vunpack.c.l.b16 %v1084
        %v2880 = vunpack.c.h.b16 %v1084
        %v2881 = vunpack.c.l.b16 %v1085
        %v2882 = vunpack.c.h.b16 %v1085
        %v2883 = vunpack.c.l.b16 %v1086
        %v2884 = vunpack.c.h.b16 %v1086
        %v2885 = vunpack.c.l.b16 %v1087
        %v2886 = vunpack.c.h.b16 %v1087
        %v2887 = vunpack.c.l.b16 %v1088
        %v2888 = vunpack.c.h.b16 %v1088
        %v2889 = vunpack.c.l.b16 %v1089
        %v2890 = vunpack.c.h.b16 %v1089
        %v2891 = vunpack.c.l.b16 %v1090
        %v2892 = vunpack.c.h.b16 %v1090
        %v2893 = vunpack.c.l.b16 %v1091
        %v2894 = vunpack.c.h.b16 %v1091
        %v2895 = vunpack.c.l.b16 %v1092
        %v2896 = vunpack.c.h.b16 %v1092
        %v2897 = vunpack.c.l.b16 %v1093
        %v2898 = vunpack.c.h.b16 %v1093
        %v2899 = vunpack.c.l.b16 %v1094
        %v2900 = vunpack.c.l.b16 %v1095
        %v2901 = vunpack.c.h.b16 %v1095
        %v2902 = vunpack.c.l.b16 %v1096
        %v2903 = vunpack.c.h.b16 %v1096
        %v2904 = vunpack.c.l.b16 %v1097
        %v2905 = vunpack.c.h.b16 %v1097
        %v2906 = vunpack.c.l.b16 %v1098
        %v2907 = vunpack.c.h.b16 %v1098
        %v2908 = vunpack.c.l.b16 %v1099
        %v2909 = vunpack.c.h.b16 %v1099
        %v2910 = vunpack.c.l.b16 %v1100
        %v2911 = vunpack.c.h.b16 %v1100
        %v2912 = vunpack.c.l.b16 %v1101
        %v2913 = vunpack.c.h.b16 %v1101
        %v2914 = vunpack.c.l.b16 %v1102
        %v2915 = vunpack.c.h.b16 %v1102
        %v2916 = vunpack.c.l.b16 %v1103
        %v2917 = vunpack.c.h.b16 %v1103
        %v2918 = vunpack.c.l.b16 %v1104
        %v2919 = vunpack.c.h.b16 %v1104
        %v2920 = vunpack.c.l.b16 %v1105
        %v2921 = vunpack.c.h.b16 %v1105
        %v2922 = vunpack.c.l.b16 %v1106
        %v2923 = vunpack.c.h.b16 %v1106
        %v2924 = vunpack.c.l.b16 %v1107
        %v2925 = vunpack.c.l.b16 %v1108
        %v2926 = vunpack.c.h.b16 %v1108
        %v2927 = vunpack.c.l.b16 %v1109
        %v2928 = vunpack.c.h.b16 %v1109
        %v2929 = vunpack.c.l.b16 %v1110
        %v2930 = vunpack.c.h.b16 %v1110
        %v2931 = vunpack.c.l.b16 %v1111
        %v2932 = vunpack.c.h.b16 %v1111
        %v2933 = vunpack.c.l.b16 %v1112
        %v2934 = vunpack.c.h.b16 %v1112
        %v2935 = vunpack.c.l.b16 %v1113
        %v2936 = vunpack.c.h.b16 %v1113
        %v2937 = vunpack.c.l.b16 %v1114
        %v2938 = vunpack.c.h.b16 %v1114
        %v2939 = vunpack.c.l.b16 %v1115
        %v2940 = vunpack.c.h.b16 %v1115
        %v2941 = vunpack.c.l.b16 %v1116
        %v2942 = vunpack.c.h.b16 %v1116
        %v2943 = vunpack.c.l.b16 %v1117
        %v2944 = vunpack.c.h.b16 %v1117
        %v2945 = vunpack.c.l.b16 %v1118
        %v2946 = vunpack.c.h.b16 %v1118
        %v2947 = vunpack.c.l.b16 %v1119
        %v2948 = vunpack.c.h.b16 %v1119
        %v2949 = vunpack.c.l.b16 %v1120
        %v2950 = vunpack.c.l.b16 %v1121
        %v2951 = vunpack.c.h.b16 %v1121
        %v2952 = vunpack.c.l.b16 %v1122
        %v2953 = vunpack.c.h.b16 %v1122
        %v2954 = vunpack.c.l.b16 %v1123
        %v2955 = vunpack.c.h.b16 %v1123
        %v2956 = vunpack.c.l.b16 %v1124
        %v2957 = vunpack.c.h.b16 %v1124
        %v2958 = vunpack.c.l.b16 %v1125
        %v2959 = vunpack.c.h.b16 %v1125
        %v2960 = vunpack.c.l.b16 %v1126
        %v2961 = vunpack.c.h.b16 %v1126
        %v2962 = vunpack.c.l.b16 %v1127
        %v2963 = vunpack.c.h.b16 %v1127
        %v2964 = vunpack.c.l.b16 %v1128
        %v2965 = vunpack.c.h.b16 %v1128
        %v2966 = vunpack.c.l.b16 %v1129
        %v2967 = vunpack.c.h.b16 %v1129
        %v2968 = vunpack.c.l.b16 %v1130
        %v2969 = vunpack.c.h.b16 %v1130
        %v2970 = vunpack.c.l.b16 %v1131
        %v2971 = vunpack.c.h.b16 %v1131
        %v2972 = vunpack.c.l.b16 %v1132
        %v2973 = vunpack.c.h.b16 %v1132
        %v2974 = vunpack.c.l.b16 %v1133
        %v2975 = vunpack.c.l.b16 %v1134
        %v2976 = vunpack.c.h.b16 %v1134
        %v2977 = vunpack.c.l.b16 %v1135
        %v2978 = vunpack.c.h.b16 %v1135
        %v2979 = vunpack.c.l.b16 %v1136
        %v2980 = vunpack.c.h.b16 %v1136
        %v2981 = vunpack.c.l.b16 %v1137
        %v2982 = vunpack.c.h.b16 %v1137
        %v2983 = vunpack.c.l.b16 %v1138
        %v2984 = vunpack.c.h.b16 %v1138
        %v2985 = vunpack.c.l.b16 %v1139
        %v2986 = vunpack.c.h.b16 %v1139
        %v2987 = vunpack.c.l.b16 %v1140
        %v2988 = vunpack.c.h.b16 %v1140
        %v2989 = vunpack.c.l.b16 %v1141
        %v2990 = vunpack.c.h.b16 %v1141
        %v2991 = vunpack.c.l.b16 %v1142
        %v2992 = vunpack.c.h.b16 %v1142
        %v2993 = vunpack.c.l.b16 %v1143
        %v2994 = vunpack.c.h.b16 %v1143
        %v2995 = vunpack.c.l.b16 %v1144
        %v2996 = vunpack.c.h.b16 %v1144
        %v2997 = vunpack.c.l.b16 %v1145
        %v2998 = vunpack.c.h.b16 %v1145
        %v2999 = vunpack.c.l.b16 %v1146
        %v3000 = vunpack.c.l.b16 %v1147
        %v3001 = vunpack.c.h.b16 %v1147
        %v3002 = vunpack.c.l.b16 %v1148
        %v3003 = vunpack.c.h.b16 %v1148
        %v3004 = vunpack.c.l.b16 %v1149
        %v3005 = vunpack.c.h.b16 %v1149
        %v3006 = vunpack.c.l.b16 %v1150
        %v3007 = vunpack.c.h.b16 %v1150
        %v3008 = vunpack.c.l.b16 %v1151
        %v3009 = vunpack.c.h.b16 %v1151
        %v3010 = vunpack.c.l.b16 %v1152
        %v3011 = vunpack.c.h.b16 %v1152
        %v3012 = vunpack.c.l.b16 %v1153
        %v3013 = vunpack.c.h.b16 %v1153
        %v3014 = vunpack.c.l.b16 %v1154
        %v3015 = vunpack.c.h.b16 %v1154
        %v3016 = vunpack.c.l.b16 %v1155
        %v3017 = vunpack.c.h.b16 %v1155
        %v3018 = vunpack.c.l.b16 %v1156
        %v3019 = vunpack.c.h.b16 %v1156
        %v3020 = vunpack.c.l.b16 %v1157
        %v3021 = vunpack.c.h.b16 %v1157
        %v3022 = vunpack.c.l.b16 %v1158
        %v3023 = vunpack.c.h.b16 %v1158
        %v3024 = vunpack.c.l.b16 %v1159
        %v3025 = vunpack.c.l.b16 %v1160
        %v3026 = vunpack.c.h.b16 %v1160
        %v3027 = vunpack.c.l.b16 %v1161
        %v3028 = vunpack.c.h.b16 %v1161
        %v3029 = vunpack.c.l.b16 %v1162
        %v3030 = vunpack.c.h.b16 %v1162
        %v3031 = vunpack.c.l.b16 %v1163
        %v3032 = vunpack.c.h.b16 %v1163
        %v3033 = vunpack.c.l.b16 %v1164
        %v3034 = vunpack.c.h.b16 %v1164
        %v3035 = vunpack.c.l.b16 %v1165
        %v3036 = vunpack.c.h.b16 %v1165
        %v3037 = vunpack.c.l.b16 %v1166
        %v3038 = vunpack.c.h.b16 %v1166
        %v3039 = vunpack.c.l.b16 %v1167
        %v3040 = vunpack.c.h.b16 %v1167
        %v3041 = vunpack.c.l.b16 %v1168
        %v3042 = vunpack.c.h.b16 %v1168
        %v3043 = vunpack.c.l.b16 %v1169
        %v3044 = vunpack.c.h.b16 %v1169
        %v3045 = vunpack.c.l.b16 %v1170
        %v3046 = vunpack.c.h.b16 %v1170
        %v3047 = vunpack.c.l.b16 %v1171
        %v3048 = vunpack.c.h.b16 %v1171
        %v3049 = vunpack.c.l.b16 %v1172
        %v3050 = vunpack.c.l.b16 %v1173
        %v3051 = vunpack.c.h.b16 %v1173
        %v3052 = vunpack.c.l.b16 %v1174
        %v3053 = vunpack.c.h.b16 %v1174
        %v3054 = vunpack.c.l.b16 %v1175
        %v3055 = vunpack.c.h.b16 %v1175
        %v3056 = vunpack.c.l.b16 %v1176
        %v3057 = vunpack.c.h.b16 %v1176
        %v3058 = vunpack.c.l.b16 %v1177
        %v3059 = vunpack.c.h.b16 %v1177
        %v3060 = vunpack.c.l.b16 %v1178
        %v3061 = vunpack.c.h.b16 %v1178
        %v3062 = vunpack.c.l.b16 %v1179
        %v3063 = vunpack.c.h.b16 %v1179
        %v3064 = vunpack.c.l.b16 %v1180
        %v3065 = vunpack.c.h.b16 %v1180
        %v3066 = vunpack.c.l.b16 %v1181
        %v3067 = vunpack.c.h.b16 %v1181
        %v3068 = vunpack.c.l.b16 %v1182
        %v3069 = vunpack.c.h.b16 %v1182
        %v3070 = vunpack.c.l.b16 %v1183
        %v3071 = vunpack.c.h.b16 %v1183
        %v3072 = vunpack.c.l.b16 %v1184
        %v3073 = vunpack.c.h.b16 %v1184
        %v3074 = vunpack.c.l.b16 %v1185
        %v3075 = vunpack.c.l.b16 %v1186
        %v3076 = vunpack.c.h.b16 %v1186
        %v3077 = vunpack.c.l.b16 %v1187
        %v3078 = vunpack.c.h.b16 %v1187
        %v3079 = vunpack.c.l.b16 %v1188
        %v3080 = vunpack.c.h.b16 %v1188
        %v3081 = vunpack.c.l.b16 %v1189
        %v3082 = vunpack.c.h.b16 %v1189
        %v3083 = vunpack.c.l.b16 %v1190
        %v3084 = vunpack.c.h.b16 %v1190
        %v3085 = vunpack.c.l.b16 %v1191
        %v3086 = vunpack.c.h.b16 %v1191
        %v3087 = vunpack.c.l.b16 %v1192
        %v3088 = vunpack.c.h.b16 %v1192
        %v3089 = vunpack.c.l.b16 %v1193
        %v3090 = vunpack.c.h.b16 %v1193
        %v3091 = vunpack.c.l.b16 %v1194
        %v3092 = vunpack.c.h.b16 %v1194
        %v3093 = vunpack.c.l.b16 %v1195
        %v3094 = vunpack.c.h.b16 %v1195
        %v3095 = vunpack.c.l.b16 %v1196
        %v3096 = vunpack.c.h.b16 %v1196
        %v3097 = vunpack.c.l.b16 %v1197
        %v3098 = vunpack.c.h.b16 %v1197
        %v3099 = vunpack.c.l.b16 %v1198
        %v3100 = vunpack.c.l.b16 %v1199
        %v3101 = vunpack.c.h.b16 %v1199
        %v3102 = vunpack.c.l.b16 %v1200
        %v3103 = vunpack.c.h.b16 %v1200
        %v3104 = vunpack.c.l.b16 %v1201
        %v3105 = vunpack.c.h.b16 %v1201
        %v3106 = vunpack.c.l.b16 %v1202
        %v3107 = vunpack.c.h.b16 %v1202
        %v3108 = vunpack.c.l.b16 %v1203
        %v3109 = vunpack.c.h.b16 %v1203
        %v3110 = vunpack.c.l.b16 %v1204
        %v3111 = vunpack.c.h.b16 %v1204
        %v3112 = vunpack.c.l.b16 %v1205
        %v3113 = vunpack.c.h.b16 %v1205
        %v3114 = vunpack.c.l.b16 %v1206
        %v3115 = vunpack.c.h.b16 %v1206
        %v3116 = vunpack.c.l.b16 %v1207
        %v3117 = vunpack.c.h.b16 %v1207
        %v3118 = vunpack.c.l.b16 %v1208
        %v3119 = vunpack.c.h.b16 %v1208
        %v3120 = vunpack.c.l.b16 %v1209
        %v3121 = vunpack.c.h.b16 %v1209
        %v3122 = vunpack.c.l.b16 %v1210
        %v3123 = vunpack.c.h.b16 %v1210
        %v3124 = vunpack.c.l.b16 %v1211
        %v3125 = vunpack.c.l.b16 %v1212
        %v3126 = vunpack.c.h.b16 %v1212
        %v3127 = vunpack.c.l.b16 %v1213
        %v3128 = vunpack.c.h.b16 %v1213
        %v3129 = vunpack.c.l.b16 %v1214
        %v3130 = vunpack.c.h.b16 %v1214
        %v3131 = vunpack.c.l.b16 %v1215
        %v3132 = vunpack.c.h.b16 %v1215
        %v3133 = vunpack.c.l.b16 %v1216
        %v3134 = vunpack.c.h.b16 %v1216
        %v3135 = vunpack.c.l.b16 %v1217
        %v3136 = vunpack.c.h.b16 %v1217
        %v3137 = vunpack.c.l.b16 %v1218
        %v3138 = vunpack.c.h.b16 %v1218
        %v3139 = vunpack.c.l.b16 %v1219
        %v3140 = vunpack.c.h.b16 %v1219
        %v3141 = vunpack.c.l.b16 %v1220
        %v3142 = vunpack.c.h.b16 %v1220
        %v3143 = vunpack.c.l.b16 %v1221
        %v3144 = vunpack.c.h.b16 %v1221
        %v3145 = vunpack.c.l.b16 %v1222
        %v3146 = vunpack.c.h.b16 %v1222
        %v3147 = vunpack.c.l.b16 %v1223
        %v3148 = vunpack.c.h.b16 %v1223
        %v3149 = vunpack.c.l.b16 %v1224
        %v3150 = vunpack.c.l.b16 %v1225
        %v3151 = vunpack.c.h.b16 %v1225
        %v3152 = vunpack.c.l.b16 %v1226
        %v3153 = vunpack.c.h.b16 %v1226
        %v3154 = vunpack.c.l.b16 %v1227
        %v3155 = vunpack.c.h.b16 %v1227
        %v3156 = vunpack.c.l.b16 %v1228
        %v3157 = vunpack.c.h.b16 %v1228
        %v3158 = vunpack.c.l.b16 %v1229
        %v3159 = vunpack.c.h.b16 %v1229
        %v3160 = vunpack.c.l.b16 %v1230
        %v3161 = vunpack.c.h.b16 %v1230
        %v3162 = vunpack.c.l.b16 %v1231
        %v3163 = vunpack.c.h.b16 %v1231
        %v3164 = vunpack.c.l.b16 %v1232
        %v3165 = vunpack.c.h.b16 %v1232
        %v3166 = vunpack.c.l.b16 %v1233
        %v3167 = vunpack.c.h.b16 %v1233
        %v3168 = vunpack.c.l.b16 %v1234
        %v3169 = vunpack.c.h.b16 %v1234
        %v3170 = vunpack.c.l.b16 %v1235
        %v3171 = vunpack.c.h.b16 %v1235
        %v3172 = vunpack.c.l.b16 %v1236
        %v3173 = vunpack.c.h.b16 %v1236
        %v3174 = vunpack.c.l.b16 %v1237
        %v3175 = vunpack.c.l.b16 %v1238
        %v3176 = vunpack.c.h.b16 %v1238
        %v3177 = vunpack.c.l.b16 %v1239
        %v3178 = vunpack.c.h.b16 %v1239
        %v3179 = vunpack.c.l.b16 %v1240
        %v3180 = vunpack.c.h.b16 %v1240
        %v3181 = vunpack.c.l.b16 %v1241
        %v3182 = vunpack.c.h.b16 %v1241
        %v3183 = vunpack.c.l.b16 %v1242
        %v3184 = vunpack.c.h.b16 %v1242
        %v3185 = vunpack.c.l.b16 %v1243
        %v3186 = vunpack.c.h.b16 %v1243
        %v3187 = vunpack.c.l.b16 %v1244
        %v3188 = vunpack.c.h.b16 %v1244
        %v3189 = vunpack.c.l.b16 %v1245
        %v3190 = vunpack.c.h.b16 %v1245
        %v3191 = vunpack.c.l.b16 %v1246
        %v3192 = vunpack.c.h.b16 %v1246
        %v3193 = vunpack.c.l.b16 %v1247
        %v3194 = vunpack.c.h.b16 %v1247
        %v3195 = vunpack.c.l.b16 %v1248
        %v3196 = vunpack.c.h.b16 %v1248
        %v3197 = vunpack.c.l.b16 %v1249
        %v3198 = vunpack.c.h.b16 %v1249
        %v3199 = vunpack.c.l.b16 %v1250
        %v3200 = vunpack.c.l.b16 %v1251
        %v3201 = vunpack.c.h.b16 %v1251
        %v3202 = vunpack.c.l.b16 %v1252
        %v3203 = vunpack.c.h.b16 %v1252
        %v3204 = vunpack.c.l.b16 %v1253
        %v3205 = vunpack.c.h.b16 %v1253
        %v3206 = vunpack.c.l.b16 %v1254
        %v3207 = vunpack.c.h.b16 %v1254
        %v3208 = vunpack.c.l.b16 %v1255
        %v3209 = vunpack.c.h.b16 %v1255
        %v3210 = vunpack.c.l.b16 %v1256
        %v3211 = vunpack.c.h.b16 %v1256
        %v3212 = vunpack.c.l.b16 %v1257
        %v3213 = vunpack.c.h.b16 %v1257
        %v3214 = vunpack.c.l.b16 %v1258
        %v3215 = vunpack.c.h.b16 %v1258
        %v3216 = vunpack.c.l.b16 %v1259
        %v3217 = vunpack.c.h.b16 %v1259
        %v3218 = vunpack.c.l.b16 %v1260
        %v3219 = vunpack.c.h.b16 %v1260
        %v3220 = vunpack.c.l.b16 %v1261
        %v3221 = vunpack.c.h.b16 %v1261
        %v3222 = vunpack.c.l.b16 %v1262
        %v3223 = vunpack.c.h.b16 %v1262
        %v3224 = vunpack.c.l.b16 %v1263
        %v3225 = vunpack.c.l.b16 %v1264
        %v3226 = vunpack.c.h.b16 %v1264
        %v3227 = vunpack.c.l.b16 %v1265
        %v3228 = vunpack.c.h.b16 %v1265
        %v3229 = vunpack.c.l.b16 %v1266
        %v3230 = vunpack.c.h.b16 %v1266
        %v3231 = vunpack.c.l.b16 %v1267
        %v3232 = vunpack.c.h.b16 %v1267
        %v3233 = vunpack.c.l.b16 %v1268
        %v3234 = vunpack.c.h.b16 %v1268
        %v3235 = vunpack.c.l.b16 %v1269
        %v3236 = vunpack.c.h.b16 %v1269
        %v3237 = vunpack.c.l.b16 %v1270
        %v3238 = vunpack.c.h.b16 %v1270
        %v3239 = vunpack.c.l.b16 %v1271
        %v3240 = vunpack.c.h.b16 %v1271
        %v3241 = vunpack.c.l.b16 %v1272
        %v3242 = vunpack.c.h.b16 %v1272
        %v3243 = vunpack.c.l.b16 %v1273
        %v3244 = vunpack.c.h.b16 %v1273
        %v3245 = vunpack.c.l.b16 %v1274
        %v3246 = vunpack.c.h.b16 %v1274
        %v3247 = vunpack.c.l.b16 %v1275
        %v3248 = vunpack.c.h.b16 %v1275
        %v3249 = vunpack.c.l.b16 %v1276
        %v3250 = vunpack.c.l.b16 %v1277
        %v3251 = vunpack.c.h.b16 %v1277
        %v3252 = vunpack.c.l.b16 %v1278
        %v3253 = vunpack.c.h.b16 %v1278
        %v3254 = vunpack.c.l.b16 %v1279
        %v3255 = vunpack.c.h.b16 %v1279
        %v3256 = vunpack.c.l.b16 %v1280
        %v3257 = vunpack.c.h.b16 %v1280
        %v3258 = vunpack.c.l.b16 %v1281
        %v3259 = vunpack.c.h.b16 %v1281
        %v3260 = vunpack.c.l.b16 %v1282
        %v3261 = vunpack.c.h.b16 %v1282
        %v3262 = vunpack.c.l.b16 %v1283
        %v3263 = vunpack.c.h.b16 %v1283
        %v3264 = vunpack.c.l.b16 %v1284
        %v3265 = vunpack.c.h.b16 %v1284
        %v3266 = vunpack.c.l.b16 %v1285
        %v3267 = vunpack.c.h.b16 %v1285
        %v3268 = vunpack.c.l.b16 %v1286
        %v3269 = vunpack.c.h.b16 %v1286
        %v3270 = vunpack.c.l.b16 %v1287
        %v3271 = vunpack.c.h.b16 %v1287
        %v3272 = vunpack.c.l.b16 %v1288
        %v3273 = vunpack.c.h.b16 %v1288
        %v3274 = vunpack.c.l.b16 %v1289
        %v3275 = vunpack.c.l.b16 %v1290
        %v3276 = vunpack.c.h.b16 %v1290
        %v3277 = vunpack.c.l.b16 %v1291
        %v3278 = vunpack.c.h.b16 %v1291
        %v3279 = vunpack.c.l.b16 %v1292
        %v3280 = vunpack.c.h.b16 %v1292
        %v3281 = vunpack.c.l.b16 %v1293
        %v3282 = vunpack.c.h.b16 %v1293
        %v3283 = vunpack.c.l.b16 %v1294
        %v3284 = vunpack.c.h.b16 %v1294
        %v3285 = vunpack.c.l.b16 %v1295
        %v3286 = vunpack.c.h.b16 %v1295
        %v3287 = vunpack.c.l.b16 %v1296
        %v3288 = vunpack.c.h.b16 %v1296
        %v3289 = vunpack.c.l.b16 %v1297
        %v3290 = vunpack.c.h.b16 %v1297
        %v3291 = vunpack.c.l.b16 %v1298
        %v3292 = vunpack.c.h.b16 %v1298
        %v3293 = vunpack.c.l.b16 %v1299
        %v3294 = vunpack.c.h.b16 %v1299
        %v3295 = vunpack.c.l.b16 %v1300
        %v3296 = vunpack.c.h.b16 %v1300
        %v3297 = vunpack.c.l.b16 %v1301
        %v3298 = vunpack.c.h.b16 %v1301
        %v3299 = vunpack.c.l.b16 %v1302
        %v3300 = vunpack.c.l.b16 %v1303
        %v3301 = vunpack.c.h.b16 %v1303
        %v3302 = vunpack.c.l.b16 %v1304
        %v3303 = vunpack.c.h.b16 %v1304
        %v3304 = vunpack.c.l.b16 %v1305
        %v3305 = vunpack.c.h.b16 %v1305
        %v3306 = vunpack.c.l.b16 %v1306
        %v3307 = vunpack.c.h.b16 %v1306
        %v3308 = vunpack.c.l.b16 %v1307
        %v3309 = vunpack.c.h.b16 %v1307
        %v3310 = vunpack.c.l.b16 %v1308
        %v3311 = vunpack.c.h.b16 %v1308
        %v3312 = vunpack.c.l.b16 %v1309
        %v3313 = vunpack.c.h.b16 %v1309
        %v3314 = vunpack.c.l.b16 %v1310
        %v3315 = vunpack.c.h.b16 %v1310
        %v3316 = vunpack.c.l.b16 %v1311
        %v3317 = vunpack.c.h.b16 %v1311
        %v3318 = vunpack.c.l.b16 %v1312
        %v3319 = vunpack.c.h.b16 %v1312
        %v3320 = vunpack.c.l.b16 %v1313
        %v3321 = vunpack.c.h.b16 %v1313
        %v3322 = vunpack.c.l.b16 %v1314
        %v3323 = vunpack.c.h.b16 %v1314
        %v3324 = vunpack.c.l.b16 %v1315
        %v3325 = vunpack.c.l.b16 %v1316
        %v3326 = vunpack.c.h.b16 %v1316
        %v3327 = vunpack.c.l.b16 %v1317
        %v3328 = vunpack.c.h.b16 %v1317
        %v3329 = vunpack.c.l.b16 %v1318
        %v3330 = vunpack.c.h.b16 %v1318
        %v3331 = vunpack.c.l.b16 %v1319
        %v3332 = vunpack.c.h.b16 %v1319
        %v3333 = vunpack.c.l.b16 %v1320
        %v3334 = vunpack.c.h.b16 %v1320
        %v3335 = vunpack.c.l.b16 %v1321
        %v3336 = vunpack.c.h.b16 %v1321
        %v3337 = vunpack.c.l.b16 %v1322
        %v3338 = vunpack.c.h.b16 %v1322
        %v3339 = vunpack.c.l.b16 %v1323
        %v3340 = vunpack.c.h.b16 %v1323
        %v3341 = vunpack.c.l.b16 %v1324
        %v3342 = vunpack.c.h.b16 %v1324
        %v3343 = vunpack.c.l.b16 %v1325
        %v3344 = vunpack.c.h.b16 %v1325
        %v3345 = vunpack.c.l.b16 %v1326
        %v3346 = vunpack.c.h.b16 %v1326
        %v3347 = vunpack.c.l.b16 %v1327
        %v3348 = vunpack.c.h.b16 %v1327
        %v3349 = vunpack.c.l.b16 %v1328
        %v3350 = vunpack.c.l.b16 %v1329
        %v3351 = vunpack.c.h.b16 %v1329
        %v3352 = vunpack.c.l.b16 %v1330
        %v3353 = vunpack.c.h.b16 %v1330
        %v3354 = vunpack.c.l.b16 %v1331
        %v3355 = vunpack.c.h.b16 %v1331
        %v3356 = vunpack.c.l.b16 %v1332
        %v3357 = vunpack.c.h.b16 %v1332
        %v3358 = vunpack.c.l.b16 %v1333
        %v3359 = vunpack.c.h.b16 %v1333
        %v3360 = vunpack.c.l.b16 %v1334
        %v3361 = vunpack.c.h.b16 %v1334
        %v3362 = vunpack.c.l.b16 %v1335
        %v3363 = vunpack.c.h.b16 %v1335
        %v3364 = vunpack.c.l.b16 %v1336
        %v3365 = vunpack.c.h.b16 %v1336
        %v3366 = vunpack.c.l.b16 %v1337
        %v3367 = vunpack.c.h.b16 %v1337
        %v3368 = vunpack.c.l.b16 %v1338
        %v3369 = vunpack.c.h.b16 %v1338
        %v3370 = vunpack.c.l.b16 %v1339
        %v3371 = vunpack.c.h.b16 %v1339
        %v3372 = vunpack.c.l.b16 %v1340
        %v3373 = vunpack.c.h.b16 %v1340
        %v3374 = vunpack.c.l.b16 %v1341
        %v3375 = vpack.c.b16 %v2150, %v2125
        %v3376 = vpack.c.b16 %v2151, %v2126
        %v3377 = vpack.c.b16 %v2152, %v2127
        %v3378 = vpack.c.b16 %v2153, %v2128
        %v3379 = vpack.c.b16 %v2154, %v2129
        %v3380 = vpack.c.b16 %v2155, %v2130
        %v3381 = vpack.c.b16 %v2156, %v2131
        %v3382 = vpack.c.b16 %v2157, %v2132
        %v3383 = vpack.c.b16 %v2158, %v2133
        %v3384 = vpack.c.b16 %v2159, %v2134
        %v3385 = vpack.c.b16 %v2160, %v2135
        %v3386 = vpack.c.b16 %v2161, %v2136
        %v3387 = vpack.c.b16 %v2162, %v2137
        %v3388 = vpack.c.b16 %v2163, %v2138
        %v3389 = vpack.c.b16 %v2164, %v2139
        %v3390 = vpack.c.b16 %v2165, %v2140
        %v3391 = vpack.c.b16 %v2166, %v2141
        %v3392 = vpack.c.b16 %v2167, %v2142
        %v3393 = vpack.c.b16 %v2168, %v2143
        %v3394 = vpack.c.b16 %v2169, %v2144
        %v3395 = vpack.c.b16 %v2170, %v2145
        %v3396 = vpack.c.b16 %v2171, %v2146
        %v3397 = vpack.c.b16 %v2172, %v2147
        %v3398 = vpack.c.b16 %v2173, %v2148
        %v3399 = vpack.c.b16 %v2174, %v2149
        %v3400 = vpack.c.b16 %v2200, %v2175
        %v3401 = vpack.c.b16 %v2201, %v2176
        %v3402 = vpack.c.b16 %v2202, %v2177
        %v3403 = vpack.c.b16 %v2203, %v2178
        %v3404 = vpack.c.b16 %v2204, %v2179
        %v3405 = vpack.c.b16 %v2205, %v2180
        %v3406 = vpack.c.b16 %v2206, %v2181
        %v3407 = vpack.c.b16 %v2207, %v2182
        %v3408 = vpack.c.b16 %v2208, %v2183
        %v3409 = vpack.c.b16 %v2209, %v2184
        %v3410 = vpack.c.b16 %v2210, %v2185
        %v3411 = vpack.c.b16 %v2211, %v2186
        %v3412 = vpack.c.b16 %v2212, %v2187
        %v3413 = vpack.c.b16 %v2213, %v2188
        %v3414 = vpack.c.b16 %v2214, %v2189
        %v3415 = vpack.c.b16 %v2215, %v2190
        %v3416 = vpack.c.b16 %v2216, %v2191
        %v3417 = vpack.c.b16 %v2217, %v2192
        %v3418 = vpack.c.b16 %v2218, %v2193
        %v3419 = vpack.c.b16 %v2219, %v2194
        %v3420 = vpack.c.b16 %v2220, %v2195
        %v3421 = vpack.c.b16 %v2221, %v2196
        %v3422 = vpack.c.b16 %v2222, %v2197
        %v3423 = vpack.c.b16 %v2223, %v2198
        %v3424 = vpack.c.b16 %v2224, %v2199
        %v3425 = vpack.c.b16 %v2250, %v2225
        %v3426 = vpack.c.b16 %v2251, %v2226
        %v3427 = vpack.c.b16 %v2252, %v2227
        %v3428 = vpack.c.b16 %v2253, %v2228
        %v3429 = vpack.c.b16 %v2254, %v2229
        %v3430 = vpack.c.b16 %v2255, %v2230
        %v3431 = vpack.c.b16 %v2256, %v2231
        %v3432 = vpack.c.b16 %v2257, %v2232
        %v3433 = vpack.c.b16 %v2258, %v2233
        %v3434 = vpack.c.b16 %v2259, %v2234
        %v3435 = vpack.c.b16 %v2260, %v2235
        %v3436 = vpack.c.b16 %v2261, %v2236
        %v3437 = vpack.c.b16 %v2262, %v2237
        %v3438 = vpack.c.b16 %v2263, %v2238
        %v3439 = vpack.c.b16 %v2264, %v2239
        %v3440 = vpack.c.b16 %v2265, %v2240
        %v3441 = vpack.c.b16 %v2266, %v2241
        %v3442 = vpack.c.b16 %v2267, %v2242
        %v3443 = vpack.c.b16 %v2268, %v2243
        %v3444 = vpack.c.b16 %v2269, %v2244
        %v3445 = vpack.c.b16 %v2270, %v2245
        %v3446 = vpack.c.b16 %v2271, %v2246
        %v3447 = vpack.c.b16 %v2272, %v2247
        %v3448 = vpack.c.b16 %v2273, %v2248
        %v3449 = vpack.c.b16 %v2274, %v2249
        %v3450 = vpack.c.b16 %v2300, %v2275
        %v3451 = vpack.c.b16 %v2301, %v2276
        %v3452 = vpack.c.b16 %v2302, %v2277
        %v3453 = vpack.c.b16 %v2303, %v2278
        %v3454 = vpack.c.b16 %v2304, %v2279
        %v3455 = vpack.c.b16 %v2305, %v2280
        %v3456 = vpack.c.b16 %v2306, %v2281
        %v3457 = vpack.c.b16 %v2307, %v2282
        %v3458 = vpack.c.b16 %v2308, %v2283
        %v3459 = vpack.c.b16 %v2309, %v2284
        %v3460 = vpack.c.b16 %v2310, %v2285
        %v3461 = vpack.c.b16 %v2311, %v2286
        %v3462 = vpack.c.b16 %v2312, %v2287
        %v3463 = vpack.c.b16 %v2313, %v2288
        %v3464 = vpack.c.b16 %v2314, %v2289
        %v3465 = vpack.c.b16 %v2315, %v2290
        %v3466 = vpack.c.b16 %v2316, %v2291
        %v3467 = vpack.c.b16 %v2317, %v2292
        %v3468 = vpack.c.b16 %v2318, %v2293
        %v3469 = vpack.c.b16 %v2319, %v2294
        %v3470 = vpack.c.b16 %v2320, %v2295
        %v3471 = vpack.c.b16 %v2321, %v2296
        %v3472 = vpack.c.b16 %v2322, %v2297
        %v3473 = vpack.c.b16 %v2323, %v2298
        %v3474 = vpack.c.b16 %v2324, %v2299
        %v3475 = vpack.c.b16 %v2350, %v2325
        %v3476 = vpack.c.b16 %v2351, %v2326
        %v3477 = vpack.c.b16 %v2352, %v2327
        %v3478 = vpack.c.b16 %v2353, %v2328
        %v3479 = vpack.c.b16 %v2354, %v2329
        %v3480 = vpack.c.b16 %v2355, %v2330
        %v3481 = vpack.c.b16 %v2356, %v2331
        %v3482 = vpack.c.b16 %v2357, %v2332
        %v3483 = vpack.c.b16 %v2358, %v2333
        %v3484 = vpack.c.b16 %v2359, %v2334
        %v3485 = vpack.c.b16 %v2360, %v2335
        %v3486 = vpack.c.b16 %v2361, %v2336
        %v3487 = vpack.c.b16 %v2362, %v2337
        %v3488 = vpack.c.b16 %v2363, %v2338
        %v3489 = vpack.c.b16 %v2364, %v2339
        %v3490 = vpack.c.b16 %v2365, %v2340
        %v3491 = vpack.c.b16 %v2366, %v2341
        %v3492 = vpack.c.b16 %v2367, %v2342
        %v3493 = vpack.c.b16 %v2368, %v2343
        %v3494 = vpack.c.b16 %v2369, %v2344
        %v3495 = vpack.c.b16 %v2370, %v2345
        %v3496 = vpack.c.b16 %v2371, %v2346
        %v3497 = vpack.c.b16 %v2372, %v2347
        %v3498 = vpack.c.b16 %v2373, %v2348
        %v3499 = vpack.c.b16 %v2374, %v2349
        %v3500 = vpack.c.b16 %v2400, %v2375
        %v3501 = vpack.c.b16 %v2401, %v2376
        %v3502 = vpack.c.b16 %v2402, %v2377
        %v3503 = vpack.c.b16 %v2403, %v2378
        %v3504 = vpack.c.b16 %v2404, %v2379
        %v3505 = vpack.c.b16 %v2405, %v2380
        %v3506 = vpack.c.b16 %v2406, %v2381
        %v3507 = vpack.c.b16 %v2407, %v2382
        %v3508 = vpack.c.b16 %v2408, %v2383
        %v3509 = vpack.c.b16 %v2409, %v2384
        %v3510 = vpack.c.b16 %v2410, %v2385
        %v3511 = vpack.c.b16 %v2411, %v2386
        %v3512 = vpack.c.b16 %v2412, %v2387
        %v3513 = vpack.c.b16 %v2413, %v2388
        %v3514 = vpack.c.b16 %v2414, %v2389
        %v3515 = vpack.c.b16 %v2415, %v2390
        %v3516 = vpack.c.b16 %v2416, %v2391
        %v3517 = vpack.c.b16 %v2417, %v2392
        %v3518 = vpack.c.b16 %v2418, %v2393
        %v3519 = vpack.c.b16 %v2419, %v2394
        %v3520 = vpack.c.b16 %v2420, %v2395
        %v3521 = vpack.c.b16 %v2421, %v2396
        %v3522 = vpack.c.b16 %v2422, %v2397
        %v3523 = vpack.c.b16 %v2423, %v2398
        %v3524 = vpack.c.b16 %v2424, %v2399
        %v3525 = vpack.c.b16 %v2450, %v2425
        %v3526 = vpack.c.b16 %v2451, %v2426
        %v3527 = vpack.c.b16 %v2452, %v2427
        %v3528 = vpack.c.b16 %v2453, %v2428
        %v3529 = vpack.c.b16 %v2454, %v2429
        %v3530 = vpack.c.b16 %v2455, %v2430
        %v3531 = vpack.c.b16 %v2456, %v2431
        %v3532 = vpack.c.b16 %v2457, %v2432
        %v3533 = vpack.c.b16 %v2458, %v2433
        %v3534 = vpack.c.b16 %v2459, %v2434
        %v3535 = vpack.c.b16 %v2460, %v2435
        %v3536 = vpack.c.b16 %v2461, %v2436
        %v3537 = vpack.c.b16 %v2462, %v2437
        %v3538 = vpack.c.b16 %v2463, %v2438
        %v3539 = vpack.c.b16 %v2464, %v2439
        %v3540 = vpack.c.b16 %v2465, %v2440
        %v3541 = vpack.c.b16 %v2466, %v2441
        %v3542 = vpack.c.b16 %v2467, %v2442
        %v3543 = vpack.c.b16 %v2468, %v2443
        %v3544 = vpack.c.b16 %v2469, %v2444
        %v3545 = vpack.c.b16 %v2470, %v2445
        %v3546 = vpack.c.b16 %v2471, %v2446
        %v3547 = vpack.c.b16 %v2472, %v2447
        %v3548 = vpack.c.b16 %v2473, %v2448
        %v3549 = vpack.c.b16 %v2474, %v2449
        %v3550 = vpack.c.b16 %v2500, %v2475
        %v3551 = vpack.c.b16 %v2501, %v2476
        %v3552 = vpack.c.b16 %v2502, %v2477
        %v3553 = vpack.c.b16 %v2503, %v2478
        %v3554 = vpack.c.b16 %v2504, %v2479
        %v3555 = vpack.c.b16 %v2505, %v2480
        %v3556 = vpack.c.b16 %v2506, %v2481
        %v3557 = vpack.c.b16 %v2507, %v2482
        %v3558 = vpack.c.b16 %v2508, %v2483
        %v3559 = vpack.c.b16 %v2509, %v2484
        %v3560 = vpack.c.b16 %v2510, %v2485
        %v3561 = vpack.c.b16 %v2511, %v2486
        %v3562 = vpack.c.b16 %v2512, %v2487
        %v3563 = vpack.c.b16 %v2513, %v2488
        %v3564 = vpack.c.b16 %v2514, %v2489
        %v3565 = vpack.c.b16 %v2515, %v2490
        %v3566 = vpack.c.b16 %v2516, %v2491
        %v3567 = vpack.c.b16 %v2517, %v2492
        %v3568 = vpack.c.b16 %v2518, %v2493
        %v3569 = vpack.c.b16 %v2519, %v2494
        %v3570 = vpack.c.b16 %v2520, %v2495
        %v3571 = vpack.c.b16 %v2521, %v2496
        %v3572 = vpack.c.b16 %v2522, %v2497
        %v3573 = vpack.c.b16 %v2523, %v2498
        %v3574 = vpack.c.b16 %v2524, %v2499
        %v3575 = vpack.c.b16 %v2550, %v2525
        %v3576 = vpack.c.b16 %v2551, %v2526
        %v3577 = vpack.c.b16 %v2552, %v2527
        %v3578 = vpack.c.b16 %v2553, %v2528
        %v3579 = vpack.c.b16 %v2554, %v2529
        %v3580 = vpack.c.b16 %v2555, %v2530
        %v3581 = vpack.c.b16 %v2556, %v2531
        %v3582 = vpack.c.b16 %v2557, %v2532
        %v3583 = vpack.c.b16 %v2558, %v2533
        %v3584 = vpack.c.b16 %v2559, %v2534
        %v3585 = vpack.c.b16 %v2560, %v2535
        %v3586 = vpack.c.b16 %v2561, %v2536
        %v3587 = vpack.c.b16 %v2562, %v2537
        %v3588 = vpack.c.b16 %v2563, %v2538
        %v3589 = vpack.c.b16 %v2564, %v2539
        %v3590 = vpack.c.b16 %v2565, %v2540
        %v3591 = vpack.c.b16 %v2566, %v2541
        %v3592 = vpack.c.b16 %v2567, %v2542
        %v3593 = vpack.c.b16 %v2568, %v2543
        %v3594 = vpack.c.b16 %v2569, %v2544
        %v3595 = vpack.c.b16 %v2570, %v2545
        %v3596 = vpack.c.b16 %v2571, %v2546
        %v3597 = vpack.c.b16 %v2572, %v2547
        %v3598 = vpack.c.b16 %v2573, %v2548
        %v3599 = vpack.c.b16 %v2574, %v2549
        %v3600 = vpack.c.b16 %v2600, %v2575
        %v3601 = vpack.c.b16 %v2601, %v2576
        %v3602 = vpack.c.b16 %v2602, %v2577
        %v3603 = vpack.c.b16 %v2603, %v2578
        %v3604 = vpack.c.b16 %v2604, %v2579
        %v3605 = vpack.c.b16 %v2605, %v2580
        %v3606 = vpack.c.b16 %v2606, %v2581
        %v3607 = vpack.c.b16 %v2607, %v2582
        %v3608 = vpack.c.b16 %v2608, %v2583
        %v3609 = vpack.c.b16 %v2609, %v2584
        %v3610 = vpack.c.b16 %v2610, %v2585
        %v3611 = vpack.c.b16 %v2611, %v2586
        %v3612 = vpack.c.b16 %v2612, %v2587
        %v3613 = vpack.c.b16 %v2613, %v2588
        %v3614 = vpack.c.b16 %v2614, %v2589
        %v3615 = vpack.c.b16 %v2615, %v2590
        %v3616 = vpack.c.b16 %v2616, %v2591
        %v3617 = vpack.c.b16 %v2617, %v2592
        %v3618 = vpack.c.b16 %v2618, %v2593
        %v3619 = vpack.c.b16 %v2619, %v2594
        %v3620 = vpack.c.b16 %v2620, %v2595
        %v3621 = vpack.c.b16 %v2621, %v2596
        %v3622 = vpack.c.b16 %v2622, %v2597
        %v3623 = vpack.c.b16 %v2623, %v2598
        %v3624 = vpack.c.b16 %v2624, %v2599
        %v3625 = vpack.c.b16 %v2650, %v2625
        %v3626 = vpack.c.b16 %v2651, %v2626
        %v3627 = vpack.c.b16 %v2652, %v2627
        %v3628 = vpack.c.b16 %v2653, %v2628
        %v3629 = vpack.c.b16 %v2654, %v2629
        %v3630 = vpack.c.b16 %v2655, %v2630
        %v3631 = vpack.c.b16 %v2656, %v2631
        %v3632 = vpack.c.b16 %v2657, %v2632
        %v3633 = vpack.c.b16 %v2658, %v2633
        %v3634 = vpack.c.b16 %v2659, %v2634
        %v3635 = vpack.c.b16 %v2660, %v2635
        %v3636 = vpack.c.b16 %v2661, %v2636
        %v3637 = vpack.c.b16 %v2662, %v2637
        %v3638 = vpack.c.b16 %v2663, %v2638
        %v3639 = vpack.c.b16 %v2664, %v2639
        %v3640 = vpack.c.b16 %v2665, %v2640
        %v3641 = vpack.c.b16 %v2666, %v2641
        %v3642 = vpack.c.b16 %v2667, %v2642
        %v3643 = vpack.c.b16 %v2668, %v2643
        %v3644 = vpack.c.b16 %v2669, %v2644
        %v3645 = vpack.c.b16 %v2670, %v2645
        %v3646 = vpack.c.b16 %v2671, %v2646
        %v3647 = vpack.c.b16 %v2672, %v2647
        %v3648 = vpack.c.b16 %v2673, %v2648
        %v3649 = vpack.c.b16 %v2674, %v2649
        %v3650 = vpack.c.b16 %v2700, %v2675
        %v3651 = vpack.c.b16 %v2701, %v2676
        %v3652 = vpack.c.b16 %v2702, %v2677
        %v3653 = vpack.c.b16 %v2703, %v2678
        %v3654 = vpack.c.b16 %v2704, %v2679
        %v3655 = vpack.c.b16 %v2705, %v2680
        %v3656 = vpack.c.b16 %v2706, %v2681
        %v3657 = vpack.c.b16 %v2707, %v2682
        %v3658 = vpack.c.b16 %v2708, %v2683
        %v3659 = vpack.c.b16 %v2709, %v2684
        %v3660 = vpack.c.b16 %v2710, %v2685
        %v3661 = vpack.c.b16 %v2711, %v2686
        %v3662 = vpack.c.b16 %v2712, %v2687
        %v3663 = vpack.c.b16 %v2713, %v2688
        %v3664 = vpack.c.b16 %v2714, %v2689
        %v3665 = vpack.c.b16 %v2715, %v2690
        %v3666 = vpack.c.b16 %v2716, %v2691
        %v3667 = vpack.c.b16 %v2717, %v2692
        %v3668 = vpack.c.b16 %v2718, %v2693
        %v3669 = vpack.c.b16 %v2719, %v2694
        %v3670 = vpack.c.b16 %v2720, %v2695
        %v3671 = vpack.c.b16 %v2721, %v2696
        %v3672 = vpack.c.b16 %v2722, %v2697
        %v3673 = vpack.c.b16 %v2723, %v2698
        %v3674 = vpack.c.b16 %v2724, %v2699
        %v3675 = vpack.c.b16 %v2750, %v2725
        %v3676 = vpack.c.b16 %v2751, %v2726
        %v3677 = vpack.c.b16 %v2752, %v2727
        %v3678 = vpack.c.b16 %v2753, %v2728
        %v3679 = vpack.c.b16 %v2754, %v2729
        %v3680 = vpack.c.b16 %v2755, %v2730
        %v3681 = vpack.c.b16 %v2756, %v2731
        %v3682 = vpack.c.b16 %v2757, %v2732
        %v3683 = vpack.c.b16 %v2758, %v2733
        %v3684 = vpack.c.b16 %v2759, %v2734
        %v3685 = vpack.c.b16 %v2760, %v2735
        %v3686 = vpack.c.b16 %v2761, %v2736
        %v3687 = vpack.c.b16 %v2762, %v2737
        %v3688 = vpack.c.b16 %v2763, %v2738
        %v3689 = vpack.c.b16 %v2764, %v2739
        %v3690 = vpack.c.b16 %v2765, %v2740
        %v3691 = vpack.c.b16 %v2766, %v2741
        %v3692 = vpack.c.b16 %v2767, %v2742
        %v3693 = vpack.c.b16 %v2768, %v2743
        %v3694 = vpack.c.b16 %v2769, %v2744
        %v3695 = vpack.c.b16 %v2770, %v2745
        %v3696 = vpack.c.b16 %v2771, %v2746
        %v3697 = vpack.c.b16 %v2772, %v2747
        %v3698 = vpack.c.b16 %v2773, %v2748
        %v3699 = vpack.c.b16 %v2774, %v2749
        %v3700 = vpack.c.b16 %v2800, %v2775
        %v3701 = vpack.c.b16 %v2801, %v2776
        %v3702 = vpack.c.b16 %v2802, %v2777
        %v3703 = vpack.c.b16 %v2803, %v2778
        %v3704 = vpack.c.b16 %v2804, %v2779
        %v3705 = vpack.c.b16 %v2805, %v2780
        %v3706 = vpack.c.b16 %v2806, %v2781
        %v3707 = vpack.c.b16 %v2807, %v2782
        %v3708 = vpack.c.b16 %v2808, %v2783
        %v3709 = vpack.c.b16 %v2809, %v2784
        %v3710 = vpack.c.b16 %v2810, %v2785
        %v3711 = vpack.c.b16 %v2811, %v2786
        %v3712 = vpack.c.b16 %v2812, %v2787
        %v3713 = vpack.c.b16 %v2813, %v2788
        %v3714 = vpack.c.b16 %v2814, %v2789
        %v3715 = vpack.c.b16 %v2815, %v2790
        %v3716 = vpack.c.b16 %v2816, %v2791
        %v3717 = vpack.c.b16 %v2817, %v2792
        %v3718 = vpack.c.b16 %v2818, %v2793
        %v3719 = vpack.c.b16 %v2819, %v2794
        %v3720 = vpack.c.b16 %v2820, %v2795
        %v3721 = vpack.c.b16 %v2821, %v2796
        %v3722 = vpack.c.b16 %v2822, %v2797
        %v3723 = vpack.c.b16 %v2823, %v2798
        %v3724 = vpack.c.b16 %v2824, %v2799
        %v3725 = vpack.c.b16 %v2850, %v2825
        %v3726 = vpack.c.b16 %v2851, %v2826
        %v3727 = vpack.c.b16 %v2852, %v2827
        %v3728 = vpack.c.b16 %v2853, %v2828
        %v3729 = vpack.c.b16 %v2854, %v2829
        %v3730 = vpack.c.b16 %v2855, %v2830
        %v3731 = vpack.c.b16 %v2856, %v2831
        %v3732 = vpack.c.b16 %v2857, %v2832
        %v3733 = vpack.c.b16 %v2858, %v2833
        %v3734 = vpack.c.b16 %v2859, %v2834
        %v3735 = vpack.c.b16 %v2860, %v2835
        %v3736 = vpack.c.b16 %v2861, %v2836
        %v3737 = vpack.c.b16 %v2862, %v2837
        %v3738 = vpack.c.b16 %v2863, %v2838
        %v3739 = vpack.c.b16 %v2864, %v2839
        %v3740 = vpack.c.b16 %v2865, %v2840
        %v3741 = vpack.c.b16 %v2866, %v2841
        %v3742 = vpack.c.b16 %v2867, %v2842
        %v3743 = vpack.c.b16 %v2868, %v2843
        %v3744 = vpack.c.b16 %v2869, %v2844
        %v3745 = vpack.c.b16 %v2870, %v2845
        %v3746 = vpack.c.b16 %v2871, %v2846
        %v3747 = vpack.c.b16 %v2872, %v2847
        %v3748 = vpack.c.b16 %v2873, %v2848
        %v3749 = vpack.c.b16 %v2874, %v2849
        %v3750 = vpack.c.b16 %v2900, %v2875
        %v3751 = vpack.c.b16 %v2901, %v2876
        %v3752 = vpack.c.b16 %v2902, %v2877
        %v3753 = vpack.c.b16 %v2903, %v2878
        %v3754 = vpack.c.b16 %v2904, %v2879
        %v3755 = vpack.c.b16 %v2905, %v2880
        %v3756 = vpack.c.b16 %v2906, %v2881
        %v3757 = vpack.c.b16 %v2907, %v2882
        %v3758 = vpack.c.b16 %v2908, %v2883
        %v3759 = vpack.c.b16 %v2909, %v2884
        %v3760 = vpack.c.b16 %v2910, %v2885
        %v3761 = vpack.c.b16 %v2911, %v2886
        %v3762 = vpack.c.b16 %v2912, %v2887
        %v3763 = vpack.c.b16 %v2913, %v2888
        %v3764 = vpack.c.b16 %v2914, %v2889
        %v3765 = vpack.c.b16 %v2915, %v2890
        %v3766 = vpack.c.b16 %v2916, %v2891
        %v3767 = vpack.c.b16 %v2917, %v2892
        %v3768 = vpack.c.b16 %v2918, %v2893
        %v3769 = vpack.c.b16 %v2919, %v2894
        %v3770 = vpack.c.b16 %v2920, %v2895
        %v3771 = vpack.c.b16 %v2921, %v2896
        %v3772 = vpack.c.b16 %v2922, %v2897
        %v3773 = vpack.c.b16 %v2923, %v2898
        %v3774 = vpack.c.b16 %v2924, %v2899
        %v3775 = vpack.c.b16 %v2950, %v2925
        %v3776 = vpack.c.b16 %v2951, %v2926
        %v3777 = vpack.c.b16 %v2952, %v2927
        %v3778 = vpack.c.b16 %v2953, %v2928
        %v3779 = vpack.c.b16 %v2954, %v2929
        %v3780 = vpack.c.b16 %v2955, %v2930
        %v3781 = vpack.c.b16 %v2956, %v2931
        %v3782 = vpack.c.b16 %v2957, %v2932
        %v3783 = vpack.c.b16 %v2958, %v2933
        %v3784 = vpack.c.b16 %v2959, %v2934
        %v3785 = vpack.c.b16 %v2960, %v2935
        %v3786 = vpack.c.b16 %v2961, %v2936
        %v3787 = vpack.c.b16 %v2962, %v2937
        %v3788 = vpack.c.b16 %v2963, %v2938
        %v3789 = vpack.c.b16 %v2964, %v2939
        %v3790 = vpack.c.b16 %v2965, %v2940
        %v3791 = vpack.c.b16 %v2966, %v2941
        %v3792 = vpack.c.b16 %v2967, %v2942
        %v3793 = vpack.c.b16 %v2968, %v2943
        %v3794 = vpack.c.b16 %v2969, %v2944
        %v3795 = vpack.c.b16 %v2970, %v2945
        %v3796 = vpack.c.b16 %v2971, %v2946
        %v3797 = vpack.c.b16 %v2972, %v2947
        %v3798 = vpack.c.b16 %v2973, %v2948
        %v3799 = vpack.c.b16 %v2974, %v2949
        %v3800 = vpack.c.b16 %v3000, %v2975
        %v3801 = vpack.c.b16 %v3001, %v2976
        %v3802 = vpack.c.b16 %v3002, %v2977
        %v3803 = vpack.c.b16 %v3003, %v2978
        %v3804 = vpack.c.b16 %v3004, %v2979
        %v3805 = vpack.c.b16 %v3005, %v2980
        %v3806 = vpack.c.b16 %v3006, %v2981
        %v3807 = vpack.c.b16 %v3007, %v2982
        %v3808 = vpack.c.b16 %v3008, %v2983
        %v3809 = vpack.c.b16 %v3009, %v2984
        %v3810 = vpack.c.b16 %v3010, %v2985
        %v3811 = vpack.c.b16 %v3011, %v2986
        %v3812 = vpack.c.b16 %v3012, %v2987
        %v3813 = vpack.c.b16 %v3013, %v2988
        %v3814 = vpack.c.b16 %v3014, %v2989
        %v3815 = vpack.c.b16 %v3015, %v2990
        %v3816 = vpack.c.b16 %v3016, %v2991
        %v3817 = vpack.c.b16 %v3017, %v2992
        %v3818 = vpack.c.b16 %v3018, %v2993
        %v3819 = vpack.c.b16 %v3019, %v2994
        %v3820 = vpack.c.b16 %v3020, %v2995
        %v3821 = vpack.c.b16 %v3021, %v2996
        %v3822 = vpack.c.b16 %v3022, %v2997
        %v3823 = vpack.c.b16 %v3023, %v2998
        %v3824 = vpack.c.b16 %v3024, %v2999
        %v3825 = vpack.c.b16 %v3050, %v3025
        %v3826 = vpack.c.b16 %v3051, %v3026
        %v3827 = vpack.c.b16 %v3052, %v3027
        %v3828 = vpack.c.b16 %v3053, %v3028
        %v3829 = vpack.c.b16 %v3054, %v3029
        %v3830 = vpack.c.b16 %v3055, %v3030
        %v3831 = vpack.c.b16 %v3056, %v3031
        %v3832 = vpack.c.b16 %v3057, %v3032
        %v3833 = vpack.c.b16 %v3058, %v3033
        %v3834 = vpack.c.b16 %v3059, %v3034
        %v3835 = vpack.c.b16 %v3060, %v3035
        %v3836 = vpack.c.b16 %v3061, %v3036
        %v3837 = vpack.c.b16 %v3062, %v3037
        %v3838 = vpack.c.b16 %v3063, %v3038
        %v3839 = vpack.c.b16 %v3064, %v3039
        %v3840 = vpack.c.b16 %v3065, %v3040
        %v3841 = vpack.c.b16 %v3066, %v3041
        %v3842 = vpack.c.b16 %v3067, %v3042
        %v3843 = vpack.c.b16 %v3068, %v3043
        %v3844 = vpack.c.b16 %v3069, %v3044
        %v3845 = vpack.c.b16 %v3070, %v3045
        %v3846 = vpack.c.b16 %v3071, %v3046
        %v3847 = vpack.c.b16 %v3072, %v3047
        %v3848 = vpack.c.b16 %v3073, %v3048
        %v3849 = vpack.c.b16 %v3074, %v3049
        %v3850 = vpack.c.b16 %v3100, %v3075
        %v3851 = vpack.c.b16 %v3101, %v3076
        %v3852 = vpack.c.b16 %v3102, %v3077
        %v3853 = vpack.c.b16 %v3103, %v3078
        %v3854 = vpack.c.b16 %v3104, %v3079
        %v3855 = vpack.c.b16 %v3105, %v3080
        %v3856 = vpack.c.b16 %v3106, %v3081
        %v3857 = vpack.c.b16 %v3107, %v3082
        %v3858 = vpack.c.b16 %v3108, %v3083
        %v3859 = vpack.c.b16 %v3109, %v3084
        %v3860 = vpack.c.b16 %v3110, %v3085
        %v3861 = vpack.c.b16 %v3111, %v3086
        %v3862 = vpack.c.b16 %v3112, %v3087
        %v3863 = vpack.c.b16 %v3113, %v3088
        %v3864 = vpack.c.b16 %v3114, %v3089
        %v3865 = vpack.c.b16 %v3115, %v3090
        %v3866 = vpack.c.b16 %v3116, %v3091
        %v3867 = vpack.c.b16 %v3117, %v3092
        %v3868 = vpack.c.b16 %v3118, %v3093
        %v3869 = vpack.c.b16 %v3119, %v3094
        %v3870 = vpack.c.b16 %v3120, %v3095
        %v3871 = vpack.c.b16 %v3121, %v3096
        %v3872 = vpack.c.b16 %v3122, %v3097
        %v3873 = vpack.c.b16 %v3123, %v3098
        %v3874 = vpack.c.b16 %v3124, %v3099
        %v3875 = vpack.c.b16 %v3150, %v3125
        %v3876 = vpack.c.b16 %v3151, %v3126
        %v3877 = vpack.c.b16 %v3152, %v3127
        %v3878 = vpack.c.b16 %v3153, %v3128
        %v3879 = vpack.c.b16 %v3154, %v3129
        %v3880 = vpack.c.b16 %v3155, %v3130
        %v3881 = vpack.c.b16 %v3156, %v3131
        %v3882 = vpack.c.b16 %v3157, %v3132
        %v3883 = vpack.c.b16 %v3158, %v3133
        %v3884 = vpack.c.b16 %v3159, %v3134
        %v3885 = vpack.c.b16 %v3160, %v3135
        %v3886 = vpack.c.b16 %v3161, %v3136
        %v3887 = vpack.c.b16 %v3162, %v3137
        %v3888 = vpack.c.b16 %v3163, %v3138
        %v3889 = vpack.c.b16 %v3164, %v3139
        %v3890 = vpack.c.b16 %v3165, %v3140
        %v3891 = vpack.c.b16 %v3166, %v3141
        %v3892 = vpack.c.b16 %v3167, %v3142
        %v3893 = vpack.c.b16 %v3168, %v3143
        %v3894 = vpack.c.b16 %v3169, %v3144
        %v3895 = vpack.c.b16 %v3170, %v3145
        %v3896 = vpack.c.b16 %v3171, %v3146
        %v3897 = vpack.c.b16 %v3172, %v3147
        %v3898 = vpack.c.b16 %v3173, %v3148
        %v3899 = vpack.c.b16 %v3174, %v3149
        %v3900 = vpack.c.b16 %v3200, %v3175
        %v3901 = vpack.c.b16 %v3201, %v3176
        %v3902 = vpack.c.b16 %v3202, %v3177
        %v3903 = vpack.c.b16 %v3203, %v3178
        %v3904 = vpack.c.b16 %v3204, %v3179
        %v3905 = vpack.c.b16 %v3205, %v3180
        %v3906 = vpack.c.b16 %v3206, %v3181
        %v3907 = vpack.c.b16 %v3207, %v3182
        %v3908 = vpack.c.b16 %v3208, %v3183
        %v3909 = vpack.c.b16 %v3209, %v3184
        %v3910 = vpack.c.b16 %v3210, %v3185
        %v3911 = vpack.c.b16 %v3211, %v3186
        %v3912 = vpack.c.b16 %v3212, %v3187
        %v3913 = vpack.c.b16 %v3213, %v3188
        %v3914 = vpack.c.b16 %v3214, %v3189
        %v3915 = vpack.c.b16 %v3215, %v3190
        %v3916 = vpack.c.b16 %v3216, %v3191
        %v3917 = vpack.c.b16 %v3217, %v3192
        %v3918 = vpack.c.b16 %v3218, %v3193
        %v3919 = vpack.c.b16 %v3219, %v3194
        %v3920 = vpack.c.b16 %v3220, %v3195
        %v3921 = vpack.c.b16 %v3221, %v3196
        %v3922 = vpack.c.b16 %v3222, %v3197
        %v3923 = vpack.c.b16 %v3223, %v3198
        %v3924 = vpack.c.b16 %v3224, %v3199
        %v3925 = vpack.c.b16 %v3250, %v3225
        %v3926 = vpack.c.b16 %v3251, %v3226
        %v3927 = vpack.c.b16 %v3252, %v3227
        %v3928 = vpack.c.b16 %v3253, %v3228
        %v3929 = vpack.c.b16 %v3254, %v3229
        %v3930 = vpack.c.b16 %v3255, %v3230
        %v3931 = vpack.c.b16 %v3256, %v3231
        %v3932 = vpack.c.b16 %v3257, %v3232
        %v3933 = vpack.c.b16 %v3258, %v3233
        %v3934 = vpack.c.b16 %v3259, %v3234
        %v3935 = vpack.c.b16 %v3260, %v3235
        %v3936 = vpack.c.b16 %v3261, %v3236
        %v3937 = vpack.c.b16 %v3262, %v3237
        %v3938 = vpack.c.b16 %v3263, %v3238
        %v3939 = vpack.c.b16 %v3264, %v3239
        %v3940 = vpack.c.b16 %v3265, %v3240
        %v3941 = vpack.c.b16 %v3266, %v3241
        %v3942 = vpack.c.b16 %v3267, %v3242
        %v3943 = vpack.c.b16 %v3268, %v3243
        %v3944 = vpack.c.b16 %v3269, %v3244
        %v3945 = vpack.c.b16 %v3270, %v3245
        %v3946 = vpack.c.b16 %v3271, %v3246
        %v3947 = vpack.c.b16 %v3272, %v3247
        %v3948 = vpack.c.b16 %v3273, %v3248
        %v3949 = vpack.c.b16 %v3274, %v3249
        %v3950 = vpack.c.b16 %v3300, %v3275
        %v3951 = vpack.c.b16 %v3301, %v3276
        %v3952 = vpack.c.b16 %v3302, %v3277
        %v3953 = vpack.c.b16 %v3303, %v3278
        %v3954 = vpack.c.b16 %v3304, %v3279
        %v3955 = vpack.c.b16 %v3305, %v3280
        %v3956 = vpack.c.b16 %v3306, %v3281
        %v3957 = vpack.c.b16 %v3307, %v3282
        %v3958 = vpack.c.b16 %v3308, %v3283
        %v3959 = vpack.c.b16 %v3309, %v3284
        %v3960 = vpack.c.b16 %v3310, %v3285
        %v3961 = vpack.c.b16 %v3311, %v3286
        %v3962 = vpack.c.b16 %v3312, %v3287
        %v3963 = vpack.c.b16 %v3313, %v3288
        %v3964 = vpack.c.b16 %v3314, %v3289
        %v3965 = vpack.c.b16 %v3315, %v3290
        %v3966 = vpack.c.b16 %v3316, %v3291
        %v3967 = vpack.c.b16 %v3317, %v3292
        %v3968 = vpack.c.b16 %v3318, %v3293
        %v3969 = vpack.c.b16 %v3319, %v3294
        %v3970 = vpack.c.b16 %v3320, %v3295
        %v3971 = vpack.c.b16 %v3321, %v3296
        %v3972 = vpack.c.b16 %v3322, %v3297
        %v3973 = vpack.c.b16 %v3323, %v3298
        %v3974 = vpack.c.b16 %v3324, %v3299
        %v3975 = vpack.c.b16 %v3350, %v3325
        %v3976 = vpack.c.b16 %v3351, %v3326
        %v3977 = vpack.c.b16 %v3352, %v3327
        %v3978 = vpack.c.b16 %v3353, %v3328
        %v3979 = vpack.c.b16 %v3354, %v3329
        %v3980 = vpack.c.b16 %v3355, %v3330
        %v3981 = vpack.c.b16 %v3356, %v3331
        %v3982 = vpack.c.b16 %v3357, %v3332
        %v3983 = vpack.c.b16 %v3358, %v3333
        %v3984 = vpack.c.b16 %v3359, %v3334
        %v3985 = vpack.c.b16 %v3360, %v3335
        %v3986 = vpack.c.b16 %v3361, %v3336
        %v3987 = vpack.c.b16 %v3362, %v3337
        %v3988 = vpack.c.b16 %v3363, %v3338
        %v3989 = vpack.c.b16 %v3364, %v3339
        %v3990 = vpack.c.b16 %v3365, %v3340
        %v3991 = vpack.c.b16 %v3366, %v3341
        %v3992 = vpack.c.b16 %v3367, %v3342
        %v3993 = vpack.c.b16 %v3368, %v3343
        %v3994 = vpack.c.b16 %v3369, %v3344
        %v3995 = vpack.c.b16 %v3370, %v3345
        %v3996 = vpack.c.b16 %v3371, %v3346
        %v3997 = vpack.c.b16 %v3372, %v3347
        %v3998 = vpack.c.b16 %v3373, %v3348
        %v3999 = vpack.c.b16 %v3374, %v3349
        %vm4625 = vcmask 130048
        %v4627 = vsel %vm4625, %v691, 0
        %4629 = vmatprep.subr.bf16.mxu0 %v3376
        %4630 = vmatpush1.bf16.msra.mxu0 %v3375
        %4631 = vmatprep.subr.bf16.mxu0 %v3401
        %4632 = vmatpush1.bf16.msra.mxu0 %v3400
        %4633 = vmatprep.subr.bf16.mxu0 %v3426
        %4634 = vmatpush1.bf16.msra.mxu0 %v3425
        %4635 = vmatprep.subr.bf16.mxu0 %v3451
        %4636 = vmatpush1.bf16.msra.mxu0 %v3450
        %4637 = vmatprep.subr.bf16.mxu0 %v3476
        %4638 = vmatpush1.bf16.msra.mxu0 %v3475
        %4639 = vmatprep.subr.bf16.mxu0 %v3501
        %4640 = vmatpush1.bf16.msra.mxu0 %v3500
        %4641 = vmatprep.subr.bf16.mxu0 %v3526
        %4642 = vmatpush1.bf16.msra.mxu0 %v3525
        %4643 = vmatprep.subr.bf16.mxu0 %v3551
        %4644 = vmatpush1.bf16.msra.mxu0 %v3550
        %4645 = vmatprep.subr.bf16.mxu0 %v3576
        %4646 = vmatpush1.bf16.msra.mxu0 %v3575
        %4647 = vmatprep.subr.bf16.mxu0 %v3601
        %4648 = vmatpush1.bf16.msra.mxu0 %v3600
        %4649 = vmatprep.subr.bf16.mxu0 %v3626
        %4650 = vmatpush1.bf16.msra.mxu0 %v3625
        %4651 = vmatprep.subr.bf16.mxu0 %v3651
        %4652 = vmatpush1.bf16.msra.mxu0 %v3650
        %4653 = vmatprep.subr.bf16.mxu0 %v3676
        %4654 = vmatpush1.bf16.msra.mxu0 %v3675
        %4655 = vmatprep.subr.bf16.mxu0 %v3701
        %4656 = vmatpush1.bf16.msra.mxu0 %v3700
        %4657 = vmatprep.subr.bf16.mxu0 %v3726
        %4658 = vmatpush1.bf16.msra.mxu0 %v3725
        %4659 = vmatprep.subr.bf16.mxu0 %v3751
        %4660 = vmatpush1.bf16.msra.mxu0 %v3750
        %4661 = vmatprep.mubr.bf16.mxu0 %v689
        %4662 = vmatmul.mubr.bf16.gmra.mrb[0].mxu0 %v688
        %v4663 = vpop.f32.mrb[0].mxu0
        %v4664 = vadd.f32 %v1353, %v4663
        %v4665 = vpop.f32.mrb[0].mxu0
        %v4666 = vadd.f32 %v1357, %v4665
        %v4667 = vpop.f32.mrb[0].mxu0
        %v4668 = vpop.f32.mrb[0].mxu0
        %4669 = vdwg.mxu0
        %4670 = vmatprep.subr.bf16.mxu0 %v3776
        %4671 = vmatpush1.bf16.msra.mxu0 %v3775
        %4672 = vmatprep.subr.bf16.mxu0 %v3801
        %4673 = vmatpush1.bf16.msra.mxu0 %v3800
        %4674 = vmatprep.subr.bf16.mxu0 %v3826
        %4675 = vmatpush1.bf16.msra.mxu0 %v3825
        %4676 = vmatprep.subr.bf16.mxu0 %v3851
        %4677 = vmatpush1.bf16.msra.mxu0 %v3850
        %4678 = vmatprep.subr.bf16.mxu0 %v3876
        %4679 = vmatpush1.bf16.msra.mxu0 %v3875
        %4680 = vmatprep.subr.bf16.mxu0 %v3901
        %4681 = vmatpush1.bf16.msra.mxu0 %v3900
        %4682 = vmatprep.subr.bf16.mxu0 %v3926
        %4683 = vmatpush1.bf16.msra.mxu0 %v3925
        %4684 = vmatprep.subr.bf16.mxu0 %v3951
        %4685 = vmatpush1.bf16.msra.mxu0 %v3950
        %4686 = vmatprep.subr.bf16.mxu0 %v3976
        %4687 = vmatpush1.bf16.msra.mxu0 %v3975
        %4688 = vmatprep.subr.bf16.mxu0 0
        %4689 = vmatpush1.bf16.msra.mxu0 0
        %4690 = vmatprep.subr.bf16.mxu0 0
        %4691 = vmatpush1.bf16.msra.mxu0 0
        %4692 = vmatprep.subr.bf16.mxu0 0
        %4693 = vmatpush1.bf16.msra.mxu0 0
        %4694 = vmatprep.subr.bf16.mxu0 0
        %4695 = vmatpush1.bf16.msra.mxu0 0
        %4696 = vmatprep.subr.bf16.mxu0 0
        %4697 = vmatpush1.bf16.msra.mxu0 0
        %4698 = vmatprep.subr.bf16.mxu0 0
        %4699 = vmatpush1.bf16.msra.mxu0 0
        %4700 = vmatprep.subr.bf16.mxu0 0
        %4701 = vmatpush1.bf16.msra.mxu0 0
        %4702 = vmatprep.mubr.bf16.mxu0 %v4627
        %4703 = vmatmul.mubr.bf16.gmra.mrb[0].mxu0 %v690
        %v4704 = vpop.f32.mrb[0].mxu0
        %v4705 = vadd.f32 %v4664, %v4704
        %v4706 = vpop.f32.mrb[0].mxu0
        %v4707 = vadd.f32 %v4666, %v4706
        %v4708 = vpop.f32.mrb[0].mxu0
        %v4709 = vpop.f32.mrb[0].mxu0
        %4710 = vdwg.mxu0
        %4711 = vmatprep.subr.bf16.mxu0 %v3378
        %4712 = vmatpush1.bf16.msra.mxu0 %v3377
        %4713 = vmatprep.subr.bf16.mxu0 %v3403
        %4714 = vmatpush1.bf16.msra.mxu0 %v3402
        %4715 = vmatprep.subr.bf16.mxu0 %v3428
        %4716 = vmatpush1.bf16.msra.mxu0 %v3427
        %4717 = vmatprep.subr.bf16.mxu0 %v3453
        %4718 = vmatpush1.bf16.msra.mxu0 %v3452
        %4719 = vmatprep.subr.bf16.mxu0 %v3478
        %4720 = vmatpush1.bf16.msra.mxu0 %v3477
        %4721 = vmatprep.subr.bf16.mxu0 %v3503
        %4722 = vmatpush1.bf16.msra.mxu0 %v3502
        %4723 = vmatprep.subr.bf16.mxu0 %v3528
        %4724 = vmatpush1.bf16.msra.mxu0 %v3527
        %4725 = vmatprep.subr.bf16.mxu0 %v3553
        %4726 = vmatpush1.bf16.msra.mxu0 %v3552
        %4727 = vmatprep.subr.bf16.mxu0 %v3578
        %4728 = vmatpush1.bf16.msra.mxu0 %v3577
        %4729 = vmatprep.subr.bf16.mxu0 %v3603
        %4730 = vmatpush1.bf16.msra.mxu0 %v3602
        %4731 = vmatprep.subr.bf16.mxu0 %v3628
        %4732 = vmatpush1.bf16.msra.mxu0 %v3627
        %4733 = vmatprep.subr.bf16.mxu0 %v3653
        %4734 = vmatpush1.bf16.msra.mxu0 %v3652
        %4735 = vmatprep.subr.bf16.mxu0 %v3678
        %4736 = vmatpush1.bf16.msra.mxu0 %v3677
        %4737 = vmatprep.subr.bf16.mxu0 %v3703
        %4738 = vmatpush1.bf16.msra.mxu0 %v3702
        %4739 = vmatprep.subr.bf16.mxu0 %v3728
        %4740 = vmatpush1.bf16.msra.mxu0 %v3727
        %4741 = vmatprep.subr.bf16.mxu0 %v3753
        %4742 = vmatpush1.bf16.msra.mxu0 %v3752
        %4743 = vmatprep.mubr.bf16.mxu0 %v689
        %4744 = vmatmul.mubr.bf16.gmra.mrb[0].mxu0 %v688
        %v4745 = vpop.f32.mrb[0].mxu0
        %v4746 = vadd.f32 %v1361, %v4745
        %v4747 = vpop.f32.mrb[0].mxu0
        %v4748 = vadd.f32 %v1365, %v4747
        %v4749 = vpop.f32.mrb[0].mxu0
        %v4750 = vpop.f32.mrb[0].mxu0
        %4751 = vdwg.mxu0
        %4752 = vmatprep.subr.bf16.mxu0 %v3778
        %4753 = vmatpush1.bf16.msra.mxu0 %v3777
        %4754 = vmatprep.subr.bf16.mxu0 %v3803
        %4755 = vmatpush1.bf16.msra.mxu0 %v3802
        %4756 = vmatprep.subr.bf16.mxu0 %v3828
        %4757 = vmatpush1.bf16.msra.mxu0 %v3827
        %4758 = vmatprep.subr.bf16.mxu0 %v3853
        %4759 = vmatpush1.bf16.msra.mxu0 %v3852
        %4760 = vmatprep.subr.bf16.mxu0 %v3878
        %4761 = vmatpush1.bf16.msra.mxu0 %v3877
        %4762 = vmatprep.subr.bf16.mxu0 %v3903
        %4763 = vmatpush1.bf16.msra.mxu0 %v3902
        %4764 = vmatprep.subr.bf16.mxu0 %v3928
        %4765 = vmatpush1.bf16.msra.mxu0 %v3927
        %4766 = vmatprep.subr.bf16.mxu0 %v3953
        %4767 = vmatpush1.bf16.msra.mxu0 %v3952
        %4768 = vmatprep.subr.bf16.mxu0 %v3978
        %4769 = vmatpush1.bf16.msra.mxu0 %v3977
        %4770 = vmatprep.subr.bf16.mxu0 0
        %4771 = vmatpush1.bf16.msra.mxu0 0
        %4772 = vmatprep.subr.bf16.mxu0 0
        %4773 = vmatpush1.bf16.msra.mxu0 0
        %4774 = vmatprep.subr.bf16.mxu0 0
        %4775 = vmatpush1.bf16.msra.mxu0 0
        %4776 = vmatprep.subr.bf16.mxu0 0
        %4777 = vmatpush1.bf16.msra.mxu0 0
        %4778 = vmatprep.subr.bf16.mxu0 0
        %4779 = vmatpush1.bf16.msra.mxu0 0
        %4780 = vmatprep.subr.bf16.mxu0 0
        %4781 = vmatpush1.bf16.msra.mxu0 0
        %4782 = vmatprep.subr.bf16.mxu0 0
        %4783 = vmatpush1.bf16.msra.mxu0 0
        %4784 = vmatprep.mubr.bf16.mxu0 %v4627
        %4785 = vmatmul.mubr.bf16.gmra.mrb[0].mxu0 %v690
        %v4786 = vpop.f32.mrb[0].mxu0
        %v4787 = vadd.f32 %v4746, %v4786
        %v4788 = vpop.f32.mrb[0].mxu0
        %v4789 = vadd.f32 %v4748, %v4788
        %v4790 = vpop.f32.mrb[0].mxu0
        %v4791 = vpop.f32.mrb[0].mxu0
        %4792 = vdwg.mxu0
        %4793 = vmatprep.subr.bf16.mxu0 %v3380
        %4794 = vmatpush1.bf16.msra.mxu0 %v3379
        %4795 = vmatprep.subr.bf16.mxu0 %v3405
        %4796 = vmatpush1.bf16.msra.mxu0 %v3404
        %4797 = vmatprep.subr.bf16.mxu0 %v3430
        %4798 = vmatpush1.bf16.msra.mxu0 %v3429
        %4799 = vmatprep.subr.bf16.mxu0 %v3455
        %4800 = vmatpush1.bf16.msra.mxu0 %v3454
        %4801 = vmatprep.subr.bf16.mxu0 %v3480
        %4802 = vmatpush1.bf16.msra.mxu0 %v3479
        %4803 = vmatprep.subr.bf16.mxu0 %v3505
        %4804 = vmatpush1.bf16.msra.mxu0 %v3504
        %4805 = vmatprep.subr.bf16.mxu0 %v3530
        %4806 = vmatpush1.bf16.msra.mxu0 %v3529
        %4807 = vmatprep.subr.bf16.mxu0 %v3555
        %4808 = vmatpush1.bf16.msra.mxu0 %v3554
        %4809 = vmatprep.subr.bf16.mxu0 %v3580
        %4810 = vmatpush1.bf16.msra.mxu0 %v3579
        %4811 = vmatprep.subr.bf16.mxu0 %v3605
        %4812 = vmatpush1.bf16.msra.mxu0 %v3604
        %4813 = vmatprep.subr.bf16.mxu0 %v3630
        %4814 = vmatpush1.bf16.msra.mxu0 %v3629
        %4815 = vmatprep.subr.bf16.mxu0 %v3655
        %4816 = vmatpush1.bf16.msra.mxu0 %v3654
        %4817 = vmatprep.subr.bf16.mxu0 %v3680
        %4818 = vmatpush1.bf16.msra.mxu0 %v3679
        %4819 = vmatprep.subr.bf16.mxu0 %v3705
        %4820 = vmatpush1.bf16.msra.mxu0 %v3704
        %4821 = vmatprep.subr.bf16.mxu0 %v3730
        %4822 = vmatpush1.bf16.msra.mxu0 %v3729
        %4823 = vmatprep.subr.bf16.mxu0 %v3755
        %4824 = vmatpush1.bf16.msra.mxu0 %v3754
        %4825 = vmatprep.mubr.bf16.mxu0 %v689
        %4826 = vmatmul.mubr.bf16.gmra.mrb[0].mxu0 %v688
        %v4827 = vpop.f32.mrb[0].mxu0
        %v4828 = vadd.f32 %v1369, %v4827
        %v4829 = vpop.f32.mrb[0].mxu0
        %v4830 = vadd.f32 %v1373, %v4829
        %v4831 = vpop.f32.mrb[0].mxu0
        %v4832 = vpop.f32.mrb[0].mxu0
        %4833 = vdwg.mxu0
        %4834 = vmatprep.subr.bf16.mxu0 %v3780
        %4835 = vmatpush1.bf16.msra.mxu0 %v3779
        %4836 = vmatprep.subr.bf16.mxu0 %v3805
        %4837 = vmatpush1.bf16.msra.mxu0 %v3804
        %4838 = vmatprep.subr.bf16.mxu0 %v3830
        %4839 = vmatpush1.bf16.msra.mxu0 %v3829
        %4840 = vmatprep.subr.bf16.mxu0 %v3855
        %4841 = vmatpush1.bf16.msra.mxu0 %v3854
        %4842 = vmatprep.subr.bf16.mxu0 %v3880
        %4843 = vmatpush1.bf16.msra.mxu0 %v3879
        %4844 = vmatprep.subr.bf16.mxu0 %v3905
        %4845 = vmatpush1.bf16.msra.mxu0 %v3904
        %4846 = vmatprep.subr.bf16.mxu0 %v3930
        %4847 = vmatpush1.bf16.msra.mxu0 %v3929
        %4848 = vmatprep.subr.bf16.mxu0 %v3955
        %4849 = vmatpush1.bf16.msra.mxu0 %v3954
        %4850 = vmatprep.subr.bf16.mxu0 %v3980
        %4851 = vmatpush1.bf16.msra.mxu0 %v3979
        %4852 = vmatprep.subr.bf16.mxu0 0
        %4853 = vmatpush1.bf16.msra.mxu0 0
        %4854 = vmatprep.subr.bf16.mxu0 0
        %4855 = vmatpush1.bf16.msra.mxu0 0
        %4856 = vmatprep.subr.bf16.mxu0 0
        %4857 = vmatpush1.bf16.msra.mxu0 0
        %4858 = vmatprep.subr.bf16.mxu0 0
        %4859 = vmatpush1.bf16.msra.mxu0 0
        %4860 = vmatprep.subr.bf16.mxu0 0
        %4861 = vmatpush1.bf16.msra.mxu0 0
        %4862 = vmatprep.subr.bf16.mxu0 0
        %4863 = vmatpush1.bf16.msra.mxu0 0
        %4864 = vmatprep.subr.bf16.mxu0 0
        %4865 = vmatpush1.bf16.msra.mxu0 0
        %4866 = vmatprep.mubr.bf16.mxu0 %v4627
        %4867 = vmatmul.mubr.bf16.gmra.mrb[0].mxu0 %v690
        %v4868 = vpop.f32.mrb[0].mxu0
        %v4869 = vadd.f32 %v4828, %v4868
        %v4870 = vpop.f32.mrb[0].mxu0
        %v4871 = vadd.f32 %v4830, %v4870
        %v4872 = vpop.f32.mrb[0].mxu0
        %v4873 = vpop.f32.mrb[0].mxu0
        %4874 = vdwg.mxu0
        %4875 = vmatprep.subr.bf16.mxu0 %v3382
        %4876 = vmatpush1.bf16.msra.mxu0 %v3381
        %4877 = vmatprep.subr.bf16.mxu0 %v3407
        %4878 = vmatpush1.bf16.msra.mxu0 %v3406
        %4879 = vmatprep.subr.bf16.mxu0 %v3432
        %4880 = vmatpush1.bf16.msra.mxu0 %v3431
        %4881 = vmatprep.subr.bf16.mxu0 %v3457
        %4882 = vmatpush1.bf16.msra.mxu0 %v3456
        %4883 = vmatprep.subr.bf16.mxu0 %v3482
        %4884 = vmatpush1.bf16.msra.mxu0 %v3481
        %4885 = vmatprep.subr.bf16.mxu0 %v3507
        %4886 = vmatpush1.bf16.msra.mxu0 %v3506
        %4887 = vmatprep.subr.bf16.mxu0 %v3532
        %4888 = vmatpush1.bf16.msra.mxu0 %v3531
        %4889 = vmatprep.subr.bf16.mxu0 %v3557
        %4890 = vmatpush1.bf16.msra.mxu0 %v3556
        %4891 = vmatprep.subr.bf16.mxu0 %v3582
        %4892 = vmatpush1.bf16.msra.mxu0 %v3581
        %4893 = vmatprep.subr.bf16.mxu0 %v3607
        %4894 = vmatpush1.bf16.msra.mxu0 %v3606
        %4895 = vmatprep.subr.bf16.mxu0 %v3632
        %4896 = vmatpush1.bf16.msra.mxu0 %v3631
        %4897 = vmatprep.subr.bf16.mxu0 %v3657
        %4898 = vmatpush1.bf16.msra.mxu0 %v3656
        %4899 = vmatprep.subr.bf16.mxu0 %v3682
        %4900 = vmatpush1.bf16.msra.mxu0 %v3681
        %4901 = vmatprep.subr.bf16.mxu0 %v3707
        %4902 = vmatpush1.bf16.msra.mxu0 %v3706
        %4903 = vmatprep.subr.bf16.mxu0 %v3732
        %4904 = vmatpush1.bf16.msra.mxu0 %v3731
        %4905 = vmatprep.subr.bf16.mxu0 %v3757
        %4906 = vmatpush1.bf16.msra.mxu0 %v3756
        %4907 = vmatprep.mubr.bf16.mxu0 %v689
        %4908 = vmatmul.mubr.bf16.gmra.mrb[0].mxu0 %v688
        %v4909 = vpop.f32.mrb[0].mxu0
        %v4910 = vadd.f32 %v1377, %v4909
        %v4911 = vpop.f32.mrb[0].mxu0
        %v4912 = vadd.f32 %v1381, %v4911
        %v4913 = vpop.f32.mrb[0].mxu0
        %v4914 = vpop.f32.mrb[0].mxu0
        %4915 = vdwg.mxu0
        %4916 = vmatprep.subr.bf16.mxu0 %v3782
        %4917 = vmatpush1.bf16.msra.mxu0 %v3781
        %4918 = vmatprep.subr.bf16.mxu0 %v3807
        %4919 = vmatpush1.bf16.msra.mxu0 %v3806
        %4920 = vmatprep.subr.bf16.mxu0 %v3832
        %4921 = vmatpush1.bf16.msra.mxu0 %v3831
        %4922 = vmatprep.subr.bf16.mxu0 %v3857
        %4923 = vmatpush1.bf16.msra.mxu0 %v3856
        %4924 = vmatprep.subr.bf16.mxu0 %v3882
        %4925 = vmatpush1.bf16.msra.mxu0 %v3881
        %4926 = vmatprep.subr.bf16.mxu0 %v3907
        %4927 = vmatpush1.bf16.msra.mxu0 %v3906
        %4928 = vmatprep.subr.bf16.mxu0 %v3932
        %4929 = vmatpush1.bf16.msra.mxu0 %v3931
        %4930 = vmatprep.subr.bf16.mxu0 %v3957
        %4931 = vmatpush1.bf16.msra.mxu0 %v3956
        %4932 = vmatprep.subr.bf16.mxu0 %v3982
        %4933 = vmatpush1.bf16.msra.mxu0 %v3981
        %4934 = vmatprep.subr.bf16.mxu0 0
        %4935 = vmatpush1.bf16.msra.mxu0 0
        %4936 = vmatprep.subr.bf16.mxu0 0
        %4937 = vmatpush1.bf16.msra.mxu0 0
        %4938 = vmatprep.subr.bf16.mxu0 0
        %4939 = vmatpush1.bf16.msra.mxu0 0
        %4940 = vmatprep.subr.bf16.mxu0 0
        %4941 = vmatpush1.bf16.msra.mxu0 0
        %4942 = vmatprep.subr.bf16.mxu0 0
        %4943 = vmatpush1.bf16.msra.mxu0 0
        %4944 = vmatprep.subr.bf16.mxu0 0
        %4945 = vmatpush1.bf16.msra.mxu0 0
        %4946 = vmatprep.subr.bf16.mxu0 0
        %4947 = vmatpush1.bf16.msra.mxu0 0
        %4948 = vmatprep.mubr.bf16.mxu0 %v4627
        %4949 = vmatmul.mubr.bf16.gmra.mrb[0].mxu0 %v690
        %v4950 = vpop.f32.mrb[0].mxu0
        %v4951 = vadd.f32 %v4910, %v4950
        %v4952 = vpop.f32.mrb[0].mxu0
        %v4953 = vadd.f32 %v4912, %v4952
        %v4954 = vpop.f32.mrb[0].mxu0
        %v4955 = vpop.f32.mrb[0].mxu0
        %4956 = vdwg.mxu0
        %4957 = vmatprep.subr.bf16.mxu0 %v3384
        %4958 = vmatpush1.bf16.msra.mxu0 %v3383
        %4959 = vmatprep.subr.bf16.mxu0 %v3409
        %4960 = vmatpush1.bf16.msra.mxu0 %v3408
        %4961 = vmatprep.subr.bf16.mxu0 %v3434
        %4962 = vmatpush1.bf16.msra.mxu0 %v3433
        %4963 = vmatprep.subr.bf16.mxu0 %v3459
        %4964 = vmatpush1.bf16.msra.mxu0 %v3458
        %4965 = vmatprep.subr.bf16.mxu0 %v3484
        %4966 = vmatpush1.bf16.msra.mxu0 %v3483
        %4967 = vmatprep.subr.bf16.mxu0 %v3509
        %4968 = vmatpush1.bf16.msra.mxu0 %v3508
        %4969 = vmatprep.subr.bf16.mxu0 %v3534
        %4970 = vmatpush1.bf16.msra.mxu0 %v3533
        %4971 = vmatprep.subr.bf16.mxu0 %v3559
        %4972 = vmatpush1.bf16.msra.mxu0 %v3558
        %4973 = vmatprep.subr.bf16.mxu0 %v3584
        %4974 = vmatpush1.bf16.msra.mxu0 %v3583
        %4975 = vmatprep.subr.bf16.mxu0 %v3609
        %4976 = vmatpush1.bf16.msra.mxu0 %v3608
        %4977 = vmatprep.subr.bf16.mxu0 %v3634
        %4978 = vmatpush1.bf16.msra.mxu0 %v3633
        %4979 = vmatprep.subr.bf16.mxu0 %v3659
        %4980 = vmatpush1.bf16.msra.mxu0 %v3658
        %4981 = vmatprep.subr.bf16.mxu0 %v3684
        %4982 = vmatpush1.bf16.msra.mxu0 %v3683
        %4983 = vmatprep.subr.bf16.mxu0 %v3709
        %4984 = vmatpush1.bf16.msra.mxu0 %v3708
        %4985 = vmatprep.subr.bf16.mxu0 %v3734
        %4986 = vmatpush1.bf16.msra.mxu0 %v3733
        %4987 = vmatprep.subr.bf16.mxu0 %v3759
        %4988 = vmatpush1.bf16.msra.mxu0 %v3758
        %4989 = vmatprep.mubr.bf16.mxu0 %v689
        %4990 = vmatmul.mubr.bf16.gmra.mrb[0].mxu0 %v688
        %v4991 = vpop.f32.mrb[0].mxu0
        %v4992 = vadd.f32 %v1385, %v4991
        %v4993 = vpop.f32.mrb[0].mxu0
        %v4994 = vadd.f32 %v1389, %v4993
        %v4995 = vpop.f32.mrb[0].mxu0
        %v4996 = vpop.f32.mrb[0].mxu0
        %4997 = vdwg.mxu0
        %4998 = vmatprep.subr.bf16.mxu0 %v3784
        %4999 = vmatpush1.bf16.msra.mxu0 %v3783
        %5000 = vmatprep.subr.bf16.mxu0 %v3809
        %5001 = vmatpush1.bf16.msra.mxu0 %v3808
        %5002 = vmatprep.subr.bf16.mxu0 %v3834
        %5003 = vmatpush1.bf16.msra.mxu0 %v3833
        %5004 = vmatprep.subr.bf16.mxu0 %v3859
        %5005 = vmatpush1.bf16.msra.mxu0 %v3858
        %5006 = vmatprep.subr.bf16.mxu0 %v3884
        %5007 = vmatpush1.bf16.msra.mxu0 %v3883
        %5008 = vmatprep.subr.bf16.mxu0 %v3909
        %5009 = vmatpush1.bf16.msra.mxu0 %v3908
        %5010 = vmatprep.subr.bf16.mxu0 %v3934
        %5011 = vmatpush1.bf16.msra.mxu0 %v3933
        %5012 = vmatprep.subr.bf16.mxu0 %v3959
        %5013 = vmatpush1.bf16.msra.mxu0 %v3958
        %5014 = vmatprep.subr.bf16.mxu0 %v3984
        %5015 = vmatpush1.bf16.msra.mxu0 %v3983
        %5016 = vmatprep.subr.bf16.mxu0 0
        %5017 = vmatpush1.bf16.msra.mxu0 0
        %5018 = vmatprep.subr.bf16.mxu0 0
        %5019 = vmatpush1.bf16.msra.mxu0 0
        %5020 = vmatprep.subr.bf16.mxu0 0
        %5021 = vmatpush1.bf16.msra.mxu0 0
        %5022 = vmatprep.subr.bf16.mxu0 0
        %5023 = vmatpush1.bf16.msra.mxu0 0
        %5024 = vmatprep.subr.bf16.mxu0 0
        %5025 = vmatpush1.bf16.msra.mxu0 0
        %5026 = vmatprep.subr.bf16.mxu0 0
        %5027 = vmatpush1.bf16.msra.mxu0 0
        %5028 = vmatprep.subr.bf16.mxu0 0
        %5029 = vmatpush1.bf16.msra.mxu0 0
        %5030 = vmatprep.mubr.bf16.mxu0 %v4627
        %5031 = vmatmul.mubr.bf16.gmra.mrb[0].mxu0 %v690
        %v5032 = vpop.f32.mrb[0].mxu0
        %v5033 = vadd.f32 %v4992, %v5032
        %v5034 = vpop.f32.mrb[0].mxu0
        %v5035 = vadd.f32 %v4994, %v5034
        %v5036 = vpop.f32.mrb[0].mxu0
        %v5037 = vpop.f32.mrb[0].mxu0
        %5038 = vdwg.mxu0
        %5039 = vmatprep.subr.bf16.mxu0 %v3386
        %5040 = vmatpush1.bf16.msra.mxu0 %v3385
        %5041 = vmatprep.subr.bf16.mxu0 %v3411
        %5042 = vmatpush1.bf16.msra.mxu0 %v3410
        %5043 = vmatprep.subr.bf16.mxu0 %v3436
        %5044 = vmatpush1.bf16.msra.mxu0 %v3435
        %5045 = vmatprep.subr.bf16.mxu0 %v3461
        %5046 = vmatpush1.bf16.msra.mxu0 %v3460
        %5047 = vmatprep.subr.bf16.mxu0 %v3486
        %5048 = vmatpush1.bf16.msra.mxu0 %v3485
        %5049 = vmatprep.subr.bf16.mxu0 %v3511
        %5050 = vmatpush1.bf16.msra.mxu0 %v3510
        %5051 = vmatprep.subr.bf16.mxu0 %v3536
        %5052 = vmatpush1.bf16.msra.mxu0 %v3535
        %5053 = vmatprep.subr.bf16.mxu0 %v3561
        %5054 = vmatpush1.bf16.msra.mxu0 %v3560
        %5055 = vmatprep.subr.bf16.mxu0 %v3586
        %5056 = vmatpush1.bf16.msra.mxu0 %v3585
        %5057 = vmatprep.subr.bf16.mxu0 %v3611
        %5058 = vmatpush1.bf16.msra.mxu0 %v3610
        %5059 = vmatprep.subr.bf16.mxu0 %v3636
        %5060 = vmatpush1.bf16.msra.mxu0 %v3635
        %5061 = vmatprep.subr.bf16.mxu0 %v3661
        %5062 = vmatpush1.bf16.msra.mxu0 %v3660
        %5063 = vmatprep.subr.bf16.mxu0 %v3686
        %5064 = vmatpush1.bf16.msra.mxu0 %v3685
        %5065 = vmatprep.subr.bf16.mxu0 %v3711
        %5066 = vmatpush1.bf16.msra.mxu0 %v3710
        %5067 = vmatprep.subr.bf16.mxu0 %v3736
        %5068 = vmatpush1.bf16.msra.mxu0 %v3735
        %5069 = vmatprep.subr.bf16.mxu0 %v3761
        %5070 = vmatpush1.bf16.msra.mxu0 %v3760
        %5071 = vmatprep.mubr.bf16.mxu0 %v689
        %5072 = vmatmul.mubr.bf16.gmra.mrb[0].mxu0 %v688
        %v5073 = vpop.f32.mrb[0].mxu0
        %v5074 = vadd.f32 %v1393, %v5073
        %v5075 = vpop.f32.mrb[0].mxu0
        %v5076 = vadd.f32 %v1397, %v5075
        %v5077 = vpop.f32.mrb[0].mxu0
        %v5078 = vpop.f32.mrb[0].mxu0
        %5079 = vdwg.mxu0
        %5080 = vmatprep.subr.bf16.mxu0 %v3786
        %5081 = vmatpush1.bf16.msra.mxu0 %v3785
        %5082 = vmatprep.subr.bf16.mxu0 %v3811
        %5083 = vmatpush1.bf16.msra.mxu0 %v3810
        %5084 = vmatprep.subr.bf16.mxu0 %v3836
        %5085 = vmatpush1.bf16.msra.mxu0 %v3835
        %5086 = vmatprep.subr.bf16.mxu0 %v3861
        %5087 = vmatpush1.bf16.msra.mxu0 %v3860
        %5088 = vmatprep.subr.bf16.mxu0 %v3886
        %5089 = vmatpush1.bf16.msra.mxu0 %v3885
        %5090 = vmatprep.subr.bf16.mxu0 %v3911
        %5091 = vmatpush1.bf16.msra.mxu0 %v3910
        %5092 = vmatprep.subr.bf16.mxu0 %v3936
        %5093 = vmatpush1.bf16.msra.mxu0 %v3935
        %5094 = vmatprep.subr.bf16.mxu0 %v3961
        %5095 = vmatpush1.bf16.msra.mxu0 %v3960
        %5096 = vmatprep.subr.bf16.mxu0 %v3986
        %5097 = vmatpush1.bf16.msra.mxu0 %v3985
        %5098 = vmatprep.subr.bf16.mxu0 0
        %5099 = vmatpush1.bf16.msra.mxu0 0
        %5100 = vmatprep.subr.bf16.mxu0 0
        %5101 = vmatpush1.bf16.msra.mxu0 0
        %5102 = vmatprep.subr.bf16.mxu0 0
        %5103 = vmatpush1.bf16.msra.mxu0 0
        %5104 = vmatprep.subr.bf16.mxu0 0
        %5105 = vmatpush1.bf16.msra.mxu0 0
        %5106 = vmatprep.subr.bf16.mxu0 0
        %5107 = vmatpush1.bf16.msra.mxu0 0
        %5108 = vmatprep.subr.bf16.mxu0 0
        %5109 = vmatpush1.bf16.msra.mxu0 0
        %5110 = vmatprep.subr.bf16.mxu0 0
        %5111 = vmatpush1.bf16.msra.mxu0 0
        %5112 = vmatprep.mubr.bf16.mxu0 %v4627
        %5113 = vmatmul.mubr.bf16.gmra.mrb[0].mxu0 %v690
        %v5114 = vpop.f32.mrb[0].mxu0
        %v5115 = vadd.f32 %v5074, %v5114
        %v5116 = vpop.f32.mrb[0].mxu0
        %v5117 = vadd.f32 %v5076, %v5116
        %v5118 = vpop.f32.mrb[0].mxu0
        %v5119 = vpop.f32.mrb[0].mxu0
        %5120 = vdwg.mxu0
        %5121 = vmatprep.subr.bf16.mxu0 %v3388
        %5122 = vmatpush1.bf16.msra.mxu0 %v3387
        %5123 = vmatprep.subr.bf16.mxu0 %v3413
        %5124 = vmatpush1.bf16.msra.mxu0 %v3412
        %5125 = vmatprep.subr.bf16.mxu0 %v3438
        %5126 = vmatpush1.bf16.msra.mxu0 %v3437
        %5127 = vmatprep.subr.bf16.mxu0 %v3463
        %5128 = vmatpush1.bf16.msra.mxu0 %v3462
        %5129 = vmatprep.subr.bf16.mxu0 %v3488
        %5130 = vmatpush1.bf16.msra.mxu0 %v3487
        %5131 = vmatprep.subr.bf16.mxu0 %v3513
        %5132 = vmatpush1.bf16.msra.mxu0 %v3512
        %5133 = vmatprep.subr.bf16.mxu0 %v3538
        %5134 = vmatpush1.bf16.msra.mxu0 %v3537
        %5135 = vmatprep.subr.bf16.mxu0 %v3563
        %5136 = vmatpush1.bf16.msra.mxu0 %v3562
        %5137 = vmatprep.subr.bf16.mxu0 %v3588
        %5138 = vmatpush1.bf16.msra.mxu0 %v3587
        %5139 = vmatprep.subr.bf16.mxu0 %v3613
        %5140 = vmatpush1.bf16.msra.mxu0 %v3612
        %5141 = vmatprep.subr.bf16.mxu0 %v3638
        %5142 = vmatpush1.bf16.msra.mxu0 %v3637
        %5143 = vmatprep.subr.bf16.mxu0 %v3663
        %5144 = vmatpush1.bf16.msra.mxu0 %v3662
        %5145 = vmatprep.subr.bf16.mxu0 %v3688
        %5146 = vmatpush1.bf16.msra.mxu0 %v3687
        %5147 = vmatprep.subr.bf16.mxu0 %v3713
        %5148 = vmatpush1.bf16.msra.mxu0 %v3712
        %5149 = vmatprep.subr.bf16.mxu0 %v3738
        %5150 = vmatpush1.bf16.msra.mxu0 %v3737
        %5151 = vmatprep.subr.bf16.mxu0 %v3763
        %5152 = vmatpush1.bf16.msra.mxu0 %v3762
        %5153 = vmatprep.mubr.bf16.mxu0 %v689
        %5154 = vmatmul.mubr.bf16.gmra.mrb[0].mxu0 %v688
        %v5155 = vpop.f32.mrb[0].mxu0
        %v5156 = vadd.f32 %v1401, %v5155
        %v5157 = vpop.f32.mrb[0].mxu0
        %v5158 = vadd.f32 %v1405, %v5157
        %v5159 = vpop.f32.mrb[0].mxu0
        %v5160 = vpop.f32.mrb[0].mxu0
        %5161 = vdwg.mxu0
        %5162 = vmatprep.subr.bf16.mxu0 %v3788
        %5163 = vmatpush1.bf16.msra.mxu0 %v3787
        %5164 = vmatprep.subr.bf16.mxu0 %v3813
        %5165 = vmatpush1.bf16.msra.mxu0 %v3812
        %5166 = vmatprep.subr.bf16.mxu0 %v3838
        %5167 = vmatpush1.bf16.msra.mxu0 %v3837
        %5168 = vmatprep.subr.bf16.mxu0 %v3863
        %5169 = vmatpush1.bf16.msra.mxu0 %v3862
        %5170 = vmatprep.subr.bf16.mxu0 %v3888
        %5171 = vmatpush1.bf16.msra.mxu0 %v3887
        %5172 = vmatprep.subr.bf16.mxu0 %v3913
        %5173 = vmatpush1.bf16.msra.mxu0 %v3912
        %5174 = vmatprep.subr.bf16.mxu0 %v3938
        %5175 = vmatpush1.bf16.msra.mxu0 %v3937
        %5176 = vmatprep.subr.bf16.mxu0 %v3963
        %5177 = vmatpush1.bf16.msra.mxu0 %v3962
        %5178 = vmatprep.subr.bf16.mxu0 %v3988
        %5179 = vmatpush1.bf16.msra.mxu0 %v3987
        %5180 = vmatprep.subr.bf16.mxu0 0
        %5181 = vmatpush1.bf16.msra.mxu0 0
        %5182 = vmatprep.subr.bf16.mxu0 0
        %5183 = vmatpush1.bf16.msra.mxu0 0
        %5184 = vmatprep.subr.bf16.mxu0 0
        %5185 = vmatpush1.bf16.msra.mxu0 0
        %5186 = vmatprep.subr.bf16.mxu0 0
        %5187 = vmatpush1.bf16.msra.mxu0 0
        %5188 = vmatprep.subr.bf16.mxu0 0
        %5189 = vmatpush1.bf16.msra.mxu0 0
        %5190 = vmatprep.subr.bf16.mxu0 0
        %5191 = vmatpush1.bf16.msra.mxu0 0
        %5192 = vmatprep.subr.bf16.mxu0 0
        %5193 = vmatpush1.bf16.msra.mxu0 0
        %5194 = vmatprep.mubr.bf16.mxu0 %v4627
        %5195 = vmatmul.mubr.bf16.gmra.mrb[0].mxu0 %v690
        %v5196 = vpop.f32.mrb[0].mxu0
        %v5197 = vadd.f32 %v5156, %v5196
        %v5198 = vpop.f32.mrb[0].mxu0
        %v5199 = vadd.f32 %v5158, %v5198
        %v5200 = vpop.f32.mrb[0].mxu0
        %v5201 = vpop.f32.mrb[0].mxu0
        %5202 = vdwg.mxu0
        %5203 = vmatprep.subr.bf16.mxu0 %v3390
        %5204 = vmatpush1.bf16.msra.mxu0 %v3389
        %5205 = vmatprep.subr.bf16.mxu0 %v3415
        %5206 = vmatpush1.bf16.msra.mxu0 %v3414
        %5207 = vmatprep.subr.bf16.mxu0 %v3440
        %5208 = vmatpush1.bf16.msra.mxu0 %v3439
        %5209 = vmatprep.subr.bf16.mxu0 %v3465
        %5210 = vmatpush1.bf16.msra.mxu0 %v3464
        %5211 = vmatprep.subr.bf16.mxu0 %v3490
        %5212 = vmatpush1.bf16.msra.mxu0 %v3489
        %5213 = vmatprep.subr.bf16.mxu0 %v3515
        %5214 = vmatpush1.bf16.msra.mxu0 %v3514
        %5215 = vmatprep.subr.bf16.mxu0 %v3540
        %5216 = vmatpush1.bf16.msra.mxu0 %v3539
        %5217 = vmatprep.subr.bf16.mxu0 %v3565
        %5218 = vmatpush1.bf16.msra.mxu0 %v3564
        %5219 = vmatprep.subr.bf16.mxu0 %v3590
        %5220 = vmatpush1.bf16.msra.mxu0 %v3589
        %5221 = vmatprep.subr.bf16.mxu0 %v3615
        %5222 = vmatpush1.bf16.msra.mxu0 %v3614
        %5223 = vmatprep.subr.bf16.mxu0 %v3640
        %5224 = vmatpush1.bf16.msra.mxu0 %v3639
        %5225 = vmatprep.subr.bf16.mxu0 %v3665
        %5226 = vmatpush1.bf16.msra.mxu0 %v3664
        %5227 = vmatprep.subr.bf16.mxu0 %v3690
        %5228 = vmatpush1.bf16.msra.mxu0 %v3689
        %5229 = vmatprep.subr.bf16.mxu0 %v3715
        %5230 = vmatpush1.bf16.msra.mxu0 %v3714
        %5231 = vmatprep.subr.bf16.mxu0 %v3740
        %5232 = vmatpush1.bf16.msra.mxu0 %v3739
        %5233 = vmatprep.subr.bf16.mxu0 %v3765
        %5234 = vmatpush1.bf16.msra.mxu0 %v3764
        %5235 = vmatprep.mubr.bf16.mxu0 %v689
        %5236 = vmatmul.mubr.bf16.gmra.mrb[0].mxu0 %v688
        %v5237 = vpop.f32.mrb[0].mxu0
        %v5238 = vadd.f32 %v1409, %v5237
        %v5239 = vpop.f32.mrb[0].mxu0
        %v5240 = vadd.f32 %v1413, %v5239
        %v5241 = vpop.f32.mrb[0].mxu0
        %v5242 = vpop.f32.mrb[0].mxu0
        %5243 = vdwg.mxu0
        %5244 = vmatprep.subr.bf16.mxu0 %v3790
        %5245 = vmatpush1.bf16.msra.mxu0 %v3789
        %5246 = vmatprep.subr.bf16.mxu0 %v3815
        %5247 = vmatpush1.bf16.msra.mxu0 %v3814
        %5248 = vmatprep.subr.bf16.mxu0 %v3840
        %5249 = vmatpush1.bf16.msra.mxu0 %v3839
        %5250 = vmatprep.subr.bf16.mxu0 %v3865
        %5251 = vmatpush1.bf16.msra.mxu0 %v3864
        %5252 = vmatprep.subr.bf16.mxu0 %v3890
        %5253 = vmatpush1.bf16.msra.mxu0 %v3889
        %5254 = vmatprep.subr.bf16.mxu0 %v3915
        %5255 = vmatpush1.bf16.msra.mxu0 %v3914
        %5256 = vmatprep.subr.bf16.mxu0 %v3940
        %5257 = vmatpush1.bf16.msra.mxu0 %v3939
        %5258 = vmatprep.subr.bf16.mxu0 %v3965
        %5259 = vmatpush1.bf16.msra.mxu0 %v3964
        %5260 = vmatprep.subr.bf16.mxu0 %v3990
        %5261 = vmatpush1.bf16.msra.mxu0 %v3989
        %5262 = vmatprep.subr.bf16.mxu0 0
        %5263 = vmatpush1.bf16.msra.mxu0 0
        %5264 = vmatprep.subr.bf16.mxu0 0
        %5265 = vmatpush1.bf16.msra.mxu0 0
        %5266 = vmatprep.subr.bf16.mxu0 0
        %5267 = vmatpush1.bf16.msra.mxu0 0
        %5268 = vmatprep.subr.bf16.mxu0 0
        %5269 = vmatpush1.bf16.msra.mxu0 0
        %5270 = vmatprep.subr.bf16.mxu0 0
        %5271 = vmatpush1.bf16.msra.mxu0 0
        %5272 = vmatprep.subr.bf16.mxu0 0
        %5273 = vmatpush1.bf16.msra.mxu0 0
        %5274 = vmatprep.subr.bf16.mxu0 0
        %5275 = vmatpush1.bf16.msra.mxu0 0
        %5276 = vmatprep.mubr.bf16.mxu0 %v4627
        %5277 = vmatmul.mubr.bf16.gmra.mrb[0].mxu0 %v690
        %v5278 = vpop.f32.mrb[0].mxu0
        %v5279 = vadd.f32 %v5238, %v5278
        %v5280 = vpop.f32.mrb[0].mxu0
        %v5281 = vadd.f32 %v5240, %v5280
        %v5282 = vpop.f32.mrb[0].mxu0
        %v5283 = vpop.f32.mrb[0].mxu0
        %5284 = vdwg.mxu0
        %5285 = vmatprep.subr.bf16.mxu0 %v3392
        %5286 = vmatpush1.bf16.msra.mxu0 %v3391
        %5287 = vmatprep.subr.bf16.mxu0 %v3417
        %5288 = vmatpush1.bf16.msra.mxu0 %v3416
        %5289 = vmatprep.subr.bf16.mxu0 %v3442
        %5290 = vmatpush1.bf16.msra.mxu0 %v3441
        %5291 = vmatprep.subr.bf16.mxu0 %v3467
        %5292 = vmatpush1.bf16.msra.mxu0 %v3466
        %5293 = vmatprep.subr.bf16.mxu0 %v3492
        %5294 = vmatpush1.bf16.msra.mxu0 %v3491
        %5295 = vmatprep.subr.bf16.mxu0 %v3517
        %5296 = vmatpush1.bf16.msra.mxu0 %v3516
        %5297 = vmatprep.subr.bf16.mxu0 %v3542
        %5298 = vmatpush1.bf16.msra.mxu0 %v3541
        %5299 = vmatprep.subr.bf16.mxu0 %v3567
        %5300 = vmatpush1.bf16.msra.mxu0 %v3566
        %5301 = vmatprep.subr.bf16.mxu0 %v3592
        %5302 = vmatpush1.bf16.msra.mxu0 %v3591
        %5303 = vmatprep.subr.bf16.mxu0 %v3617
        %5304 = vmatpush1.bf16.msra.mxu0 %v3616
        %5305 = vmatprep.subr.bf16.mxu0 %v3642
        %5306 = vmatpush1.bf16.msra.mxu0 %v3641
        %5307 = vmatprep.subr.bf16.mxu0 %v3667
        %5308 = vmatpush1.bf16.msra.mxu0 %v3666
        %5309 = vmatprep.subr.bf16.mxu0 %v3692
        %5310 = vmatpush1.bf16.msra.mxu0 %v3691
        %5311 = vmatprep.subr.bf16.mxu0 %v3717
        %5312 = vmatpush1.bf16.msra.mxu0 %v3716
        %5313 = vmatprep.subr.bf16.mxu0 %v3742
        %5314 = vmatpush1.bf16.msra.mxu0 %v3741
        %5315 = vmatprep.subr.bf16.mxu0 %v3767
        %5316 = vmatpush1.bf16.msra.mxu0 %v3766
        %5317 = vmatprep.mubr.bf16.mxu0 %v689
        %5318 = vmatmul.mubr.bf16.gmra.mrb[0].mxu0 %v688
        %v5319 = vpop.f32.mrb[0].mxu0
        %v5320 = vadd.f32 %v1417, %v5319
        %v5321 = vpop.f32.mrb[0].mxu0
        %v5322 = vadd.f32 %v1421, %v5321
        %v5323 = vpop.f32.mrb[0].mxu0
        %v5324 = vpop.f32.mrb[0].mxu0
        %5325 = vdwg.mxu0
        %5326 = vmatprep.subr.bf16.mxu0 %v3792
        %5327 = vmatpush1.bf16.msra.mxu0 %v3791
        %5328 = vmatprep.subr.bf16.mxu0 %v3817
        %5329 = vmatpush1.bf16.msra.mxu0 %v3816
        %5330 = vmatprep.subr.bf16.mxu0 %v3842
        %5331 = vmatpush1.bf16.msra.mxu0 %v3841
        %5332 = vmatprep.subr.bf16.mxu0 %v3867
        %5333 = vmatpush1.bf16.msra.mxu0 %v3866
        %5334 = vmatprep.subr.bf16.mxu0 %v3892
        %5335 = vmatpush1.bf16.msra.mxu0 %v3891
        %5336 = vmatprep.subr.bf16.mxu0 %v3917
        %5337 = vmatpush1.bf16.msra.mxu0 %v3916
        %5338 = vmatprep.subr.bf16.mxu0 %v3942
        %5339 = vmatpush1.bf16.msra.mxu0 %v3941
        %5340 = vmatprep.subr.bf16.mxu0 %v3967
        %5341 = vmatpush1.bf16.msra.mxu0 %v3966
        %5342 = vmatprep.subr.bf16.mxu0 %v3992
        %5343 = vmatpush1.bf16.msra.mxu0 %v3991
        %5344 = vmatprep.subr.bf16.mxu0 0
        %5345 = vmatpush1.bf16.msra.mxu0 0
        %5346 = vmatprep.subr.bf16.mxu0 0
        %5347 = vmatpush1.bf16.msra.mxu0 0
        %5348 = vmatprep.subr.bf16.mxu0 0
        %5349 = vmatpush1.bf16.msra.mxu0 0
        %5350 = vmatprep.subr.bf16.mxu0 0
        %5351 = vmatpush1.bf16.msra.mxu0 0
        %5352 = vmatprep.subr.bf16.mxu0 0
        %5353 = vmatpush1.bf16.msra.mxu0 0
        %5354 = vmatprep.subr.bf16.mxu0 0
        %5355 = vmatpush1.bf16.msra.mxu0 0
        %5356 = vmatprep.subr.bf16.mxu0 0
        %5357 = vmatpush1.bf16.msra.mxu0 0
        %5358 = vmatprep.mubr.bf16.mxu0 %v4627
        %5359 = vmatmul.mubr.bf16.gmra.mrb[0].mxu0 %v690
        %v5360 = vpop.f32.mrb[0].mxu0
        %v5361 = vadd.f32 %v5320, %v5360
        %v5362 = vpop.f32.mrb[0].mxu0
        %v5363 = vadd.f32 %v5322, %v5362
        %v5364 = vpop.f32.mrb[0].mxu0
        %v5365 = vpop.f32.mrb[0].mxu0
        %5366 = vdwg.mxu0
        %5367 = vmatprep.subr.bf16.mxu0 %v3394
        %5368 = vmatpush1.bf16.msra.mxu0 %v3393
        %5369 = vmatprep.subr.bf16.mxu0 %v3419
        %5370 = vmatpush1.bf16.msra.mxu0 %v3418
        %5371 = vmatprep.subr.bf16.mxu0 %v3444
        %5372 = vmatpush1.bf16.msra.mxu0 %v3443
        %5373 = vmatprep.subr.bf16.mxu0 %v3469
        %5374 = vmatpush1.bf16.msra.mxu0 %v3468
        %5375 = vmatprep.subr.bf16.mxu0 %v3494
        %5376 = vmatpush1.bf16.msra.mxu0 %v3493
        %5377 = vmatprep.subr.bf16.mxu0 %v3519
        %5378 = vmatpush1.bf16.msra.mxu0 %v3518
        %5379 = vmatprep.subr.bf16.mxu0 %v3544
        %5380 = vmatpush1.bf16.msra.mxu0 %v3543
        %5381 = vmatprep.subr.bf16.mxu0 %v3569
        %5382 = vmatpush1.bf16.msra.mxu0 %v3568
        %5383 = vmatprep.subr.bf16.mxu0 %v3594
        %5384 = vmatpush1.bf16.msra.mxu0 %v3593
        %5385 = vmatprep.subr.bf16.mxu0 %v3619
        %5386 = vmatpush1.bf16.msra.mxu0 %v3618
        %5387 = vmatprep.subr.bf16.mxu0 %v3644
        %5388 = vmatpush1.bf16.msra.mxu0 %v3643
        %5389 = vmatprep.subr.bf16.mxu0 %v3669
        %5390 = vmatpush1.bf16.msra.mxu0 %v3668
        %5391 = vmatprep.subr.bf16.mxu0 %v3694
        %5392 = vmatpush1.bf16.msra.mxu0 %v3693
        %5393 = vmatprep.subr.bf16.mxu0 %v3719
        %5394 = vmatpush1.bf16.msra.mxu0 %v3718
        %5395 = vmatprep.subr.bf16.mxu0 %v3744
        %5396 = vmatpush1.bf16.msra.mxu0 %v3743
        %5397 = vmatprep.subr.bf16.mxu0 %v3769
        %5398 = vmatpush1.bf16.msra.mxu0 %v3768
        %5399 = vmatprep.mubr.bf16.mxu0 %v689
        %5400 = vmatmul.mubr.bf16.gmra.mrb[0].mxu0 %v688
        %v5401 = vpop.f32.mrb[0].mxu0
        %v5402 = vadd.f32 %v1425, %v5401
        %v5403 = vpop.f32.mrb[0].mxu0
        %v5404 = vadd.f32 %v1429, %v5403
        %v5405 = vpop.f32.mrb[0].mxu0
        %v5406 = vpop.f32.mrb[0].mxu0
        %5407 = vdwg.mxu0
        %5408 = vmatprep.subr.bf16.mxu0 %v3794
        %5409 = vmatpush1.bf16.msra.mxu0 %v3793
        %5410 = vmatprep.subr.bf16.mxu0 %v3819
        %5411 = vmatpush1.bf16.msra.mxu0 %v3818
        %5412 = vmatprep.subr.bf16.mxu0 %v3844
        %5413 = vmatpush1.bf16.msra.mxu0 %v3843
        %5414 = vmatprep.subr.bf16.mxu0 %v3869
        %5415 = vmatpush1.bf16.msra.mxu0 %v3868
        %5416 = vmatprep.subr.bf16.mxu0 %v3894
        %5417 = vmatpush1.bf16.msra.mxu0 %v3893
        %5418 = vmatprep.subr.bf16.mxu0 %v3919
        %5419 = vmatpush1.bf16.msra.mxu0 %v3918
        %5420 = vmatprep.subr.bf16.mxu0 %v3944
        %5421 = vmatpush1.bf16.msra.mxu0 %v3943
        %5422 = vmatprep.subr.bf16.mxu0 %v3969
        %5423 = vmatpush1.bf16.msra.mxu0 %v3968
        %5424 = vmatprep.subr.bf16.mxu0 %v3994
        %5425 = vmatpush1.bf16.msra.mxu0 %v3993
        %5426 = vmatprep.subr.bf16.mxu0 0
        %5427 = vmatpush1.bf16.msra.mxu0 0
        %5428 = vmatprep.subr.bf16.mxu0 0
        %5429 = vmatpush1.bf16.msra.mxu0 0
        %5430 = vmatprep.subr.bf16.mxu0 0
        %5431 = vmatpush1.bf16.msra.mxu0 0
        %5432 = vmatprep.subr.bf16.mxu0 0
        %5433 = vmatpush1.bf16.msra.mxu0 0
        %5434 = vmatprep.subr.bf16.mxu0 0
        %5435 = vmatpush1.bf16.msra.mxu0 0
        %5436 = vmatprep.subr.bf16.mxu0 0
        %5437 = vmatpush1.bf16.msra.mxu0 0
        %5438 = vmatprep.subr.bf16.mxu0 0
        %5439 = vmatpush1.bf16.msra.mxu0 0
        %5440 = vmatprep.mubr.bf16.mxu0 %v4627
        %5441 = vmatmul.mubr.bf16.gmra.mrb[0].mxu0 %v690
        %v5442 = vpop.f32.mrb[0].mxu0
        %v5443 = vadd.f32 %v5402, %v5442
        %v5444 = vpop.f32.mrb[0].mxu0
        %v5445 = vadd.f32 %v5404, %v5444
        %v5446 = vpop.f32.mrb[0].mxu0
        %v5447 = vpop.f32.mrb[0].mxu0
        %5448 = vdwg.mxu0
        %5449 = vmatprep.subr.bf16.mxu0 %v3396
        %5450 = vmatpush1.bf16.msra.mxu0 %v3395
        %5451 = vmatprep.subr.bf16.mxu0 %v3421
        %5452 = vmatpush1.bf16.msra.mxu0 %v3420
        %5453 = vmatprep.subr.bf16.mxu0 %v3446
        %5454 = vmatpush1.bf16.msra.mxu0 %v3445
        %5455 = vmatprep.subr.bf16.mxu0 %v3471
        %5456 = vmatpush1.bf16.msra.mxu0 %v3470
        %5457 = vmatprep.subr.bf16.mxu0 %v3496
        %5458 = vmatpush1.bf16.msra.mxu0 %v3495
        %5459 = vmatprep.subr.bf16.mxu0 %v3521
        %5460 = vmatpush1.bf16.msra.mxu0 %v3520
        %5461 = vmatprep.subr.bf16.mxu0 %v3546
        %5462 = vmatpush1.bf16.msra.mxu0 %v3545
        %5463 = vmatprep.subr.bf16.mxu0 %v3571
        %5464 = vmatpush1.bf16.msra.mxu0 %v3570
        %5465 = vmatprep.subr.bf16.mxu0 %v3596
        %5466 = vmatpush1.bf16.msra.mxu0 %v3595
        %5467 = vmatprep.subr.bf16.mxu0 %v3621
        %5468 = vmatpush1.bf16.msra.mxu0 %v3620
        %5469 = vmatprep.subr.bf16.mxu0 %v3646
        %5470 = vmatpush1.bf16.msra.mxu0 %v3645
        %5471 = vmatprep.subr.bf16.mxu0 %v3671
        %5472 = vmatpush1.bf16.msra.mxu0 %v3670
        %5473 = vmatprep.subr.bf16.mxu0 %v3696
        %5474 = vmatpush1.bf16.msra.mxu0 %v3695
        %5475 = vmatprep.subr.bf16.mxu0 %v3721
        %5476 = vmatpush1.bf16.msra.mxu0 %v3720
        %5477 = vmatprep.subr.bf16.mxu0 %v3746
        %5478 = vmatpush1.bf16.msra.mxu0 %v3745
        %5479 = vmatprep.subr.bf16.mxu0 %v3771
        %5480 = vmatpush1.bf16.msra.mxu0 %v3770
        %5481 = vmatprep.mubr.bf16.mxu0 %v689
        %5482 = vmatmul.mubr.bf16.gmra.mrb[0].mxu0 %v688
        %v5483 = vpop.f32.mrb[0].mxu0
        %v5484 = vadd.f32 %v1433, %v5483
        %v5485 = vpop.f32.mrb[0].mxu0
        %v5486 = vadd.f32 %v1437, %v5485
        %v5487 = vpop.f32.mrb[0].mxu0
        %v5488 = vpop.f32.mrb[0].mxu0
        %5489 = vdwg.mxu0
        %5490 = vmatprep.subr.bf16.mxu0 %v3796
        %5491 = vmatpush1.bf16.msra.mxu0 %v3795
        %5492 = vmatprep.subr.bf16.mxu0 %v3821
        %5493 = vmatpush1.bf16.msra.mxu0 %v3820
        %5494 = vmatprep.subr.bf16.mxu0 %v3846
        %5495 = vmatpush1.bf16.msra.mxu0 %v3845
        %5496 = vmatprep.subr.bf16.mxu0 %v3871
        %5497 = vmatpush1.bf16.msra.mxu0 %v3870
        %5498 = vmatprep.subr.bf16.mxu0 %v3896
        %5499 = vmatpush1.bf16.msra.mxu0 %v3895
        %5500 = vmatprep.subr.bf16.mxu0 %v3921
        %5501 = vmatpush1.bf16.msra.mxu0 %v3920
        %5502 = vmatprep.subr.bf16.mxu0 %v3946
        %5503 = vmatpush1.bf16.msra.mxu0 %v3945
        %5504 = vmatprep.subr.bf16.mxu0 %v3971
        %5505 = vmatpush1.bf16.msra.mxu0 %v3970
        %5506 = vmatprep.subr.bf16.mxu0 %v3996
        %5507 = vmatpush1.bf16.msra.mxu0 %v3995
        %5508 = vmatprep.subr.bf16.mxu0 0
        %5509 = vmatpush1.bf16.msra.mxu0 0
        %5510 = vmatprep.subr.bf16.mxu0 0
        %5511 = vmatpush1.bf16.msra.mxu0 0
        %5512 = vmatprep.subr.bf16.mxu0 0
        %5513 = vmatpush1.bf16.msra.mxu0 0
        %5514 = vmatprep.subr.bf16.mxu0 0
        %5515 = vmatpush1.bf16.msra.mxu0 0
        %5516 = vmatprep.subr.bf16.mxu0 0
        %5517 = vmatpush1.bf16.msra.mxu0 0
        %5518 = vmatprep.subr.bf16.mxu0 0
        %5519 = vmatpush1.bf16.msra.mxu0 0
        %5520 = vmatprep.subr.bf16.mxu0 0
        %5521 = vmatpush1.bf16.msra.mxu0 0
        %5522 = vmatprep.mubr.bf16.mxu0 %v4627
        %5523 = vmatmul.mubr.bf16.gmra.mrb[0].mxu0 %v690
        %v5524 = vpop.f32.mrb[0].mxu0
        %v5525 = vadd.f32 %v5484, %v5524
        %v5526 = vpop.f32.mrb[0].mxu0
        %v5527 = vadd.f32 %v5486, %v5526
        %v5528 = vpop.f32.mrb[0].mxu0
        %v5529 = vpop.f32.mrb[0].mxu0
        %5530 = vdwg.mxu0
        %5531 = vmatprep.subr.bf16.mxu0 %v3398
        %5532 = vmatpush1.bf16.msra.mxu0 %v3397
        %5533 = vmatprep.subr.bf16.mxu0 %v3423
        %5534 = vmatpush1.bf16.msra.mxu0 %v3422
        %5535 = vmatprep.subr.bf16.mxu0 %v3448
        %5536 = vmatpush1.bf16.msra.mxu0 %v3447
        %5537 = vmatprep.subr.bf16.mxu0 %v3473
        %5538 = vmatpush1.bf16.msra.mxu0 %v3472
        %5539 = vmatprep.subr.bf16.mxu0 %v3498
        %5540 = vmatpush1.bf16.msra.mxu0 %v3497
        %5541 = vmatprep.subr.bf16.mxu0 %v3523
        %5542 = vmatpush1.bf16.msra.mxu0 %v3522
        %5543 = vmatprep.subr.bf16.mxu0 %v3548
        %5544 = vmatpush1.bf16.msra.mxu0 %v3547
        %5545 = vmatprep.subr.bf16.mxu0 %v3573
        %5546 = vmatpush1.bf16.msra.mxu0 %v3572
        %5547 = vmatprep.subr.bf16.mxu0 %v3598
        %5548 = vmatpush1.bf16.msra.mxu0 %v3597
        %5549 = vmatprep.subr.bf16.mxu0 %v3623
        %5550 = vmatpush1.bf16.msra.mxu0 %v3622
        %5551 = vmatprep.subr.bf16.mxu0 %v3648
        %5552 = vmatpush1.bf16.msra.mxu0 %v3647
        %5553 = vmatprep.subr.bf16.mxu0 %v3673
        %5554 = vmatpush1.bf16.msra.mxu0 %v3672
        %5555 = vmatprep.subr.bf16.mxu0 %v3698
        %5556 = vmatpush1.bf16.msra.mxu0 %v3697
        %5557 = vmatprep.subr.bf16.mxu0 %v3723
        %5558 = vmatpush1.bf16.msra.mxu0 %v3722
        %5559 = vmatprep.subr.bf16.mxu0 %v3748
        %5560 = vmatpush1.bf16.msra.mxu0 %v3747
        %5561 = vmatprep.subr.bf16.mxu0 %v3773
        %5562 = vmatpush1.bf16.msra.mxu0 %v3772
        %5563 = vmatprep.mubr.bf16.mxu0 %v689
        %5564 = vmatmul.mubr.bf16.gmra.mrb[0].mxu0 %v688
        %v5565 = vpop.f32.mrb[0].mxu0
        %v5566 = vadd.f32 %v1441, %v5565
        %v5567 = vpop.f32.mrb[0].mxu0
        %v5568 = vadd.f32 %v1445, %v5567
        %v5569 = vpop.f32.mrb[0].mxu0
        %v5570 = vpop.f32.mrb[0].mxu0
        %5571 = vdwg.mxu0
        %5572 = vmatprep.subr.bf16.mxu0 %v3798
        %5573 = vmatpush1.bf16.msra.mxu0 %v3797
        %5574 = vmatprep.subr.bf16.mxu0 %v3823
        %5575 = vmatpush1.bf16.msra.mxu0 %v3822
        %5576 = vmatprep.subr.bf16.mxu0 %v3848
        %5577 = vmatpush1.bf16.msra.mxu0 %v3847
        %5578 = vmatprep.subr.bf16.mxu0 %v3873
        %5579 = vmatpush1.bf16.msra.mxu0 %v3872
        %5580 = vmatprep.subr.bf16.mxu0 %v3898
        %5581 = vmatpush1.bf16.msra.mxu0 %v3897
        %5582 = vmatprep.subr.bf16.mxu0 %v3923
        %5583 = vmatpush1.bf16.msra.mxu0 %v3922
        %5584 = vmatprep.subr.bf16.mxu0 %v3948
        %5585 = vmatpush1.bf16.msra.mxu0 %v3947
        %5586 = vmatprep.subr.bf16.mxu0 %v3973
        %5587 = vmatpush1.bf16.msra.mxu0 %v3972
        %5588 = vmatprep.subr.bf16.mxu0 %v3998
        %5589 = vmatpush1.bf16.msra.mxu0 %v3997
        %5590 = vmatprep.subr.bf16.mxu0 0
        %5591 = vmatpush1.bf16.msra.mxu0 0
        %5592 = vmatprep.subr.bf16.mxu0 0
        %5593 = vmatpush1.bf16.msra.mxu0 0
        %5594 = vmatprep.subr.bf16.mxu0 0
        %5595 = vmatpush1.bf16.msra.mxu0 0
        %5596 = vmatprep.subr.bf16.mxu0 0
        %5597 = vmatpush1.bf16.msra.mxu0 0
        %5598 = vmatprep.subr.bf16.mxu0 0
        %5599 = vmatpush1.bf16.msra.mxu0 0
        %5600 = vmatprep.subr.bf16.mxu0 0
        %5601 = vmatpush1.bf16.msra.mxu0 0
        %5602 = vmatprep.subr.bf16.mxu0 0
        %5603 = vmatpush1.bf16.msra.mxu0 0
        %5604 = vmatprep.mubr.bf16.mxu0 %v4627
        %5605 = vmatmul.mubr.bf16.gmra.mrb[0].mxu0 %v690
        %v5606 = vpop.f32.mrb[0].mxu0
        %v5607 = vadd.f32 %v5566, %v5606
        %v5608 = vpop.f32.mrb[0].mxu0
        %v5609 = vadd.f32 %v5568, %v5608
        %v5610 = vpop.f32.mrb[0].mxu0
        %v5611 = vpop.f32.mrb[0].mxu0
        %5612 = vdwg.mxu0
        %5613 = vmatprep.subr.bf16.mxu0 0
        %5614 = vmatpush1.bf16.msra.mxu0 %v3399
        %5615 = vmatprep.subr.bf16.mxu0 0
        %5616 = vmatpush1.bf16.msra.mxu0 %v3424
        %5617 = vmatprep.subr.bf16.mxu0 0
        %5618 = vmatpush1.bf16.msra.mxu0 %v3449
        %5619 = vmatprep.subr.bf16.mxu0 0
        %5620 = vmatpush1.bf16.msra.mxu0 %v3474
        %5621 = vmatprep.subr.bf16.mxu0 0
        %5622 = vmatpush1.bf16.msra.mxu0 %v3499
        %5623 = vmatprep.subr.bf16.mxu0 0
        %5624 = vmatpush1.bf16.msra.mxu0 %v3524
        %5625 = vmatprep.subr.bf16.mxu0 0
        %5626 = vmatpush1.bf16.msra.mxu0 %v3549
        %5627 = vmatprep.subr.bf16.mxu0 0
        %5628 = vmatpush1.bf16.msra.mxu0 %v3574
        %5629 = vmatprep.subr.bf16.mxu0 0
        %5630 = vmatpush1.bf16.msra.mxu0 %v3599
        %5631 = vmatprep.subr.bf16.mxu0 0
        %5632 = vmatpush1.bf16.msra.mxu0 %v3624
        %5633 = vmatprep.subr.bf16.mxu0 0
        %5634 = vmatpush1.bf16.msra.mxu0 %v3649
        %5635 = vmatprep.subr.bf16.mxu0 0
        %5636 = vmatpush1.bf16.msra.mxu0 %v3674
        %5637 = vmatprep.subr.bf16.mxu0 0
        %5638 = vmatpush1.bf16.msra.mxu0 %v3699
        %5639 = vmatprep.subr.bf16.mxu0 0
        %5640 = vmatpush1.bf16.msra.mxu0 %v3724
        %5641 = vmatprep.subr.bf16.mxu0 0
        %5642 = vmatpush1.bf16.msra.mxu0 %v3749
        %5643 = vmatprep.subr.bf16.mxu0 0
        %5644 = vmatpush1.bf16.msra.mxu0 %v3774
        %5645 = vmatprep.mubr.bf16.mxu0 %v689
        %5646 = vmatmul.mubr.bf16.gmra.mrb[0].mxu0 %v688
        %v5647 = vpop.f32.mrb[0].mxu0
        %v5648 = vadd.f32 %v1449, %v5647
        %v5649 = vpop.f32.mrb[0].mxu0
        %v5650 = vpop.f32.mrb[0].mxu0
        %v5651 = vpop.f32.mrb[0].mxu0
        %5652 = vdwg.mxu0
        %5653 = vmatprep.subr.bf16.mxu0 0
        %5654 = vmatpush1.bf16.msra.mxu0 %v3799
        %5655 = vmatprep.subr.bf16.mxu0 0
        %5656 = vmatpush1.bf16.msra.mxu0 %v3824
        %5657 = vmatprep.subr.bf16.mxu0 0
        %5658 = vmatpush1.bf16.msra.mxu0 %v3849
        %5659 = vmatprep.subr.bf16.mxu0 0
        %5660 = vmatpush1.bf16.msra.mxu0 %v3874
        %5661 = vmatprep.subr.bf16.mxu0 0
        %5662 = vmatpush1.bf16.msra.mxu0 %v3899
        %5663 = vmatprep.subr.bf16.mxu0 0
        %5664 = vmatpush1.bf16.msra.mxu0 %v3924
        %5665 = vmatprep.subr.bf16.mxu0 0
        %5666 = vmatpush1.bf16.msra.mxu0 %v3949
        %5667 = vmatprep.subr.bf16.mxu0 0
        %5668 = vmatpush1.bf16.msra.mxu0 %v3974
        %5669 = vmatprep.subr.bf16.mxu0 0
        %5670 = vmatpush1.bf16.msra.mxu0 %v3999
        %5671 = vmatprep.subr.bf16.mxu0 0
        %5672 = vmatpush1.bf16.msra.mxu0 0
        %5673 = vmatprep.subr.bf16.mxu0 0
        %5674 = vmatpush1.bf16.msra.mxu0 0
        %5675 = vmatprep.subr.bf16.mxu0 0
        %5676 = vmatpush1.bf16.msra.mxu0 0
        %5677 = vmatprep.subr.bf16.mxu0 0
        %5678 = vmatpush1.bf16.msra.mxu0 0
        %5679 = vmatprep.subr.bf16.mxu0 0
        %5680 = vmatpush1.bf16.msra.mxu0 0
        %5681 = vmatprep.subr.bf16.mxu0 0
        %5682 = vmatpush1.bf16.msra.mxu0 0
        %5683 = vmatprep.subr.bf16.mxu0 0
        %5684 = vmatpush1.bf16.msra.mxu0 0
        %5685 = vmatprep.mubr.bf16.mxu0 %v4627
        %5686 = vmatmul.mubr.bf16.gmra.mrb[0].mxu0 %v690
        %v5687 = vpop.f32.mrb[0].mxu0
        %v5688 = vadd.f32 %v5648, %v5687
        %v5689 = vpop.f32.mrb[0].mxu0
        %v5690 = vpop.f32.mrb[0].mxu0
        %v5691 = vpop.f32.mrb[0].mxu0
        %5692 = vdwg.mxu0
        %5693 = vst [vmem:[%s385] sm:$0xff] %v4705
        %5694 = vst [vmem:[%s385 + $0x8] sm:$0xff] %v4707
        %5695 = vst [vmem:[%s385 + $0x10] sm:$0xff] %v4787
        %5696 = vst [vmem:[%s385 + $0x18] sm:$0xff] %v4789
        %5697 = vst [vmem:[%s385 + $0x20] sm:$0xff] %v4869
        %5698 = vst [vmem:[%s385 + $0x28] sm:$0xff] %v4871
        %5699 = vst [vmem:[%s385 + $0x30] sm:$0xff] %v4951
        %5700 = vst [vmem:[%s385 + $0x38] sm:$0xff] %v4953
        %5701 = vst [vmem:[%s385 + $0x40] sm:$0xff] %v5033
        %5702 = vst [vmem:[%s385 + $0x48] sm:$0xff] %v5035
        %5703 = vst [vmem:[%s385 + $0x50] sm:$0xff] %v5115
        %5704 = vst [vmem:[%s385 + $0x58] sm:$0xff] %v5117
        %5705 = vst [vmem:[%s385 + $0x60] sm:$0xff] %v5197
        %5706 = vst [vmem:[%s385 + $0x68] sm:$0xff] %v5199
        %5707 = vst [vmem:[%s385 + $0x70] sm:$0xff] %v5279
        %5708 = vst [vmem:[%s385 + $0x78] sm:$0xff] %v5281
        %5709 = vst [vmem:[%s385 + $0x80] sm:$0xff] %v5361
        %5710 = vst [vmem:[%s385 + $0x88] sm:$0xff] %v5363
        %5711 = vst [vmem:[%s385 + $0x90] sm:$0xff] %v5443
        %5712 = vst [vmem:[%s385 + $0x98] sm:$0xff] %v5445
        %5713 = vst [vmem:[%s385 + $0xa0] sm:$0xff] %v5525
        %5714 = vst [vmem:[%s385 + $0xa8] sm:$0xff] %v5527
        %5715 = vst [vmem:[%s385 + $0xb0] sm:$0xff] %v5607
        %5716 = vst [vmem:[%s385 + $0xb8] sm:$0xff] %v5609
        %5717 = vst [vmem:[%s385 + $0xc0] sm:$0xff] %v5688
        %s5718 = smul.u32 25, %s21
        %p5719 = scmp.lt.s32.totalorder %s5718, 49
        %s5720 = scalar_select %p5719, %s5718, 49
        %s5721 = smul.addr %s5720, 8
        %s5722 = scalar_lea.vmem %s7, %s5721
        // Predicated region
        $region73: #{decoder_forward.1} parent=47 // pred_check
          %p5723 = pneg %p196
        $region74: #{decoder_forward.1} parent=47 // pred_check_branch
          %5725 = sbr.rel (%p5723) target = $region76
        $region75: #{decoder_forward.1} parent=47 // pred_region
          %s5726 = smul.u32 25, %s21
        $region76: #{decoder_forward.1} parent=47 // pred_fallthru
          _
      $region48: #{decoder_forward.1} parent=5 // pred_fallthru
        _
      %p5727 = scmp.le.s32.totalorder 2, %s16
      // Predicated region
      $region77: #{decoder_forward.1} parent=5 // pred_check
        %p5728 = pneg %p5727
      $region78: #{decoder_forward.1} parent=5 // pred_check_branch
        %5730 = sbr.rel (%p5728) target = $region80
      $region79: #{decoder_forward.1} parent=5 // pred_region
        %s5731 = ssub.s32 %s16, 2
        // Predicated region
        $region81: #{decoder_forward.1} parent=79 // pred_check
          %p5732 = pneg %p202
        $region82: #{decoder_forward.1} parent=79 // pred_check_branch
          %5734 = sbr.rel (%p5732) target = $region84
        $region83: #{decoder_forward.1} parent=79 // pred_region
          %s5735 = smul.u32 25, %s22
          %p5736 = scmp.lt.s32.totalorder %s5735, 49
          %s5737 = scalar_select %p5736, %s5735, 49
          %s5738 = smul.addr %s5737, 8
          %s5739 = scalar_lea.vmem %s7, %s5738
        $region84: #{decoder_forward.1} parent=79 // pred_fallthru
          _
      $region80: #{decoder_forward.1} parent=5 // pred_fallthru
        _
    $region6: #{decoder_forward.1} parent=1 // loop_footer
      %s20 = sadd.s32 1, %s16
    $region7: #{decoder_forward.1} parent=1 // loop_footer_branch
      %15 = sbr.rel target = $region3
    $region8: #{decoder_forward.1} parent=1 // loop_exit
      _
    %5740 = vsyncpa [#allocation3], 1
    %s5741 = scalar_lea.sflag [#allocation3], 1
    %5742 = vsyncpa %s5741, 1
    %5743 = vsyncpa [#allocation5], 1
    %5744 = vsyncpa [#allocation8], 1

</llo_original>
